<compile_context>
chip_gen: v7x
topology: tpu7x:2x2x1
jax: 0.10.0
libtpu: 0.0.40
codegen_flags: <defaults>
</compile_context>

<pallas_src>
import functools

import jax
import jax.numpy as jnp
from jax.experimental import pallas as pl
from jax.experimental.pallas import tpu as pltpu

# ---------------- configuration (static) ----------------
BATCH = 2
INPUT_SIZE = 2          # TSP coordinates (x, y)
SEQ_LEN = 8
EMBEDDING_SIZE = 16
HIDDEN_SIZE = 32
N_GLIMPSES = 1
TANH_EXPLORATION = 10.0
USE_TANH = True
OUT_LANES = 128         # lane-dense coalesced output slab width

_NEG_INF = -1e9         # plain Python float -> traced as a literal, not a captured const


# ---------------- fused Pallas kernel ----------------
def combinatorial_rl_kernel(
    coords_ref, emb_bse_ref, emb_sbe_ref,
    enc_w_ih_ref, enc_w_hh_ref, enc_b_ref,
    dec_w_ih_ref, dec_w_hh_ref, dec_b_ref, dec_start_ref,
    out_ref,
    enc_ref,
    *, seq_len, hidden, n_glimpses, use_tanh, c_const, out_lanes):
    f32 = jnp.float32
    bf16 = jnp.bfloat16

    coords = coords_ref[...]            # [B, S, D]  f32
    emb_bse = emb_bse_ref[...]          # [B, S, E]  f32 (decoder-input gather)
    emb_sbe = emb_sbe_ref[...]          # [S, B, E]  f32 (encoder pre-projection)
    w_ih_e = enc_w_ih_ref[...]          # [E, 4H]    bf16
    w_hh_e = enc_w_hh_ref[...]          # [H, 4H]    bf16
    b_e = enc_b_ref[...]                # [1, 4H]    f32
    w_ih_d = dec_w_ih_ref[...]          # [E, 4H]    bf16
    w_hh_d = dec_w_hh_ref[...]          # [H, 4H]    bf16
    b_d = dec_b_ref[...]                # [1, 4H]    f32
    dec_start = dec_start_ref[...]      # [1, E]     f32

    B, S, D = coords.shape
    E = emb_bse.shape[-1]
    H = hidden

    # Zero the whole lane-dense output slab once; per-step stores fill it below.
    out_ref[...] = jnp.zeros((B, out_lanes), f32)

    def gates_to_hc(gates, c_prev):
        # One sigmoid pass + one tanh pass over the FULL [B, 4H] vreg, then slice.
        sig = jax.nn.sigmoid(gates)
        tnh = jnp.tanh(gates)
        i = sig[:, 0 * H:1 * H]
        f = sig[:, 1 * H:2 * H]
        o = sig[:, 3 * H:4 * H]
        g = tnh[:, 2 * H:3 * H]
        c_new = f * c_prev + i * g
        h_new = o * jnp.tanh(c_new)
        return h_new, c_new

    # ---------------- encoder ----------------
    # Input projections of ALL timesteps with one MXU matmul (bf16 operands, f32 acc),
    # in [S, B, 4H] layout so xproj[t] is a contiguous sublane block.
    xproj = jnp.dot(emb_sbe.reshape(S * B, E).astype(bf16), w_ih_e,
                    preferred_element_type=f32).reshape(S, B, 4 * H)

    h = jnp.zeros((B, H), f32)
    c = jnp.zeros((B, H), f32)
    for t in range(seq_len):                       # unrolled (S is static)
        gates = (xproj[t]
                 + jnp.dot(h.astype(bf16), w_hh_e, preferred_element_type=f32)
                 + b_e)
        h, c = gates_to_hc(gates, c)
        enc_ref[:, t:t + 1, :] = h[:, None, :]     # per-step store into VMEM scratch
    enc_out = enc_ref[...]                          # [B, S, H], stays resident

    # ---------------- attention helpers: VPU multiply + reduce (no tiny MXU dots) -----
    def attn_logits(q):                             # [B, H] -> [B, S]
        return jnp.sum(q[:, None, :] * enc_out, axis=-1)

    def masked_softmax(logits, mask2):
        masked = jnp.where(mask2 > 0.0, _NEG_INF, logits)
        m = jnp.max(masked, axis=-1, keepdims=True)
        e = jnp.exp(masked - m)
        p = e / jnp.sum(e, axis=-1, keepdims=True)   # exact divide: probs feed log-probs
        return masked, p, m

    # ---------------- decoder (greedy pointer decode + incremental reward) ----------
    mask = jnp.zeros((B, S), f32)
    dec_in = jnp.broadcast_to(dec_start, (B, E))
    lane_iota = jax.lax.broadcasted_iota(jnp.int32, (B, S), 1)

    tour = jnp.zeros((B, 1), f32)
    first_city = None
    prev_city = None
    idx_off = S
    act_off = 2 * S
    r_off = 2 * S + S * D

    for t in range(seq_len):                       # unrolled
        gates = (jnp.dot(dec_in.astype(bf16), w_ih_d, preferred_element_type=f32)
                 + jnp.dot(h.astype(bf16), w_hh_d, preferred_element_type=f32)
                 + b_d)
        h, c = gates_to_hc(gates, c)

        query = h
        for _ in range(n_glimpses):
            _, g_p, _ = masked_softmax(attn_logits(query), mask)
            query = jnp.sum(g_p[:, :, None] * enc_out, axis=1)        # [B, H]

        logits = attn_logits(query)
        if use_tanh:
            logits = c_const * jnp.tanh(logits)
        masked_logits, probs, mx = masked_softmax(logits, mask)

        # greedy argmax (reuses the softmax row max)
        # TODO(synk): reference samples with multinomial(); greedy argmax here.
        idxs = jnp.min(jnp.where(masked_logits >= mx, lane_iota, seq_len),
                       axis=-1, keepdims=True)                         # [B, 1] int32
        one_hot = (lane_iota == idxs).astype(f32)                      # [B, S]

        chosen_p = jnp.sum(probs * one_hot, axis=-1, keepdims=True)            # [B, 1]
        city = jnp.sum(one_hot[:, :, None] * coords, axis=1)                   # [B, D]
        dec_in = jnp.sum(one_hot[:, :, None] * emb_bse, axis=1)                # [B, E]
        mask = mask + one_hot

        if t == 0:
            first_city = city
        else:
            dvec = city - prev_city
            tour = tour + jnp.sqrt(jnp.sum(dvec * dvec, axis=-1, keepdims=True))
        prev_city = city

        # per-step stores straight into the coalesced output slab (no concatenates)
        out_ref[:, t:t + 1] = chosen_p
        out_ref[:, idx_off + t:idx_off + t + 1] = idxs.astype(f32)
        out_ref[:, act_off + D * t:act_off + D * (t + 1)] = city

    # closing terms exactly as the reference reward(): ||last|| + ||first|| (to origin)
    tour = tour + jnp.sqrt(jnp.sum(prev_city * prev_city, axis=-1, keepdims=True))
    tour = tour + jnp.sqrt(jnp.sum(first_city * first_city, axis=-1, keepdims=True))
    out_ref[:, r_off:r_off + 1] = tour


# ---------------- wrapper ----------------
def combinatorial_rl_forward(params, inputs, inputs_emb):
    """
    inputs:     [B, input_size, seq_len]  (PyTorch layout)
    inputs_emb: [B, seq_len, embedding_size]
    Returns (R, action_probs, actions, action_idxs) with the same list structure
    as the PyTorch module.
    """
    B, D, S = inputs.shape
    E = inputs_emb.shape[-1]
    H = params["enc_w_hh"].shape[0]
    assert 2 * S + S * D + 1 <= OUT_LANES

    coords = jnp.transpose(inputs, (0, 2, 1))           # [B, S, D]
    emb_bse = inputs_emb                                # [B, S, E]
    emb_sbe = jnp.transpose(inputs_emb, (1, 0, 2))      # [S, B, E] (layout plumbing only)
    dec_start = params["dec_start"][None, :]            # [1, E]

    bf16 = jnp.bfloat16
    enc_w_ih = params["enc_w_ih"].astype(bf16)
    enc_w_hh = params["enc_w_hh"].astype(bf16)
    dec_w_ih = params["dec_w_ih"].astype(bf16)
    dec_w_hh = params["dec_w_hh"].astype(bf16)

    kernel = functools.partial(
        combinatorial_rl_kernel,
        seq_len=S, hidden=H, n_glimpses=N_GLIMPSES,
        use_tanh=USE_TANH, c_const=float(TANH_EXPLORATION), out_lanes=OUT_LANES)

    # Single program over the batch (one TensorCore on v5e/v6e).  For non-toy batches on
    # v7x, set BB = cdiv(B, 2) rounded to a multiple of 8 so the "parallel" axis shards
    # across both TensorCores.  VMEM is not a constraint (footprint is KBs).
    BB = B
    nb = pl.cdiv(B, BB)

    slab = pl.pallas_call(
        kernel,
        out_shape=jax.ShapeDtypeStruct((B, OUT_LANES), jnp.float32),
        grid=(nb,),
        in_specs=[
            pl.BlockSpec((BB, S, D), lambda b: (b, 0, 0)),       # coords
            pl.BlockSpec((BB, S, E), lambda b: (b, 0, 0)),       # emb [B,S,E]
            pl.BlockSpec((S, BB, E), lambda b: (0, b, 0)),       # emb [S,B,E]
            pl.BlockSpec((E, 4 * H), lambda b: (0, 0)),          # enc_w_ih (bf16)
            pl.BlockSpec((H, 4 * H), lambda b: (0, 0)),          # enc_w_hh (bf16)
            pl.BlockSpec((1, 4 * H), lambda b: (0, 0)),          # enc_b
            pl.BlockSpec((E, 4 * H), lambda b: (0, 0)),          # dec_w_ih (bf16)
            pl.BlockSpec((H, 4 * H), lambda b: (0, 0)),          # dec_w_hh (bf16)
            pl.BlockSpec((1, 4 * H), lambda b: (0, 0)),          # dec_b
            pl.BlockSpec((1, E), lambda b: (0, 0)),              # decoder start token
        ],
        out_specs=pl.BlockSpec((BB, OUT_LANES), lambda b: (b, 0)),
        scratch_shapes=[pltpu.VMEM((BB, S, H), jnp.float32)],    # encoder outputs
        compiler_params=pltpu.CompilerParams(dimension_semantics=("parallel",)),
    )(coords, emb_bse, emb_sbe,
      enc_w_ih, enc_w_hh, params["enc_b"],
      dec_w_ih, dec_w_hh, params["dec_b"], dec_start)

    # Unpack the lane-dense slab (layout plumbing only).
    aprob = slab[:, 0:S]                                          # [B, S]
    idxs = slab[:, S:2 * S].astype(jnp.int32)                     # [B, S] (exact cast)
    acts = slab[:, 2 * S:2 * S + S * D].reshape(B, S, D)          # [B, S, D]
    R = slab[:, 2 * S + S * D]                                    # [B]

    action_probs = [aprob[:, t] for t in range(S)]
    actions = [acts[:, t, :] for t in range(S)]
    action_idxs = [idxs[:, t] for t in range(S)]
    return R, action_probs, actions, action_idxs


# ---------------- deterministic parameter init ----------------
def init_params(key, E, H):
    k = 1.0 / jnp.sqrt(jnp.float32(H))
    keys = jax.random.split(key, 7)

    def u(kk, shape):
        return jax.random.uniform(kk, shape, jnp.float32, -k, k)

    return {
        "enc_w_ih": u(keys[0], (E, 4 * H)),
        "enc_w_hh": u(keys[1], (H, 4 * H)),
        "enc_b":    u(keys[2], (1, 4 * H)),
        "dec_w_ih": u(keys[3], (E, 4 * H)),
        "dec_w_hh": u(keys[4], (H, 4 * H)),
        "dec_b":    u(keys[5], (1, 4 * H)),
        "dec_start": u(keys[6], (E,)),
    }


if __name__ == "__main__":
    root = jax.random.PRNGKey(0)
    k_params, k_inp, k_emb = jax.random.split(root, 3)

    params = init_params(k_params, EMBEDDING_SIZE, HIDDEN_SIZE)
    inputs = jax.random.uniform(
        k_inp, (BATCH, INPUT_SIZE, SEQ_LEN), jnp.float32)           # [B, D, S]
    inputs_emb = jax.random.normal(
        k_emb, (BATCH, SEQ_LEN, EMBEDDING_SIZE), jnp.float32)       # [B, S, E]

    fwd = jax.jit(combinatorial_rl_forward)
    R, action_probs, actions, action_idxs = fwd(params, inputs, inputs_emb)
    jax.block_until_ready((R, action_probs, actions, action_idxs))
    print("KERNEL_OK")
</pallas_src>

<mosaic_0001>
module attributes {stable_mosaic.version = 11 : i64} {
  func.func @combinatorial_rl_kernel(%arg0: i32, %arg1: memref<2x8x2xf32, #tpu.memory_space<vmem>>, %arg2: memref<2x8x16xf32, #tpu.memory_space<vmem>>, %arg3: memref<8x2x16xf32, #tpu.memory_space<vmem>>, %arg4: memref<16x128xbf16, #tpu.memory_space<vmem>>, %arg5: memref<32x128xbf16, #tpu.memory_space<vmem>>, %arg6: memref<1x128xf32, #tpu.memory_space<vmem>>, %arg7: memref<16x128xbf16, #tpu.memory_space<vmem>>, %arg8: memref<32x128xbf16, #tpu.memory_space<vmem>>, %arg9: memref<1x128xf32, #tpu.memory_space<vmem>>, %arg10: memref<1x16xf32, #tpu.memory_space<vmem>>, %arg11: memref<2x128xf32, #tpu.memory_space<vmem>>, %arg12: memref<2x8x32xf32, #tpu.memory_space<vmem>>) attributes {dimension_semantics = [#tpu.dimension_semantics<parallel>], iteration_bounds = array<i64: 1>, scalar_prefetch = 0 : i64, scratch_operands = 1 : i64, tpu.core_type = #tpu.core_type<tc>, window_params = [{transform_indices = @transform_0, window_bounds = array<i64: 2, 8, 2>}, {transform_indices = @transform_1, window_bounds = array<i64: 2, 8, 16>}, {transform_indices = @transform_2, window_bounds = array<i64: 8, 2, 16>}, {pipeline_mode = #tpu.pipeline_mode<synchronous>, transform_indices = @transform_3, window_bounds = array<i64: 16, 128>}, {pipeline_mode = #tpu.pipeline_mode<synchronous>, transform_indices = @transform_4, window_bounds = array<i64: 32, 128>}, {pipeline_mode = #tpu.pipeline_mode<synchronous>, transform_indices = @transform_5, window_bounds = array<i64: 1, 128>}, {pipeline_mode = #tpu.pipeline_mode<synchronous>, transform_indices = @transform_6, window_bounds = array<i64: 16, 128>}, {pipeline_mode = #tpu.pipeline_mode<synchronous>, transform_indices = @transform_7, window_bounds = array<i64: 32, 128>}, {pipeline_mode = #tpu.pipeline_mode<synchronous>, transform_indices = @transform_8, window_bounds = array<i64: 1, 128>}, {pipeline_mode = #tpu.pipeline_mode<synchronous>, transform_indices = @transform_9, window_bounds = array<i64: 1, 16>}, {transform_indices = @transform_10, window_bounds = array<i64: 2, 128>}]} {
    %c0 = arith.constant 0 : index
    %c0_0 = arith.constant 0 : index
    %c0_1 = arith.constant 0 : index
    %0 = vector.load %arg1[%c0, %c0_0, %c0_1] : memref<2x8x2xf32, #tpu.memory_space<vmem>>, vector<2x8x2xf32>
    %c0_2 = arith.constant 0 : index
    %c0_3 = arith.constant 0 : index
    %c0_4 = arith.constant 0 : index
    %1 = vector.load %arg2[%c0_2, %c0_3, %c0_4] : memref<2x8x16xf32, #tpu.memory_space<vmem>>, vector<2x8x16xf32>
    %c0_5 = arith.constant 0 : index
    %c0_6 = arith.constant 0 : index
    %c0_7 = arith.constant 0 : index
    %2 = vector.load %arg3[%c0_5, %c0_6, %c0_7] : memref<8x2x16xf32, #tpu.memory_space<vmem>>, vector<8x2x16xf32>
    %c0_8 = arith.constant 0 : index
    %c0_9 = arith.constant 0 : index
    %3 = vector.load %arg4[%c0_8, %c0_9] : memref<16x128xbf16, #tpu.memory_space<vmem>>, vector<16x128xbf16>
    %c0_10 = arith.constant 0 : index
    %c0_11 = arith.constant 0 : index
    %4 = vector.load %arg5[%c0_10, %c0_11] : memref<32x128xbf16, #tpu.memory_space<vmem>>, vector<32x128xbf16>
    %c0_12 = arith.constant 0 : index
    %c0_13 = arith.constant 0 : index
    %5 = vector.load %arg6[%c0_12, %c0_13] : memref<1x128xf32, #tpu.memory_space<vmem>>, vector<1x128xf32>
    %c0_14 = arith.constant 0 : index
    %c0_15 = arith.constant 0 : index
    %6 = vector.load %arg7[%c0_14, %c0_15] : memref<16x128xbf16, #tpu.memory_space<vmem>>, vector<16x128xbf16>
    %c0_16 = arith.constant 0 : index
    %c0_17 = arith.constant 0 : index
    %7 = vector.load %arg8[%c0_16, %c0_17] : memref<32x128xbf16, #tpu.memory_space<vmem>>, vector<32x128xbf16>
    %c0_18 = arith.constant 0 : index
    %c0_19 = arith.constant 0 : index
    %8 = vector.load %arg9[%c0_18, %c0_19] : memref<1x128xf32, #tpu.memory_space<vmem>>, vector<1x128xf32>
    %c0_20 = arith.constant 0 : index
    %c0_21 = arith.constant 0 : index
    %9 = vector.load %arg10[%c0_20, %c0_21] : memref<1x16xf32, #tpu.memory_space<vmem>>, vector<1x16xf32>
    %cst = arith.constant 0.000000e+00 : f32
    %10 = vector.broadcast %cst : f32 to vector<2x128xf32>
    %c0_22 = arith.constant 0 : index
    %c0_23 = arith.constant 0 : index
    %11 = vector.load %arg11[%c0_22, %c0_23] : memref<2x128xf32, #tpu.memory_space<vmem>>, vector<2x128xf32>
    tpu.vector_store %arg11[%c0_22, %c0_23], %10 {strides = array<i32>} : memref<2x128xf32, #tpu.memory_space<vmem>>, vector<2x128xf32>,
    %12 = vector.shape_cast %2 : vector<8x2x16xf32> to vector<16x16xf32>
    %13 = arith.truncf %12 : vector<16x16xf32> to vector<16x16xbf16>
    %cst_24 = arith.constant dense<0.000000e+00> : vector<16x128xf32>
    %14 = tpu.matmul %13, %3, %cst_24 {dimension_numbers = #tpu.dot_dimension_numbers<[1], [0], [0], [1], [0, 0, 1, 1], [], []>} : vector<16x16xbf16>, vector<16x128xbf16>, vector<16x128xf32> -> vector<16x128xf32>
    %15 = vector.shape_cast %14 : vector<16x128xf32> to vector<8x2x128xf32>
    %cst_25 = arith.constant 0.000000e+00 : f32
    %16 = vector.broadcast %cst_25 : f32 to vector<2x32xf32>
    %cst_26 = arith.constant 0.000000e+00 : f32
    %17 = vector.broadcast %cst_26 : f32 to vector<2x32xf32>
    %18 = vector.extract_strided_slice %15 {offsets = [0, 0, 0], sizes = [1, 2, 128], strides = [1, 1, 1]} : vector<8x2x128xf32> to vector<1x2x128xf32>
    %19 = vector.shape_cast %18 : vector<1x2x128xf32> to vector<2x128xf32>
    %20 = arith.truncf %16 : vector<2x32xf32> to vector<2x32xbf16>
    %cst_27 = arith.constant dense<0.000000e+00> : vector<2x128xf32>
    %21 = tpu.matmul %20, %4, %cst_27 {dimension_numbers = #tpu.dot_dimension_numbers<[1], [0], [0], [1], [0, 0, 1, 1], [], []>} : vector<2x32xbf16>, vector<32x128xbf16>, vector<2x128xf32> -> vector<2x128xf32>
    %22 = arith.addf %19, %21 : vector<2x128xf32>
    %23 = vector.broadcast %5 : vector<1x128xf32> to vector<2x128xf32>
    %24 = arith.addf %22, %23 : vector<2x128xf32>
    %25 = arith.negf %24 : vector<2x128xf32>
    %26 = math.exp %25 : vector<2x128xf32>
    %cst_28 = arith.constant 1.000000e+00 : f32
    %27 = vector.broadcast %cst_28 : f32 to vector<2x128xf32>
    %28 = arith.addf %27, %26 : vector<2x128xf32>
    %29 = arith.divf %27, %28 : vector<2x128xf32>
    %30 = math.tanh %24 : vector<2x128xf32>
    %31 = vector.extract_strided_slice %29 {offsets = [0, 0], sizes = [2, 32], strides = [1, 1]} : vector<2x128xf32> to vector<2x32xf32>
    %32 = vector.extract_strided_slice %29 {offsets = [0, 32], sizes = [2, 32], strides = [1, 1]} : vector<2x128xf32> to vector<2x32xf32>
    %33 = vector.extract_strided_slice %29 {offsets = [0, 96], sizes = [2, 32], strides = [1, 1]} : vector<2x128xf32> to vector<2x32xf32>
    %34 = vector.extract_strided_slice %30 {offsets = [0, 64], sizes = [2, 32], strides = [1, 1]} : vector<2x128xf32> to vector<2x32xf32>
    %35 = arith.mulf %32, %17 : vector<2x32xf32>
    %36 = arith.mulf %31, %34 : vector<2x32xf32>
    %37 = arith.addf %35, %36 : vector<2x32xf32>
    %38 = math.tanh %37 : vector<2x32xf32>
    %39 = arith.mulf %33, %38 : vector<2x32xf32>
    %40 = vector.shape_cast %39 : vector<2x32xf32> to vector<2x1x32xf32>
    %c0_29 = arith.constant 0 : index
    %c0_30 = arith.constant 0 : index
    %c0_31 = arith.constant 0 : index
    %41 = vector.load %arg12[%c0_29, %c0_30, %c0_31] : memref<2x8x32xf32, #tpu.memory_space<vmem>>, vector<2x1x32xf32>
    tpu.vector_store %arg12[%c0_29, %c0_30, %c0_31], %40 {strides = array<i32>} : memref<2x8x32xf32, #tpu.memory_space<vmem>>, vector<2x1x32xf32>,
    %42 = vector.extract_strided_slice %15 {offsets = [1, 0, 0], sizes = [1, 2, 128], strides = [1, 1, 1]} : vector<8x2x128xf32> to vector<1x2x128xf32>
    %43 = vector.shape_cast %42 : vector<1x2x128xf32> to vector<2x128xf32>
    %44 = arith.truncf %39 : vector<2x32xf32> to vector<2x32xbf16>
    %cst_32 = arith.constant dense<0.000000e+00> : vector<2x128xf32>
    %45 = tpu.matmul %44, %4, %cst_32 {dimension_numbers = #tpu.dot_dimension_numbers<[1], [0], [0], [1], [0, 0, 1, 1], [], []>} : vector<2x32xbf16>, vector<32x128xbf16>, vector<2x128xf32> -> vector<2x128xf32>
    %46 = arith.addf %43, %45 : vector<2x128xf32>
    %47 = vector.broadcast %5 : vector<1x128xf32> to vector<2x128xf32>
    %48 = arith.addf %46, %47 : vector<2x128xf32>
    %49 = arith.negf %48 : vector<2x128xf32>
    %50 = math.exp %49 : vector<2x128xf32>
    %cst_33 = arith.constant 1.000000e+00 : f32
    %51 = vector.broadcast %cst_33 : f32 to vector<2x128xf32>
    %52 = arith.addf %51, %50 : vector<2x128xf32>
    %53 = arith.divf %51, %52 : vector<2x128xf32>
    %54 = math.tanh %48 : vector<2x128xf32>
    %55 = vector.extract_strided_slice %53 {offsets = [0, 0], sizes = [2, 32], strides = [1, 1]} : vector<2x128xf32> to vector<2x32xf32>
    %56 = vector.extract_strided_slice %53 {offsets = [0, 32], sizes = [2, 32], strides = [1, 1]} : vector<2x128xf32> to vector<2x32xf32>
    %57 = vector.extract_strided_slice %53 {offsets = [0, 96], sizes = [2, 32], strides = [1, 1]} : vector<2x128xf32> to vector<2x32xf32>
    %58 = vector.extract_strided_slice %54 {offsets = [0, 64], sizes = [2, 32], strides = [1, 1]} : vector<2x128xf32> to vector<2x32xf32>
    %59 = arith.mulf %56, %37 : vector<2x32xf32>
    %60 = arith.mulf %55, %58 : vector<2x32xf32>
    %61 = arith.addf %59, %60 : vector<2x32xf32>
    %62 = math.tanh %61 : vector<2x32xf32>
    %63 = arith.mulf %57, %62 : vector<2x32xf32>
    %64 = vector.shape_cast %63 : vector<2x32xf32> to vector<2x1x32xf32>
    %c0_34 = arith.constant 0 : index
    %c1 = arith.constant 1 : index
    %c0_35 = arith.constant 0 : index
    %65 = vector.load %arg12[%c0_34, %c1, %c0_35] : memref<2x8x32xf32, #tpu.memory_space<vmem>>, vector<2x1x32xf32>
    tpu.vector_store %arg12[%c0_34, %c1, %c0_35], %64 {strides = array<i32>} : memref<2x8x32xf32, #tpu.memory_space<vmem>>, vector<2x1x32xf32>,
    %66 = vector.extract_strided_slice %15 {offsets = [2, 0, 0], sizes = [1, 2, 128], strides = [1, 1, 1]} : vector<8x2x128xf32> to vector<1x2x128xf32>
    %67 = vector.shape_cast %66 : vector<1x2x128xf32> to vector<2x128xf32>
    %68 = arith.truncf %63 : vector<2x32xf32> to vector<2x32xbf16>
    %cst_36 = arith.constant dense<0.000000e+00> : vector<2x128xf32>
    %69 = tpu.matmul %68, %4, %cst_36 {dimension_numbers = #tpu.dot_dimension_numbers<[1], [0], [0], [1], [0, 0, 1, 1], [], []>} : vector<2x32xbf16>, vector<32x128xbf16>, vector<2x128xf32> -> vector<2x128xf32>
    %70 = arith.addf %67, %69 : vector<2x128xf32>
    %71 = vector.broadcast %5 : vector<1x128xf32> to vector<2x128xf32>
    %72 = arith.addf %70, %71 : vector<2x128xf32>
    %73 = arith.negf %72 : vector<2x128xf32>
    %74 = math.exp %73 : vector<2x128xf32>
    %cst_37 = arith.constant 1.000000e+00 : f32
    %75 = vector.broadcast %cst_37 : f32 to vector<2x128xf32>
    %76 = arith.addf %75, %74 : vector<2x128xf32>
    %77 = arith.divf %75, %76 : vector<2x128xf32>
    %78 = math.tanh %72 : vector<2x128xf32>
    %79 = vector.extract_strided_slice %77 {offsets = [0, 0], sizes = [2, 32], strides = [1, 1]} : vector<2x128xf32> to vector<2x32xf32>
    %80 = vector.extract_strided_slice %77 {offsets = [0, 32], sizes = [2, 32], strides = [1, 1]} : vector<2x128xf32> to vector<2x32xf32>
    %81 = vector.extract_strided_slice %77 {offsets = [0, 96], sizes = [2, 32], strides = [1, 1]} : vector<2x128xf32> to vector<2x32xf32>
    %82 = vector.extract_strided_slice %78 {offsets = [0, 64], sizes = [2, 32], strides = [1, 1]} : vector<2x128xf32> to vector<2x32xf32>
    %83 = arith.mulf %80, %61 : vector<2x32xf32>
    %84 = arith.mulf %79, %82 : vector<2x32xf32>
    %85 = arith.addf %83, %84 : vector<2x32xf32>
    %86 = math.tanh %85 : vector<2x32xf32>
    %87 = arith.mulf %81, %86 : vector<2x32xf32>
    %88 = vector.shape_cast %87 : vector<2x32xf32> to vector<2x1x32xf32>
    %c0_38 = arith.constant 0 : index
    %c2 = arith.constant 2 : index
    %c0_39 = arith.constant 0 : index
    %89 = vector.load %arg12[%c0_38, %c2, %c0_39] : memref<2x8x32xf32, #tpu.memory_space<vmem>>, vector<2x1x32xf32>
    tpu.vector_store %arg12[%c0_38, %c2, %c0_39], %88 {strides = array<i32>} : memref<2x8x32xf32, #tpu.memory_space<vmem>>, vector<2x1x32xf32>,
    %90 = vector.extract_strided_slice %15 {offsets = [3, 0, 0], sizes = [1, 2, 128], strides = [1, 1, 1]} : vector<8x2x128xf32> to vector<1x2x128xf32>
    %91 = vector.shape_cast %90 : vector<1x2x128xf32> to vector<2x128xf32>
    %92 = arith.truncf %87 : vector<2x32xf32> to vector<2x32xbf16>
    %cst_40 = arith.constant dense<0.000000e+00> : vector<2x128xf32>
    %93 = tpu.matmul %92, %4, %cst_40 {dimension_numbers = #tpu.dot_dimension_numbers<[1], [0], [0], [1], [0, 0, 1, 1], [], []>} : vector<2x32xbf16>, vector<32x128xbf16>, vector<2x128xf32> -> vector<2x128xf32>
    %94 = arith.addf %91, %93 : vector<2x128xf32>
    %95 = vector.broadcast %5 : vector<1x128xf32> to vector<2x128xf32>
    %96 = arith.addf %94, %95 : vector<2x128xf32>
    %97 = arith.negf %96 : vector<2x128xf32>
    %98 = math.exp %97 : vector<2x128xf32>
    %cst_41 = arith.constant 1.000000e+00 : f32
    %99 = vector.broadcast %cst_41 : f32 to vector<2x128xf32>
    %100 = arith.addf %99, %98 : vector<2x128xf32>
    %101 = arith.divf %99, %100 : vector<2x128xf32>
    %102 = math.tanh %96 : vector<2x128xf32>
    %103 = vector.extract_strided_slice %101 {offsets = [0, 0], sizes = [2, 32], strides = [1, 1]} : vector<2x128xf32> to vector<2x32xf32>
    %104 = vector.extract_strided_slice %101 {offsets = [0, 32], sizes = [2, 32], strides = [1, 1]} : vector<2x128xf32> to vector<2x32xf32>
    %105 = vector.extract_strided_slice %101 {offsets = [0, 96], sizes = [2, 32], strides = [1, 1]} : vector<2x128xf32> to vector<2x32xf32>
    %106 = vector.extract_strided_slice %102 {offsets = [0, 64], sizes = [2, 32], strides = [1, 1]} : vector<2x128xf32> to vector<2x32xf32>
    %107 = arith.mulf %104, %85 : vector<2x32xf32>
    %108 = arith.mulf %103, %106 : vector<2x32xf32>
    %109 = arith.addf %107, %108 : vector<2x32xf32>
    %110 = math.tanh %109 : vector<2x32xf32>
    %111 = arith.mulf %105, %110 : vector<2x32xf32>
    %112 = vector.shape_cast %111 : vector<2x32xf32> to vector<2x1x32xf32>
    %c0_42 = arith.constant 0 : index
    %c3 = arith.constant 3 : index
    %c0_43 = arith.constant 0 : index
    %113 = vector.load %arg12[%c0_42, %c3, %c0_43] : memref<2x8x32xf32, #tpu.memory_space<vmem>>, vector<2x1x32xf32>
    tpu.vector_store %arg12[%c0_42, %c3, %c0_43], %112 {strides = array<i32>} : memref<2x8x32xf32, #tpu.memory_space<vmem>>, vector<2x1x32xf32>,
    %114 = vector.extract_strided_slice %15 {offsets = [4, 0, 0], sizes = [1, 2, 128], strides = [1, 1, 1]} : vector<8x2x128xf32> to vector<1x2x128xf32>
    %115 = vector.shape_cast %114 : vector<1x2x128xf32> to vector<2x128xf32>
    %116 = arith.truncf %111 : vector<2x32xf32> to vector<2x32xbf16>
    %cst_44 = arith.constant dense<0.000000e+00> : vector<2x128xf32>
    %117 = tpu.matmul %116, %4, %cst_44 {dimension_numbers = #tpu.dot_dimension_numbers<[1], [0], [0], [1], [0, 0, 1, 1], [], []>} : vector<2x32xbf16>, vector<32x128xbf16>, vector<2x128xf32> -> vector<2x128xf32>
    %118 = arith.addf %115, %117 : vector<2x128xf32>
    %119 = vector.broadcast %5 : vector<1x128xf32> to vector<2x128xf32>
    %120 = arith.addf %118, %119 : vector<2x128xf32>
    %121 = arith.negf %120 : vector<2x128xf32>
    %122 = math.exp %121 : vector<2x128xf32>
    %cst_45 = arith.constant 1.000000e+00 : f32
    %123 = vector.broadcast %cst_45 : f32 to vector<2x128xf32>
    %124 = arith.addf %123, %122 : vector<2x128xf32>
    %125 = arith.divf %123, %124 : vector<2x128xf32>
    %126 = math.tanh %120 : vector<2x128xf32>
    %127 = vector.extract_strided_slice %125 {offsets = [0, 0], sizes = [2, 32], strides = [1, 1]} : vector<2x128xf32> to vector<2x32xf32>
    %128 = vector.extract_strided_slice %125 {offsets = [0, 32], sizes = [2, 32], strides = [1, 1]} : vector<2x128xf32> to vector<2x32xf32>
    %129 = vector.extract_strided_slice %125 {offsets = [0, 96], sizes = [2, 32], strides = [1, 1]} : vector<2x128xf32> to vector<2x32xf32>
    %130 = vector.extract_strided_slice %126 {offsets = [0, 64], sizes = [2, 32], strides = [1, 1]} : vector<2x128xf32> to vector<2x32xf32>
    %131 = arith.mulf %128, %109 : vector<2x32xf32>
    %132 = arith.mulf %127, %130 : vector<2x32xf32>
    %133 = arith.addf %131, %132 : vector<2x32xf32>
    %134 = math.tanh %133 : vector<2x32xf32>
    %135 = arith.mulf %129, %134 : vector<2x32xf32>
    %136 = vector.shape_cast %135 : vector<2x32xf32> to vector<2x1x32xf32>
    %c0_46 = arith.constant 0 : index
    %c4 = arith.constant 4 : index
    %c0_47 = arith.constant 0 : index
    %137 = vector.load %arg12[%c0_46, %c4, %c0_47] : memref<2x8x32xf32, #tpu.memory_space<vmem>>, vector<2x1x32xf32>
    tpu.vector_store %arg12[%c0_46, %c4, %c0_47], %136 {strides = array<i32>} : memref<2x8x32xf32, #tpu.memory_space<vmem>>, vector<2x1x32xf32>,
    %138 = vector.extract_strided_slice %15 {offsets = [5, 0, 0], sizes = [1, 2, 128], strides = [1, 1, 1]} : vector<8x2x128xf32> to vector<1x2x128xf32>
    %139 = vector.shape_cast %138 : vector<1x2x128xf32> to vector<2x128xf32>
    %140 = arith.truncf %135 : vector<2x32xf32> to vector<2x32xbf16>
    %cst_48 = arith.constant dense<0.000000e+00> : vector<2x128xf32>
    %141 = tpu.matmul %140, %4, %cst_48 {dimension_numbers = #tpu.dot_dimension_numbers<[1], [0], [0], [1], [0, 0, 1, 1], [], []>} : vector<2x32xbf16>, vector<32x128xbf16>, vector<2x128xf32> -> vector<2x128xf32>
    %142 = arith.addf %139, %141 : vector<2x128xf32>
    %143 = vector.broadcast %5 : vector<1x128xf32> to vector<2x128xf32>
    %144 = arith.addf %142, %143 : vector<2x128xf32>
    %145 = arith.negf %144 : vector<2x128xf32>
    %146 = math.exp %145 : vector<2x128xf32>
    %cst_49 = arith.constant 1.000000e+00 : f32
    %147 = vector.broadcast %cst_49 : f32 to vector<2x128xf32>
    %148 = arith.addf %147, %146 : vector<2x128xf32>
    %149 = arith.divf %147, %148 : vector<2x128xf32>
    %150 = math.tanh %144 : vector<2x128xf32>
    %151 = vector.extract_strided_slice %149 {offsets = [0, 0], sizes = [2, 32], strides = [1, 1]} : vector<2x128xf32> to vector<2x32xf32>
    %152 = vector.extract_strided_slice %149 {offsets = [0, 32], sizes = [2, 32], strides = [1, 1]} : vector<2x128xf32> to vector<2x32xf32>
    %153 = vector.extract_strided_slice %149 {offsets = [0, 96], sizes = [2, 32], strides = [1, 1]} : vector<2x128xf32> to vector<2x32xf32>
    %154 = vector.extract_strided_slice %150 {offsets = [0, 64], sizes = [2, 32], strides = [1, 1]} : vector<2x128xf32> to vector<2x32xf32>
    %155 = arith.mulf %152, %133 : vector<2x32xf32>
    %156 = arith.mulf %151, %154 : vector<2x32xf32>
    %157 = arith.addf %155, %156 : vector<2x32xf32>
    %158 = math.tanh %157 : vector<2x32xf32>
    %159 = arith.mulf %153, %158 : vector<2x32xf32>
    %160 = vector.shape_cast %159 : vector<2x32xf32> to vector<2x1x32xf32>
    %c0_50 = arith.constant 0 : index
    %c5 = arith.constant 5 : index
    %c0_51 = arith.constant 0 : index
    %161 = vector.load %arg12[%c0_50, %c5, %c0_51] : memref<2x8x32xf32, #tpu.memory_space<vmem>>, vector<2x1x32xf32>
    tpu.vector_store %arg12[%c0_50, %c5, %c0_51], %160 {strides = array<i32>} : memref<2x8x32xf32, #tpu.memory_space<vmem>>, vector<2x1x32xf32>,
    %162 = vector.extract_strided_slice %15 {offsets = [6, 0, 0], sizes = [1, 2, 128], strides = [1, 1, 1]} : vector<8x2x128xf32> to vector<1x2x128xf32>
    %163 = vector.shape_cast %162 : vector<1x2x128xf32> to vector<2x128xf32>
    %164 = arith.truncf %159 : vector<2x32xf32> to vector<2x32xbf16>
    %cst_52 = arith.constant dense<0.000000e+00> : vector<2x128xf32>
    %165 = tpu.matmul %164, %4, %cst_52 {dimension_numbers = #tpu.dot_dimension_numbers<[1], [0], [0], [1], [0, 0, 1, 1], [], []>} : vector<2x32xbf16>, vector<32x128xbf16>, vector<2x128xf32> -> vector<2x128xf32>
    %166 = arith.addf %163, %165 : vector<2x128xf32>
    %167 = vector.broadcast %5 : vector<1x128xf32> to vector<2x128xf32>
    %168 = arith.addf %166, %167 : vector<2x128xf32>
    %169 = arith.negf %168 : vector<2x128xf32>
    %170 = math.exp %169 : vector<2x128xf32>
    %cst_53 = arith.constant 1.000000e+00 : f32
    %171 = vector.broadcast %cst_53 : f32 to vector<2x128xf32>
    %172 = arith.addf %171, %170 : vector<2x128xf32>
    %173 = arith.divf %171, %172 : vector<2x128xf32>
    %174 = math.tanh %168 : vector<2x128xf32>
    %175 = vector.extract_strided_slice %173 {offsets = [0, 0], sizes = [2, 32], strides = [1, 1]} : vector<2x128xf32> to vector<2x32xf32>
    %176 = vector.extract_strided_slice %173 {offsets = [0, 32], sizes = [2, 32], strides = [1, 1]} : vector<2x128xf32> to vector<2x32xf32>
    %177 = vector.extract_strided_slice %173 {offsets = [0, 96], sizes = [2, 32], strides = [1, 1]} : vector<2x128xf32> to vector<2x32xf32>
    %178 = vector.extract_strided_slice %174 {offsets = [0, 64], sizes = [2, 32], strides = [1, 1]} : vector<2x128xf32> to vector<2x32xf32>
    %179 = arith.mulf %176, %157 : vector<2x32xf32>
    %180 = arith.mulf %175, %178 : vector<2x32xf32>
    %181 = arith.addf %179, %180 : vector<2x32xf32>
    %182 = math.tanh %181 : vector<2x32xf32>
    %183 = arith.mulf %177, %182 : vector<2x32xf32>
    %184 = vector.shape_cast %183 : vector<2x32xf32> to vector<2x1x32xf32>
    %c0_54 = arith.constant 0 : index
    %c6 = arith.constant 6 : index
    %c0_55 = arith.constant 0 : index
    %185 = vector.load %arg12[%c0_54, %c6, %c0_55] : memref<2x8x32xf32, #tpu.memory_space<vmem>>, vector<2x1x32xf32>
    tpu.vector_store %arg12[%c0_54, %c6, %c0_55], %184 {strides = array<i32>} : memref<2x8x32xf32, #tpu.memory_space<vmem>>, vector<2x1x32xf32>,
    %186 = vector.extract_strided_slice %15 {offsets = [7, 0, 0], sizes = [1, 2, 128], strides = [1, 1, 1]} : vector<8x2x128xf32> to vector<1x2x128xf32>
    %187 = vector.shape_cast %186 : vector<1x2x128xf32> to vector<2x128xf32>
    %188 = arith.truncf %183 : vector<2x32xf32> to vector<2x32xbf16>
    %cst_56 = arith.constant dense<0.000000e+00> : vector<2x128xf32>
    %189 = tpu.matmul %188, %4, %cst_56 {dimension_numbers = #tpu.dot_dimension_numbers<[1], [0], [0], [1], [0, 0, 1, 1], [], []>} : vector<2x32xbf16>, vector<32x128xbf16>, vector<2x128xf32> -> vector<2x128xf32>
    %190 = arith.addf %187, %189 : vector<2x128xf32>
    %191 = vector.broadcast %5 : vector<1x128xf32> to vector<2x128xf32>
    %192 = arith.addf %190, %191 : vector<2x128xf32>
    %193 = arith.negf %192 : vector<2x128xf32>
    %194 = math.exp %193 : vector<2x128xf32>
    %cst_57 = arith.constant 1.000000e+00 : f32
    %195 = vector.broadcast %cst_57 : f32 to vector<2x128xf32>
    %196 = arith.addf %195, %194 : vector<2x128xf32>
    %197 = arith.divf %195, %196 : vector<2x128xf32>
    %198 = math.tanh %192 : vector<2x128xf32>
    %199 = vector.extract_strided_slice %197 {offsets = [0, 0], sizes = [2, 32], strides = [1, 1]} : vector<2x128xf32> to vector<2x32xf32>
    %200 = vector.extract_strided_slice %197 {offsets = [0, 32], sizes = [2, 32], strides = [1, 1]} : vector<2x128xf32> to vector<2x32xf32>
    %201 = vector.extract_strided_slice %197 {offsets = [0, 96], sizes = [2, 32], strides = [1, 1]} : vector<2x128xf32> to vector<2x32xf32>
    %202 = vector.extract_strided_slice %198 {offsets = [0, 64], sizes = [2, 32], strides = [1, 1]} : vector<2x128xf32> to vector<2x32xf32>
    %203 = arith.mulf %200, %181 : vector<2x32xf32>
    %204 = arith.mulf %199, %202 : vector<2x32xf32>
    %205 = arith.addf %203, %204 : vector<2x32xf32>
    %206 = math.tanh %205 : vector<2x32xf32>
    %207 = arith.mulf %201, %206 : vector<2x32xf32>
    %208 = vector.shape_cast %207 : vector<2x32xf32> to vector<2x1x32xf32>
    %c0_58 = arith.constant 0 : index
    %c7 = arith.constant 7 : index
    %c0_59 = arith.constant 0 : index
    %209 = vector.load %arg12[%c0_58, %c7, %c0_59] : memref<2x8x32xf32, #tpu.memory_space<vmem>>, vector<2x1x32xf32>
    tpu.vector_store %arg12[%c0_58, %c7, %c0_59], %208 {strides = array<i32>} : memref<2x8x32xf32, #tpu.memory_space<vmem>>, vector<2x1x32xf32>,
    %c0_60 = arith.constant 0 : index
    %c0_61 = arith.constant 0 : index
    %c0_62 = arith.constant 0 : index
    %210 = vector.load %arg12[%c0_60, %c0_61, %c0_62] : memref<2x8x32xf32, #tpu.memory_space<vmem>>, vector<2x8x32xf32>
    %cst_63 = arith.constant 0.000000e+00 : f32
    %211 = vector.broadcast %cst_63 : f32 to vector<2x8xf32>
    %212 = vector.shape_cast %9 : vector<1x16xf32> to vector<1x16xf32>
    %213 = vector.broadcast %212 : vector<1x16xf32> to vector<2x16xf32>
    %214 = tpu.iota {dimensions = array<i32: 1>} : vector<2x8xi32>
    %cst_64 = arith.constant 0.000000e+00 : f32
    %215 = vector.broadcast %cst_64 : f32 to vector<2x1xf32>
    %216 = arith.truncf %213 : vector<2x16xf32> to vector<2x16xbf16>
    %cst_65 = arith.constant dense<0.000000e+00> : vector<2x128xf32>
    %217 = tpu.matmul %216, %6, %cst_65 {dimension_numbers = #tpu.dot_dimension_numbers<[1], [0], [0], [1], [0, 0, 1, 1], [], []>} : vector<2x16xbf16>, vector<16x128xbf16>, vector<2x128xf32> -> vector<2x128xf32>
    %218 = arith.truncf %207 : vector<2x32xf32> to vector<2x32xbf16>
    %cst_66 = arith.constant dense<0.000000e+00> : vector<2x128xf32>
    %219 = tpu.matmul %218, %7, %cst_66 {dimension_numbers = #tpu.dot_dimension_numbers<[1], [0], [0], [1], [0, 0, 1, 1], [], []>} : vector<2x32xbf16>, vector<32x128xbf16>, vector<2x128xf32> -> vector<2x128xf32>
    %220 = arith.addf %217, %219 : vector<2x128xf32>
    %221 = vector.broadcast %8 : vector<1x128xf32> to vector<2x128xf32>
    %222 = arith.addf %220, %221 : vector<2x128xf32>
    %223 = arith.negf %222 : vector<2x128xf32>
    %224 = math.exp %223 : vector<2x128xf32>
    %cst_67 = arith.constant 1.000000e+00 : f32
    %225 = vector.broadcast %cst_67 : f32 to vector<2x128xf32>
    %226 = arith.addf %225, %224 : vector<2x128xf32>
    %227 = arith.divf %225, %226 : vector<2x128xf32>
    %228 = math.tanh %222 : vector<2x128xf32>
    %229 = vector.extract_strided_slice %227 {offsets = [0, 0], sizes = [2, 32], strides = [1, 1]} : vector<2x128xf32> to vector<2x32xf32>
    %230 = vector.extract_strided_slice %227 {offsets = [0, 32], sizes = [2, 32], strides = [1, 1]} : vector<2x128xf32> to vector<2x32xf32>
    %231 = vector.extract_strided_slice %227 {offsets = [0, 96], sizes = [2, 32], strides = [1, 1]} : vector<2x128xf32> to vector<2x32xf32>
    %232 = vector.extract_strided_slice %228 {offsets = [0, 64], sizes = [2, 32], strides = [1, 1]} : vector<2x128xf32> to vector<2x32xf32>
    %233 = arith.mulf %230, %205 : vector<2x32xf32>
    %234 = arith.mulf %229, %232 : vector<2x32xf32>
    %235 = arith.addf %233, %234 : vector<2x32xf32>
    %236 = math.tanh %235 : vector<2x32xf32>
    %237 = arith.mulf %231, %236 : vector<2x32xf32>
    %238 = vector.shape_cast %237 : vector<2x32xf32> to vector<2x1x32xf32>
    %239 = vector.broadcast %238 : vector<2x1x32xf32> to vector<2x8x32xf32>
    %240 = arith.mulf %239, %210 : vector<2x8x32xf32>
    %cst_68 = arith.constant dense<0.000000e+00> : vector<2x8xf32>
    %241 = vector.multi_reduction <add>, %240, %cst_68 [2] : vector<2x8x32xf32> to vector<2x8xf32>
    %cst_69 = arith.constant 0.000000e+00 : f32
    %242 = vector.broadcast %cst_69 : f32 to vector<2x8xf32>
    %243 = arith.cmpf ogt, %211, %242 : vector<2x8xf32>
    %cst_70 = arith.constant -1.000000e+09 : f32
    %244 = vector.broadcast %cst_70 : f32 to vector<2x8xf32>
    %245 = arith.select %243, %244, %241 : vector<2x8xi1>, vector<2x8xf32>
    %cst_71 = arith.constant dense<0xFF800000> : vector<2xf32>
    %246 = vector.multi_reduction <maximumf>, %245, %cst_71 [1] : vector<2x8xf32> to vector<2xf32>
    %247 = vector.shape_cast %246 : vector<2xf32> to vector<2x1xf32>
    %248 = vector.broadcast %247 : vector<2x1xf32> to vector<2x8xf32>
    %249 = arith.subf %245, %248 : vector<2x8xf32>
    %250 = math.exp %249 : vector<2x8xf32>
    %cst_72 = arith.constant dense<0.000000e+00> : vector<2xf32>
    %251 = vector.multi_reduction <add>, %250, %cst_72 [1] : vector<2x8xf32> to vector<2xf32>
    %252 = vector.shape_cast %251 : vector<2xf32> to vector<2x1xf32>
    %253 = vector.broadcast %252 : vector<2x1xf32> to vector<2x8xf32>
    %254 = arith.divf %250, %253 : vector<2x8xf32>
    %255 = vector.shape_cast %254 : vector<2x8xf32> to vector<2x8x1xf32>
    %256 = vector.broadcast %255 : vector<2x8x1xf32> to vector<2x8x32xf32>
    %257 = arith.mulf %256, %210 : vector<2x8x32xf32>
    %cst_73 = arith.constant dense<0.000000e+00> : vector<2x32xf32>
    %258 = vector.multi_reduction <add>, %257, %cst_73 [1] : vector<2x8x32xf32> to vector<2x32xf32>
    %259 = vector.shape_cast %258 : vector<2x32xf32> to vector<2x1x32xf32>
    %260 = vector.broadcast %259 : vector<2x1x32xf32> to vector<2x8x32xf32>
    %261 = arith.mulf %260, %210 : vector<2x8x32xf32>
    %cst_74 = arith.constant dense<0.000000e+00> : vector<2x8xf32>
    %262 = vector.multi_reduction <add>, %261, %cst_74 [2] : vector<2x8x32xf32> to vector<2x8xf32>
    %263 = math.tanh %262 : vector<2x8xf32>
    %cst_75 = arith.constant 1.000000e+01 : f32
    %264 = vector.broadcast %cst_75 : f32 to vector<2x8xf32>
    %265 = arith.mulf %264, %263 : vector<2x8xf32>
    %cst_76 = arith.constant 0.000000e+00 : f32
    %266 = vector.broadcast %cst_76 : f32 to vector<2x8xf32>
    %267 = arith.cmpf ogt, %211, %266 : vector<2x8xf32>
    %cst_77 = arith.constant -1.000000e+09 : f32
    %268 = vector.broadcast %cst_77 : f32 to vector<2x8xf32>
    %269 = arith.select %267, %268, %265 : vector<2x8xi1>, vector<2x8xf32>
    %cst_78 = arith.constant dense<0xFF800000> : vector<2xf32>
    %270 = vector.multi_reduction <maximumf>, %269, %cst_78 [1] : vector<2x8xf32> to vector<2xf32>
    %271 = vector.shape_cast %270 : vector<2xf32> to vector<2x1xf32>
    %272 = vector.broadcast %271 : vector<2x1xf32> to vector<2x8xf32>
    %273 = arith.subf %269, %272 : vector<2x8xf32>
    %274 = math.exp %273 : vector<2x8xf32>
    %cst_79 = arith.constant dense<0.000000e+00> : vector<2xf32>
    %275 = vector.multi_reduction <add>, %274, %cst_79 [1] : vector<2x8xf32> to vector<2xf32>
    %276 = vector.shape_cast %275 : vector<2xf32> to vector<2x1xf32>
    %277 = vector.broadcast %276 : vector<2x1xf32> to vector<2x8xf32>
    %278 = arith.divf %274, %277 : vector<2x8xf32>
    %279 = vector.broadcast %271 : vector<2x1xf32> to vector<2x8xf32>
    %280 = arith.cmpf oge, %269, %279 : vector<2x8xf32>
    %c8_i32 = arith.constant 8 : i32
    %281 = vector.broadcast %c8_i32 : i32 to vector<2x8xi32>
    %282 = arith.select %280, %214, %281 : vector<2x8xi1>, vector<2x8xi32>
    %cst_80 = arith.constant dense<2147483647> : vector<2xi32>
    %283 = vector.multi_reduction <minsi>, %282, %cst_80 [1] : vector<2x8xi32> to vector<2xi32>
    %284 = vector.shape_cast %283 : vector<2xi32> to vector<2x1xi32>
    %285 = vector.broadcast %284 : vector<2x1xi32> to vector<2x8xi32>
    %286 = arith.cmpi eq, %214, %285 : vector<2x8xi32>
    %287 = arith.extui %286 : vector<2x8xi1> to vector<2x8xi32>
    %288 = arith.sitofp %287 : vector<2x8xi32> to vector<2x8xf32>
    %289 = arith.mulf %278, %288 : vector<2x8xf32>
    %cst_81 = arith.constant dense<0.000000e+00> : vector<2xf32>
    %290 = vector.multi_reduction <add>, %289, %cst_81 [1] : vector<2x8xf32> to vector<2xf32>
    %291 = vector.shape_cast %290 : vector<2xf32> to vector<2x1xf32>
    %292 = vector.shape_cast %288 : vector<2x8xf32> to vector<2x8x1xf32>
    %293 = vector.broadcast %292 : vector<2x8x1xf32> to vector<2x8x2xf32>
    %294 = arith.mulf %293, %0 : vector<2x8x2xf32>
    %cst_82 = arith.constant dense<0.000000e+00> : vector<2x2xf32>
    %295 = vector.multi_reduction <add>, %294, %cst_82 [1] : vector<2x8x2xf32> to vector<2x2xf32>
    %296 = vector.shape_cast %288 : vector<2x8xf32> to vector<2x8x1xf32>
    %297 = vector.broadcast %296 : vector<2x8x1xf32> to vector<2x8x16xf32>
    %298 = arith.mulf %297, %1 : vector<2x8x16xf32>
    %cst_83 = arith.constant dense<0.000000e+00> : vector<2x16xf32>
    %299 = vector.multi_reduction <add>, %298, %cst_83 [1] : vector<2x8x16xf32> to vector<2x16xf32>
    %300 = arith.addf %211, %288 : vector<2x8xf32>
    %c0_84 = arith.constant 0 : index
    %c0_85 = arith.constant 0 : index
    %301 = vector.load %arg11[%c0_84, %c0_85] : memref<2x128xf32, #tpu.memory_space<vmem>>, vector<2x1xf32>
    tpu.vector_store %arg11[%c0_84, %c0_85], %291 {strides = array<i32>} : memref<2x128xf32, #tpu.memory_space<vmem>>, vector<2x1xf32>,
    %302 = arith.sitofp %284 : vector<2x1xi32> to vector<2x1xf32>
    %c0_86 = arith.constant 0 : index
    %c8 = arith.constant 8 : index
    %303 = vector.load %arg11[%c0_86, %c8] : memref<2x128xf32, #tpu.memory_space<vmem>>, vector<2x1xf32>
    tpu.vector_store %arg11[%c0_86, %c8], %302 {strides = array<i32>} : memref<2x128xf32, #tpu.memory_space<vmem>>, vector<2x1xf32>,
    %c0_87 = arith.constant 0 : index
    %c16 = arith.constant 16 : index
    %304 = vector.load %arg11[%c0_87, %c16] : memref<2x128xf32, #tpu.memory_space<vmem>>, vector<2x2xf32>
    tpu.vector_store %arg11[%c0_87, %c16], %295 {strides = array<i32>} : memref<2x128xf32, #tpu.memory_space<vmem>>, vector<2x2xf32>,
    %305 = arith.truncf %299 : vector<2x16xf32> to vector<2x16xbf16>
    %cst_88 = arith.constant dense<0.000000e+00> : vector<2x128xf32>
    %306 = tpu.matmul %305, %6, %cst_88 {dimension_numbers = #tpu.dot_dimension_numbers<[1], [0], [0], [1], [0, 0, 1, 1], [], []>} : vector<2x16xbf16>, vector<16x128xbf16>, vector<2x128xf32> -> vector<2x128xf32>
    %307 = arith.truncf %237 : vector<2x32xf32> to vector<2x32xbf16>
    %cst_89 = arith.constant dense<0.000000e+00> : vector<2x128xf32>
    %308 = tpu.matmul %307, %7, %cst_89 {dimension_numbers = #tpu.dot_dimension_numbers<[1], [0], [0], [1], [0, 0, 1, 1], [], []>} : vector<2x32xbf16>, vector<32x128xbf16>, vector<2x128xf32> -> vector<2x128xf32>
    %309 = arith.addf %306, %308 : vector<2x128xf32>
    %310 = vector.broadcast %8 : vector<1x128xf32> to vector<2x128xf32>
    %311 = arith.addf %309, %310 : vector<2x128xf32>
    %312 = arith.negf %311 : vector<2x128xf32>
    %313 = math.exp %312 : vector<2x128xf32>
    %cst_90 = arith.constant 1.000000e+00 : f32
    %314 = vector.broadcast %cst_90 : f32 to vector<2x128xf32>
    %315 = arith.addf %314, %313 : vector<2x128xf32>
    %316 = arith.divf %314, %315 : vector<2x128xf32>
    %317 = math.tanh %311 : vector<2x128xf32>
    %318 = vector.extract_strided_slice %316 {offsets = [0, 0], sizes = [2, 32], strides = [1, 1]} : vector<2x128xf32> to vector<2x32xf32>
    %319 = vector.extract_strided_slice %316 {offsets = [0, 32], sizes = [2, 32], strides = [1, 1]} : vector<2x128xf32> to vector<2x32xf32>
    %320 = vector.extract_strided_slice %316 {offsets = [0, 96], sizes = [2, 32], strides = [1, 1]} : vector<2x128xf32> to vector<2x32xf32>
    %321 = vector.extract_strided_slice %317 {offsets = [0, 64], sizes = [2, 32], strides = [1, 1]} : vector<2x128xf32> to vector<2x32xf32>
    %322 = arith.mulf %319, %235 : vector<2x32xf32>
    %323 = arith.mulf %318, %321 : vector<2x32xf32>
    %324 = arith.addf %322, %323 : vector<2x32xf32>
    %325 = math.tanh %324 : vector<2x32xf32>
    %326 = arith.mulf %320, %325 : vector<2x32xf32>
    %327 = vector.shape_cast %326 : vector<2x32xf32> to vector<2x1x32xf32>
    %328 = vector.broadcast %327 : vector<2x1x32xf32> to vector<2x8x32xf32>
    %329 = arith.mulf %328, %210 : vector<2x8x32xf32>
    %cst_91 = arith.constant dense<0.000000e+00> : vector<2x8xf32>
    %330 = vector.multi_reduction <add>, %329, %cst_91 [2] : vector<2x8x32xf32> to vector<2x8xf32>
    %cst_92 = arith.constant 0.000000e+00 : f32
    %331 = vector.broadcast %cst_92 : f32 to vector<2x8xf32>
    %332 = arith.cmpf ogt, %300, %331 : vector<2x8xf32>
    %cst_93 = arith.constant -1.000000e+09 : f32
    %333 = vector.broadcast %cst_93 : f32 to vector<2x8xf32>
    %334 = arith.select %332, %333, %330 : vector<2x8xi1>, vector<2x8xf32>
    %cst_94 = arith.constant dense<0xFF800000> : vector<2xf32>
    %335 = vector.multi_reduction <maximumf>, %334, %cst_94 [1] : vector<2x8xf32> to vector<2xf32>
    %336 = vector.shape_cast %335 : vector<2xf32> to vector<2x1xf32>
    %337 = vector.broadcast %336 : vector<2x1xf32> to vector<2x8xf32>
    %338 = arith.subf %334, %337 : vector<2x8xf32>
    %339 = math.exp %338 : vector<2x8xf32>
    %cst_95 = arith.constant dense<0.000000e+00> : vector<2xf32>
    %340 = vector.multi_reduction <add>, %339, %cst_95 [1] : vector<2x8xf32> to vector<2xf32>
    %341 = vector.shape_cast %340 : vector<2xf32> to vector<2x1xf32>
    %342 = vector.broadcast %341 : vector<2x1xf32> to vector<2x8xf32>
    %343 = arith.divf %339, %342 : vector<2x8xf32>
    %344 = vector.shape_cast %343 : vector<2x8xf32> to vector<2x8x1xf32>
    %345 = vector.broadcast %344 : vector<2x8x1xf32> to vector<2x8x32xf32>
    %346 = arith.mulf %345, %210 : vector<2x8x32xf32>
    %cst_96 = arith.constant dense<0.000000e+00> : vector<2x32xf32>
    %347 = vector.multi_reduction <add>, %346, %cst_96 [1] : vector<2x8x32xf32> to vector<2x32xf32>
    %348 = vector.shape_cast %347 : vector<2x32xf32> to vector<2x1x32xf32>
    %349 = vector.broadcast %348 : vector<2x1x32xf32> to vector<2x8x32xf32>
    %350 = arith.mulf %349, %210 : vector<2x8x32xf32>
    %cst_97 = arith.constant dense<0.000000e+00> : vector<2x8xf32>
    %351 = vector.multi_reduction <add>, %350, %cst_97 [2] : vector<2x8x32xf32> to vector<2x8xf32>
    %352 = math.tanh %351 : vector<2x8xf32>
    %cst_98 = arith.constant 1.000000e+01 : f32
    %353 = vector.broadcast %cst_98 : f32 to vector<2x8xf32>
    %354 = arith.mulf %353, %352 : vector<2x8xf32>
    %cst_99 = arith.constant 0.000000e+00 : f32
    %355 = vector.broadcast %cst_99 : f32 to vector<2x8xf32>
    %356 = arith.cmpf ogt, %300, %355 : vector<2x8xf32>
    %cst_100 = arith.constant -1.000000e+09 : f32
    %357 = vector.broadcast %cst_100 : f32 to vector<2x8xf32>
    %358 = arith.select %356, %357, %354 : vector<2x8xi1>, vector<2x8xf32>
    %cst_101 = arith.constant dense<0xFF800000> : vector<2xf32>
    %359 = vector.multi_reduction <maximumf>, %358, %cst_101 [1] : vector<2x8xf32> to vector<2xf32>
    %360 = vector.shape_cast %359 : vector<2xf32> to vector<2x1xf32>
    %361 = vector.broadcast %360 : vector<2x1xf32> to vector<2x8xf32>
    %362 = arith.subf %358, %361 : vector<2x8xf32>
    %363 = math.exp %362 : vector<2x8xf32>
    %cst_102 = arith.constant dense<0.000000e+00> : vector<2xf32>
    %364 = vector.multi_reduction <add>, %363, %cst_102 [1] : vector<2x8xf32> to vector<2xf32>
    %365 = vector.shape_cast %364 : vector<2xf32> to vector<2x1xf32>
    %366 = vector.broadcast %365 : vector<2x1xf32> to vector<2x8xf32>
    %367 = arith.divf %363, %366 : vector<2x8xf32>
    %368 = vector.broadcast %360 : vector<2x1xf32> to vector<2x8xf32>
    %369 = arith.cmpf oge, %358, %368 : vector<2x8xf32>
    %c8_i32_103 = arith.constant 8 : i32
    %370 = vector.broadcast %c8_i32_103 : i32 to vector<2x8xi32>
    %371 = arith.select %369, %214, %370 : vector<2x8xi1>, vector<2x8xi32>
    %cst_104 = arith.constant dense<2147483647> : vector<2xi32>
    %372 = vector.multi_reduction <minsi>, %371, %cst_104 [1] : vector<2x8xi32> to vector<2xi32>
    %373 = vector.shape_cast %372 : vector<2xi32> to vector<2x1xi32>
    %374 = vector.broadcast %373 : vector<2x1xi32> to vector<2x8xi32>
    %375 = arith.cmpi eq, %214, %374 : vector<2x8xi32>
    %376 = arith.extui %375 : vector<2x8xi1> to vector<2x8xi32>
    %377 = arith.sitofp %376 : vector<2x8xi32> to vector<2x8xf32>
    %378 = arith.mulf %367, %377 : vector<2x8xf32>
    %cst_105 = arith.constant dense<0.000000e+00> : vector<2xf32>
    %379 = vector.multi_reduction <add>, %378, %cst_105 [1] : vector<2x8xf32> to vector<2xf32>
    %380 = vector.shape_cast %379 : vector<2xf32> to vector<2x1xf32>
    %381 = vector.shape_cast %377 : vector<2x8xf32> to vector<2x8x1xf32>
    %382 = vector.broadcast %381 : vector<2x8x1xf32> to vector<2x8x2xf32>
    %383 = arith.mulf %382, %0 : vector<2x8x2xf32>
    %cst_106 = arith.constant dense<0.000000e+00> : vector<2x2xf32>
    %384 = vector.multi_reduction <add>, %383, %cst_106 [1] : vector<2x8x2xf32> to vector<2x2xf32>
    %385 = vector.shape_cast %377 : vector<2x8xf32> to vector<2x8x1xf32>
    %386 = vector.broadcast %385 : vector<2x8x1xf32> to vector<2x8x16xf32>
    %387 = arith.mulf %386, %1 : vector<2x8x16xf32>
    %cst_107 = arith.constant dense<0.000000e+00> : vector<2x16xf32>
    %388 = vector.multi_reduction <add>, %387, %cst_107 [1] : vector<2x8x16xf32> to vector<2x16xf32>
    %389 = arith.addf %300, %377 : vector<2x8xf32>
    %390 = arith.subf %384, %295 : vector<2x2xf32>
    %391 = arith.mulf %390, %390 : vector<2x2xf32>
    %cst_108 = arith.constant dense<0.000000e+00> : vector<2xf32>
    %392 = vector.multi_reduction <add>, %391, %cst_108 [1] : vector<2x2xf32> to vector<2xf32>
    %393 = vector.shape_cast %392 : vector<2xf32> to vector<2x1xf32>
    %394 = math.sqrt %393 : vector<2x1xf32>
    %395 = arith.addf %215, %394 : vector<2x1xf32>
    %c0_109 = arith.constant 0 : index
    %c1_110 = arith.constant 1 : index
    %396 = vector.load %arg11[%c0_109, %c1_110] : memref<2x128xf32, #tpu.memory_space<vmem>>, vector<2x1xf32>
    tpu.vector_store %arg11[%c0_109, %c1_110], %380 {strides = array<i32>} : memref<2x128xf32, #tpu.memory_space<vmem>>, vector<2x1xf32>,
    %397 = arith.sitofp %373 : vector<2x1xi32> to vector<2x1xf32>
    %c0_111 = arith.constant 0 : index
    %c9 = arith.constant 9 : index
    %398 = vector.load %arg11[%c0_111, %c9] : memref<2x128xf32, #tpu.memory_space<vmem>>, vector<2x1xf32>
    tpu.vector_store %arg11[%c0_111, %c9], %397 {strides = array<i32>} : memref<2x128xf32, #tpu.memory_space<vmem>>, vector<2x1xf32>,
    %c0_112 = arith.constant 0 : index
    %c18 = arith.constant 18 : index
    %399 = vector.load %arg11[%c0_112, %c18] : memref<2x128xf32, #tpu.memory_space<vmem>>, vector<2x2xf32>
    tpu.vector_store %arg11[%c0_112, %c18], %384 {strides = array<i32>} : memref<2x128xf32, #tpu.memory_space<vmem>>, vector<2x2xf32>,
    %400 = arith.truncf %388 : vector<2x16xf32> to vector<2x16xbf16>
    %cst_113 = arith.constant dense<0.000000e+00> : vector<2x128xf32>
    %401 = tpu.matmul %400, %6, %cst_113 {dimension_numbers = #tpu.dot_dimension_numbers<[1], [0], [0], [1], [0, 0, 1, 1], [], []>} : vector<2x16xbf16>, vector<16x128xbf16>, vector<2x128xf32> -> vector<2x128xf32>
    %402 = arith.truncf %326 : vector<2x32xf32> to vector<2x32xbf16>
    %cst_114 = arith.constant dense<0.000000e+00> : vector<2x128xf32>
    %403 = tpu.matmul %402, %7, %cst_114 {dimension_numbers = #tpu.dot_dimension_numbers<[1], [0], [0], [1], [0, 0, 1, 1], [], []>} : vector<2x32xbf16>, vector<32x128xbf16>, vector<2x128xf32> -> vector<2x128xf32>
    %404 = arith.addf %401, %403 : vector<2x128xf32>
    %405 = vector.broadcast %8 : vector<1x128xf32> to vector<2x128xf32>
    %406 = arith.addf %404, %405 : vector<2x128xf32>
    %407 = arith.negf %406 : vector<2x128xf32>
    %408 = math.exp %407 : vector<2x128xf32>
    %cst_115 = arith.constant 1.000000e+00 : f32
    %409 = vector.broadcast %cst_115 : f32 to vector<2x128xf32>
    %410 = arith.addf %409, %408 : vector<2x128xf32>
    %411 = arith.divf %409, %410 : vector<2x128xf32>
    %412 = math.tanh %406 : vector<2x128xf32>
    %413 = vector.extract_strided_slice %411 {offsets = [0, 0], sizes = [2, 32], strides = [1, 1]} : vector<2x128xf32> to vector<2x32xf32>
    %414 = vector.extract_strided_slice %411 {offsets = [0, 32], sizes = [2, 32], strides = [1, 1]} : vector<2x128xf32> to vector<2x32xf32>
    %415 = vector.extract_strided_slice %411 {offsets = [0, 96], sizes = [2, 32], strides = [1, 1]} : vector<2x128xf32> to vector<2x32xf32>
    %416 = vector.extract_strided_slice %412 {offsets = [0, 64], sizes = [2, 32], strides = [1, 1]} : vector<2x128xf32> to vector<2x32xf32>
    %417 = arith.mulf %414, %324 : vector<2x32xf32>
    %418 = arith.mulf %413, %416 : vector<2x32xf32>
    %419 = arith.addf %417, %418 : vector<2x32xf32>
    %420 = math.tanh %419 : vector<2x32xf32>
    %421 = arith.mulf %415, %420 : vector<2x32xf32>
    %422 = vector.shape_cast %421 : vector<2x32xf32> to vector<2x1x32xf32>
    %423 = vector.broadcast %422 : vector<2x1x32xf32> to vector<2x8x32xf32>
    %424 = arith.mulf %423, %210 : vector<2x8x32xf32>
    %cst_116 = arith.constant dense<0.000000e+00> : vector<2x8xf32>
    %425 = vector.multi_reduction <add>, %424, %cst_116 [2] : vector<2x8x32xf32> to vector<2x8xf32>
    %cst_117 = arith.constant 0.000000e+00 : f32
    %426 = vector.broadcast %cst_117 : f32 to vector<2x8xf32>
    %427 = arith.cmpf ogt, %389, %426 : vector<2x8xf32>
    %cst_118 = arith.constant -1.000000e+09 : f32
    %428 = vector.broadcast %cst_118 : f32 to vector<2x8xf32>
    %429 = arith.select %427, %428, %425 : vector<2x8xi1>, vector<2x8xf32>
    %cst_119 = arith.constant dense<0xFF800000> : vector<2xf32>
    %430 = vector.multi_reduction <maximumf>, %429, %cst_119 [1] : vector<2x8xf32> to vector<2xf32>
    %431 = vector.shape_cast %430 : vector<2xf32> to vector<2x1xf32>
    %432 = vector.broadcast %431 : vector<2x1xf32> to vector<2x8xf32>
    %433 = arith.subf %429, %432 : vector<2x8xf32>
    %434 = math.exp %433 : vector<2x8xf32>
    %cst_120 = arith.constant dense<0.000000e+00> : vector<2xf32>
    %435 = vector.multi_reduction <add>, %434, %cst_120 [1] : vector<2x8xf32> to vector<2xf32>
    %436 = vector.shape_cast %435 : vector<2xf32> to vector<2x1xf32>
    %437 = vector.broadcast %436 : vector<2x1xf32> to vector<2x8xf32>
    %438 = arith.divf %434, %437 : vector<2x8xf32>
    %439 = vector.shape_cast %438 : vector<2x8xf32> to vector<2x8x1xf32>
    %440 = vector.broadcast %439 : vector<2x8x1xf32> to vector<2x8x32xf32>
    %441 = arith.mulf %440, %210 : vector<2x8x32xf32>
    %cst_121 = arith.constant dense<0.000000e+00> : vector<2x32xf32>
    %442 = vector.multi_reduction <add>, %441, %cst_121 [1] : vector<2x8x32xf32> to vector<2x32xf32>
    %443 = vector.shape_cast %442 : vector<2x32xf32> to vector<2x1x32xf32>
    %444 = vector.broadcast %443 : vector<2x1x32xf32> to vector<2x8x32xf32>
    %445 = arith.mulf %444, %210 : vector<2x8x32xf32>
    %cst_122 = arith.constant dense<0.000000e+00> : vector<2x8xf32>
    %446 = vector.multi_reduction <add>, %445, %cst_122 [2] : vector<2x8x32xf32> to vector<2x8xf32>
    %447 = math.tanh %446 : vector<2x8xf32>
    %cst_123 = arith.constant 1.000000e+01 : f32
    %448 = vector.broadcast %cst_123 : f32 to vector<2x8xf32>
    %449 = arith.mulf %448, %447 : vector<2x8xf32>
    %cst_124 = arith.constant 0.000000e+00 : f32
    %450 = vector.broadcast %cst_124 : f32 to vector<2x8xf32>
    %451 = arith.cmpf ogt, %389, %450 : vector<2x8xf32>
    %cst_125 = arith.constant -1.000000e+09 : f32
    %452 = vector.broadcast %cst_125 : f32 to vector<2x8xf32>
    %453 = arith.select %451, %452, %449 : vector<2x8xi1>, vector<2x8xf32>
    %cst_126 = arith.constant dense<0xFF800000> : vector<2xf32>
    %454 = vector.multi_reduction <maximumf>, %453, %cst_126 [1] : vector<2x8xf32> to vector<2xf32>
    %455 = vector.shape_cast %454 : vector<2xf32> to vector<2x1xf32>
    %456 = vector.broadcast %455 : vector<2x1xf32> to vector<2x8xf32>
    %457 = arith.subf %453, %456 : vector<2x8xf32>
    %458 = math.exp %457 : vector<2x8xf32>
    %cst_127 = arith.constant dense<0.000000e+00> : vector<2xf32>
    %459 = vector.multi_reduction <add>, %458, %cst_127 [1] : vector<2x8xf32> to vector<2xf32>
    %460 = vector.shape_cast %459 : vector<2xf32> to vector<2x1xf32>
    %461 = vector.broadcast %460 : vector<2x1xf32> to vector<2x8xf32>
    %462 = arith.divf %458, %461 : vector<2x8xf32>
    %463 = vector.broadcast %455 : vector<2x1xf32> to vector<2x8xf32>
    %464 = arith.cmpf oge, %453, %463 : vector<2x8xf32>
    %c8_i32_128 = arith.constant 8 : i32
    %465 = vector.broadcast %c8_i32_128 : i32 to vector<2x8xi32>
    %466 = arith.select %464, %214, %465 : vector<2x8xi1>, vector<2x8xi32>
    %cst_129 = arith.constant dense<2147483647> : vector<2xi32>
    %467 = vector.multi_reduction <minsi>, %466, %cst_129 [1] : vector<2x8xi32> to vector<2xi32>
    %468 = vector.shape_cast %467 : vector<2xi32> to vector<2x1xi32>
    %469 = vector.broadcast %468 : vector<2x1xi32> to vector<2x8xi32>
    %470 = arith.cmpi eq, %214, %469 : vector<2x8xi32>
    %471 = arith.extui %470 : vector<2x8xi1> to vector<2x8xi32>
    %472 = arith.sitofp %471 : vector<2x8xi32> to vector<2x8xf32>
    %473 = arith.mulf %462, %472 : vector<2x8xf32>
    %cst_130 = arith.constant dense<0.000000e+00> : vector<2xf32>
    %474 = vector.multi_reduction <add>, %473, %cst_130 [1] : vector<2x8xf32> to vector<2xf32>
    %475 = vector.shape_cast %474 : vector<2xf32> to vector<2x1xf32>
    %476 = vector.shape_cast %472 : vector<2x8xf32> to vector<2x8x1xf32>
    %477 = vector.broadcast %476 : vector<2x8x1xf32> to vector<2x8x2xf32>
    %478 = arith.mulf %477, %0 : vector<2x8x2xf32>
    %cst_131 = arith.constant dense<0.000000e+00> : vector<2x2xf32>
    %479 = vector.multi_reduction <add>, %478, %cst_131 [1] : vector<2x8x2xf32> to vector<2x2xf32>
    %480 = vector.shape_cast %472 : vector<2x8xf32> to vector<2x8x1xf32>
    %481 = vector.broadcast %480 : vector<2x8x1xf32> to vector<2x8x16xf32>
    %482 = arith.mulf %481, %1 : vector<2x8x16xf32>
    %cst_132 = arith.constant dense<0.000000e+00> : vector<2x16xf32>
    %483 = vector.multi_reduction <add>, %482, %cst_132 [1] : vector<2x8x16xf32> to vector<2x16xf32>
    %484 = arith.addf %389, %472 : vector<2x8xf32>
    %485 = arith.subf %479, %384 : vector<2x2xf32>
    %486 = arith.mulf %485, %485 : vector<2x2xf32>
    %cst_133 = arith.constant dense<0.000000e+00> : vector<2xf32>
    %487 = vector.multi_reduction <add>, %486, %cst_133 [1] : vector<2x2xf32> to vector<2xf32>
    %488 = vector.shape_cast %487 : vector<2xf32> to vector<2x1xf32>
    %489 = math.sqrt %488 : vector<2x1xf32>
    %490 = arith.addf %395, %489 : vector<2x1xf32>
    %c0_134 = arith.constant 0 : index
    %c2_135 = arith.constant 2 : index
    %491 = vector.load %arg11[%c0_134, %c2_135] : memref<2x128xf32, #tpu.memory_space<vmem>>, vector<2x1xf32>
    tpu.vector_store %arg11[%c0_134, %c2_135], %475 {strides = array<i32>} : memref<2x128xf32, #tpu.memory_space<vmem>>, vector<2x1xf32>,
    %492 = arith.sitofp %468 : vector<2x1xi32> to vector<2x1xf32>
    %c0_136 = arith.constant 0 : index
    %c10 = arith.constant 10 : index
    %493 = vector.load %arg11[%c0_136, %c10] : memref<2x128xf32, #tpu.memory_space<vmem>>, vector<2x1xf32>
    tpu.vector_store %arg11[%c0_136, %c10], %492 {strides = array<i32>} : memref<2x128xf32, #tpu.memory_space<vmem>>, vector<2x1xf32>,
    %c0_137 = arith.constant 0 : index
    %c20 = arith.constant 20 : index
    %494 = vector.load %arg11[%c0_137, %c20] : memref<2x128xf32, #tpu.memory_space<vmem>>, vector<2x2xf32>
    tpu.vector_store %arg11[%c0_137, %c20], %479 {strides = array<i32>} : memref<2x128xf32, #tpu.memory_space<vmem>>, vector<2x2xf32>,
    %495 = arith.truncf %483 : vector<2x16xf32> to vector<2x16xbf16>
    %cst_138 = arith.constant dense<0.000000e+00> : vector<2x128xf32>
    %496 = tpu.matmul %495, %6, %cst_138 {dimension_numbers = #tpu.dot_dimension_numbers<[1], [0], [0], [1], [0, 0, 1, 1], [], []>} : vector<2x16xbf16>, vector<16x128xbf16>, vector<2x128xf32> -> vector<2x128xf32>
    %497 = arith.truncf %421 : vector<2x32xf32> to vector<2x32xbf16>
    %cst_139 = arith.constant dense<0.000000e+00> : vector<2x128xf32>
    %498 = tpu.matmul %497, %7, %cst_139 {dimension_numbers = #tpu.dot_dimension_numbers<[1], [0], [0], [1], [0, 0, 1, 1], [], []>} : vector<2x32xbf16>, vector<32x128xbf16>, vector<2x128xf32> -> vector<2x128xf32>
    %499 = arith.addf %496, %498 : vector<2x128xf32>
    %500 = vector.broadcast %8 : vector<1x128xf32> to vector<2x128xf32>
    %501 = arith.addf %499, %500 : vector<2x128xf32>
    %502 = arith.negf %501 : vector<2x128xf32>
    %503 = math.exp %502 : vector<2x128xf32>
    %cst_140 = arith.constant 1.000000e+00 : f32
    %504 = vector.broadcast %cst_140 : f32 to vector<2x128xf32>
    %505 = arith.addf %504, %503 : vector<2x128xf32>
    %506 = arith.divf %504, %505 : vector<2x128xf32>
    %507 = math.tanh %501 : vector<2x128xf32>
    %508 = vector.extract_strided_slice %506 {offsets = [0, 0], sizes = [2, 32], strides = [1, 1]} : vector<2x128xf32> to vector<2x32xf32>
    %509 = vector.extract_strided_slice %506 {offsets = [0, 32], sizes = [2, 32], strides = [1, 1]} : vector<2x128xf32> to vector<2x32xf32>
    %510 = vector.extract_strided_slice %506 {offsets = [0, 96], sizes = [2, 32], strides = [1, 1]} : vector<2x128xf32> to vector<2x32xf32>
    %511 = vector.extract_strided_slice %507 {offsets = [0, 64], sizes = [2, 32], strides = [1, 1]} : vector<2x128xf32> to vector<2x32xf32>
    %512 = arith.mulf %509, %419 : vector<2x32xf32>
    %513 = arith.mulf %508, %511 : vector<2x32xf32>
    %514 = arith.addf %512, %513 : vector<2x32xf32>
    %515 = math.tanh %514 : vector<2x32xf32>
    %516 = arith.mulf %510, %515 : vector<2x32xf32>
    %517 = vector.shape_cast %516 : vector<2x32xf32> to vector<2x1x32xf32>
    %518 = vector.broadcast %517 : vector<2x1x32xf32> to vector<2x8x32xf32>
    %519 = arith.mulf %518, %210 : vector<2x8x32xf32>
    %cst_141 = arith.constant dense<0.000000e+00> : vector<2x8xf32>
    %520 = vector.multi_reduction <add>, %519, %cst_141 [2] : vector<2x8x32xf32> to vector<2x8xf32>
    %cst_142 = arith.constant 0.000000e+00 : f32
    %521 = vector.broadcast %cst_142 : f32 to vector<2x8xf32>
    %522 = arith.cmpf ogt, %484, %521 : vector<2x8xf32>
    %cst_143 = arith.constant -1.000000e+09 : f32
    %523 = vector.broadcast %cst_143 : f32 to vector<2x8xf32>
    %524 = arith.select %522, %523, %520 : vector<2x8xi1>, vector<2x8xf32>
    %cst_144 = arith.constant dense<0xFF800000> : vector<2xf32>
    %525 = vector.multi_reduction <maximumf>, %524, %cst_144 [1] : vector<2x8xf32> to vector<2xf32>
    %526 = vector.shape_cast %525 : vector<2xf32> to vector<2x1xf32>
    %527 = vector.broadcast %526 : vector<2x1xf32> to vector<2x8xf32>
    %528 = arith.subf %524, %527 : vector<2x8xf32>
    %529 = math.exp %528 : vector<2x8xf32>
    %cst_145 = arith.constant dense<0.000000e+00> : vector<2xf32>
    %530 = vector.multi_reduction <add>, %529, %cst_145 [1] : vector<2x8xf32> to vector<2xf32>
    %531 = vector.shape_cast %530 : vector<2xf32> to vector<2x1xf32>
    %532 = vector.broadcast %531 : vector<2x1xf32> to vector<2x8xf32>
    %533 = arith.divf %529, %532 : vector<2x8xf32>
    %534 = vector.shape_cast %533 : vector<2x8xf32> to vector<2x8x1xf32>
    %535 = vector.broadcast %534 : vector<2x8x1xf32> to vector<2x8x32xf32>
    %536 = arith.mulf %535, %210 : vector<2x8x32xf32>
    %cst_146 = arith.constant dense<0.000000e+00> : vector<2x32xf32>
    %537 = vector.multi_reduction <add>, %536, %cst_146 [1] : vector<2x8x32xf32> to vector<2x32xf32>
    %538 = vector.shape_cast %537 : vector<2x32xf32> to vector<2x1x32xf32>
    %539 = vector.broadcast %538 : vector<2x1x32xf32> to vector<2x8x32xf32>
    %540 = arith.mulf %539, %210 : vector<2x8x32xf32>
    %cst_147 = arith.constant dense<0.000000e+00> : vector<2x8xf32>
    %541 = vector.multi_reduction <add>, %540, %cst_147 [2] : vector<2x8x32xf32> to vector<2x8xf32>
    %542 = math.tanh %541 : vector<2x8xf32>
    %cst_148 = arith.constant 1.000000e+01 : f32
    %543 = vector.broadcast %cst_148 : f32 to vector<2x8xf32>
    %544 = arith.mulf %543, %542 : vector<2x8xf32>
    %cst_149 = arith.constant 0.000000e+00 : f32
    %545 = vector.broadcast %cst_149 : f32 to vector<2x8xf32>
    %546 = arith.cmpf ogt, %484, %545 : vector<2x8xf32>
    %cst_150 = arith.constant -1.000000e+09 : f32
    %547 = vector.broadcast %cst_150 : f32 to vector<2x8xf32>
    %548 = arith.select %546, %547, %544 : vector<2x8xi1>, vector<2x8xf32>
    %cst_151 = arith.constant dense<0xFF800000> : vector<2xf32>
    %549 = vector.multi_reduction <maximumf>, %548, %cst_151 [1] : vector<2x8xf32> to vector<2xf32>
    %550 = vector.shape_cast %549 : vector<2xf32> to vector<2x1xf32>
    %551 = vector.broadcast %550 : vector<2x1xf32> to vector<2x8xf32>
    %552 = arith.subf %548, %551 : vector<2x8xf32>
    %553 = math.exp %552 : vector<2x8xf32>
    %cst_152 = arith.constant dense<0.000000e+00> : vector<2xf32>
    %554 = vector.multi_reduction <add>, %553, %cst_152 [1] : vector<2x8xf32> to vector<2xf32>
    %555 = vector.shape_cast %554 : vector<2xf32> to vector<2x1xf32>
    %556 = vector.broadcast %555 : vector<2x1xf32> to vector<2x8xf32>
    %557 = arith.divf %553, %556 : vector<2x8xf32>
    %558 = vector.broadcast %550 : vector<2x1xf32> to vector<2x8xf32>
    %559 = arith.cmpf oge, %548, %558 : vector<2x8xf32>
    %c8_i32_153 = arith.constant 8 : i32
    %560 = vector.broadcast %c8_i32_153 : i32 to vector<2x8xi32>
    %561 = arith.select %559, %214, %560 : vector<2x8xi1>, vector<2x8xi32>
    %cst_154 = arith.constant dense<2147483647> : vector<2xi32>
    %562 = vector.multi_reduction <minsi>, %561, %cst_154 [1] : vector<2x8xi32> to vector<2xi32>
    %563 = vector.shape_cast %562 : vector<2xi32> to vector<2x1xi32>
    %564 = vector.broadcast %563 : vector<2x1xi32> to vector<2x8xi32>
    %565 = arith.cmpi eq, %214, %564 : vector<2x8xi32>
    %566 = arith.extui %565 : vector<2x8xi1> to vector<2x8xi32>
    %567 = arith.sitofp %566 : vector<2x8xi32> to vector<2x8xf32>
    %568 = arith.mulf %557, %567 : vector<2x8xf32>
    %cst_155 = arith.constant dense<0.000000e+00> : vector<2xf32>
    %569 = vector.multi_reduction <add>, %568, %cst_155 [1] : vector<2x8xf32> to vector<2xf32>
    %570 = vector.shape_cast %569 : vector<2xf32> to vector<2x1xf32>
    %571 = vector.shape_cast %567 : vector<2x8xf32> to vector<2x8x1xf32>
    %572 = vector.broadcast %571 : vector<2x8x1xf32> to vector<2x8x2xf32>
    %573 = arith.mulf %572, %0 : vector<2x8x2xf32>
    %cst_156 = arith.constant dense<0.000000e+00> : vector<2x2xf32>
    %574 = vector.multi_reduction <add>, %573, %cst_156 [1] : vector<2x8x2xf32> to vector<2x2xf32>
    %575 = vector.shape_cast %567 : vector<2x8xf32> to vector<2x8x1xf32>
    %576 = vector.broadcast %575 : vector<2x8x1xf32> to vector<2x8x16xf32>
    %577 = arith.mulf %576, %1 : vector<2x8x16xf32>
    %cst_157 = arith.constant dense<0.000000e+00> : vector<2x16xf32>
    %578 = vector.multi_reduction <add>, %577, %cst_157 [1] : vector<2x8x16xf32> to vector<2x16xf32>
    %579 = arith.addf %484, %567 : vector<2x8xf32>
    %580 = arith.subf %574, %479 : vector<2x2xf32>
    %581 = arith.mulf %580, %580 : vector<2x2xf32>
    %cst_158 = arith.constant dense<0.000000e+00> : vector<2xf32>
    %582 = vector.multi_reduction <add>, %581, %cst_158 [1] : vector<2x2xf32> to vector<2xf32>
    %583 = vector.shape_cast %582 : vector<2xf32> to vector<2x1xf32>
    %584 = math.sqrt %583 : vector<2x1xf32>
    %585 = arith.addf %490, %584 : vector<2x1xf32>
    %c0_159 = arith.constant 0 : index
    %c3_160 = arith.constant 3 : index
    %586 = vector.load %arg11[%c0_159, %c3_160] : memref<2x128xf32, #tpu.memory_space<vmem>>, vector<2x1xf32>
    tpu.vector_store %arg11[%c0_159, %c3_160], %570 {strides = array<i32>} : memref<2x128xf32, #tpu.memory_space<vmem>>, vector<2x1xf32>,
    %587 = arith.sitofp %563 : vector<2x1xi32> to vector<2x1xf32>
    %c0_161 = arith.constant 0 : index
    %c11 = arith.constant 11 : index
    %588 = vector.load %arg11[%c0_161, %c11] : memref<2x128xf32, #tpu.memory_space<vmem>>, vector<2x1xf32>
    tpu.vector_store %arg11[%c0_161, %c11], %587 {strides = array<i32>} : memref<2x128xf32, #tpu.memory_space<vmem>>, vector<2x1xf32>,
    %c0_162 = arith.constant 0 : index
    %c22 = arith.constant 22 : index
    %589 = vector.load %arg11[%c0_162, %c22] : memref<2x128xf32, #tpu.memory_space<vmem>>, vector<2x2xf32>
    tpu.vector_store %arg11[%c0_162, %c22], %574 {strides = array<i32>} : memref<2x128xf32, #tpu.memory_space<vmem>>, vector<2x2xf32>,
    %590 = arith.truncf %578 : vector<2x16xf32> to vector<2x16xbf16>
    %cst_163 = arith.constant dense<0.000000e+00> : vector<2x128xf32>
    %591 = tpu.matmul %590, %6, %cst_163 {dimension_numbers = #tpu.dot_dimension_numbers<[1], [0], [0], [1], [0, 0, 1, 1], [], []>} : vector<2x16xbf16>, vector<16x128xbf16>, vector<2x128xf32> -> vector<2x128xf32>
    %592 = arith.truncf %516 : vector<2x32xf32> to vector<2x32xbf16>
    %cst_164 = arith.constant dense<0.000000e+00> : vector<2x128xf32>
    %593 = tpu.matmul %592, %7, %cst_164 {dimension_numbers = #tpu.dot_dimension_numbers<[1], [0], [0], [1], [0, 0, 1, 1], [], []>} : vector<2x32xbf16>, vector<32x128xbf16>, vector<2x128xf32> -> vector<2x128xf32>
    %594 = arith.addf %591, %593 : vector<2x128xf32>
    %595 = vector.broadcast %8 : vector<1x128xf32> to vector<2x128xf32>
    %596 = arith.addf %594, %595 : vector<2x128xf32>
    %597 = arith.negf %596 : vector<2x128xf32>
    %598 = math.exp %597 : vector<2x128xf32>
    %cst_165 = arith.constant 1.000000e+00 : f32
    %599 = vector.broadcast %cst_165 : f32 to vector<2x128xf32>
    %600 = arith.addf %599, %598 : vector<2x128xf32>
    %601 = arith.divf %599, %600 : vector<2x128xf32>
    %602 = math.tanh %596 : vector<2x128xf32>
    %603 = vector.extract_strided_slice %601 {offsets = [0, 0], sizes = [2, 32], strides = [1, 1]} : vector<2x128xf32> to vector<2x32xf32>
    %604 = vector.extract_strided_slice %601 {offsets = [0, 32], sizes = [2, 32], strides = [1, 1]} : vector<2x128xf32> to vector<2x32xf32>
    %605 = vector.extract_strided_slice %601 {offsets = [0, 96], sizes = [2, 32], strides = [1, 1]} : vector<2x128xf32> to vector<2x32xf32>
    %606 = vector.extract_strided_slice %602 {offsets = [0, 64], sizes = [2, 32], strides = [1, 1]} : vector<2x128xf32> to vector<2x32xf32>
    %607 = arith.mulf %604, %514 : vector<2x32xf32>
    %608 = arith.mulf %603, %606 : vector<2x32xf32>
    %609 = arith.addf %607, %608 : vector<2x32xf32>
    %610 = math.tanh %609 : vector<2x32xf32>
    %611 = arith.mulf %605, %610 : vector<2x32xf32>
    %612 = vector.shape_cast %611 : vector<2x32xf32> to vector<2x1x32xf32>
    %613 = vector.broadcast %612 : vector<2x1x32xf32> to vector<2x8x32xf32>
    %614 = arith.mulf %613, %210 : vector<2x8x32xf32>
    %cst_166 = arith.constant dense<0.000000e+00> : vector<2x8xf32>
    %615 = vector.multi_reduction <add>, %614, %cst_166 [2] : vector<2x8x32xf32> to vector<2x8xf32>
    %cst_167 = arith.constant 0.000000e+00 : f32
    %616 = vector.broadcast %cst_167 : f32 to vector<2x8xf32>
    %617 = arith.cmpf ogt, %579, %616 : vector<2x8xf32>
    %cst_168 = arith.constant -1.000000e+09 : f32
    %618 = vector.broadcast %cst_168 : f32 to vector<2x8xf32>
    %619 = arith.select %617, %618, %615 : vector<2x8xi1>, vector<2x8xf32>
    %cst_169 = arith.constant dense<0xFF800000> : vector<2xf32>
    %620 = vector.multi_reduction <maximumf>, %619, %cst_169 [1] : vector<2x8xf32> to vector<2xf32>
    %621 = vector.shape_cast %620 : vector<2xf32> to vector<2x1xf32>
    %622 = vector.broadcast %621 : vector<2x1xf32> to vector<2x8xf32>
    %623 = arith.subf %619, %622 : vector<2x8xf32>
    %624 = math.exp %623 : vector<2x8xf32>
    %cst_170 = arith.constant dense<0.000000e+00> : vector<2xf32>
    %625 = vector.multi_reduction <add>, %624, %cst_170 [1] : vector<2x8xf32> to vector<2xf32>
    %626 = vector.shape_cast %625 : vector<2xf32> to vector<2x1xf32>
    %627 = vector.broadcast %626 : vector<2x1xf32> to vector<2x8xf32>
    %628 = arith.divf %624, %627 : vector<2x8xf32>
    %629 = vector.shape_cast %628 : vector<2x8xf32> to vector<2x8x1xf32>
    %630 = vector.broadcast %629 : vector<2x8x1xf32> to vector<2x8x32xf32>
    %631 = arith.mulf %630, %210 : vector<2x8x32xf32>
    %cst_171 = arith.constant dense<0.000000e+00> : vector<2x32xf32>
    %632 = vector.multi_reduction <add>, %631, %cst_171 [1] : vector<2x8x32xf32> to vector<2x32xf32>
    %633 = vector.shape_cast %632 : vector<2x32xf32> to vector<2x1x32xf32>
    %634 = vector.broadcast %633 : vector<2x1x32xf32> to vector<2x8x32xf32>
    %635 = arith.mulf %634, %210 : vector<2x8x32xf32>
    %cst_172 = arith.constant dense<0.000000e+00> : vector<2x8xf32>
    %636 = vector.multi_reduction <add>, %635, %cst_172 [2] : vector<2x8x32xf32> to vector<2x8xf32>
    %637 = math.tanh %636 : vector<2x8xf32>
    %cst_173 = arith.constant 1.000000e+01 : f32
    %638 = vector.broadcast %cst_173 : f32 to vector<2x8xf32>
    %639 = arith.mulf %638, %637 : vector<2x8xf32>
    %cst_174 = arith.constant 0.000000e+00 : f32
    %640 = vector.broadcast %cst_174 : f32 to vector<2x8xf32>
    %641 = arith.cmpf ogt, %579, %640 : vector<2x8xf32>
    %cst_175 = arith.constant -1.000000e+09 : f32
    %642 = vector.broadcast %cst_175 : f32 to vector<2x8xf32>
    %643 = arith.select %641, %642, %639 : vector<2x8xi1>, vector<2x8xf32>
    %cst_176 = arith.constant dense<0xFF800000> : vector<2xf32>
    %644 = vector.multi_reduction <maximumf>, %643, %cst_176 [1] : vector<2x8xf32> to vector<2xf32>
    %645 = vector.shape_cast %644 : vector<2xf32> to vector<2x1xf32>
    %646 = vector.broadcast %645 : vector<2x1xf32> to vector<2x8xf32>
    %647 = arith.subf %643, %646 : vector<2x8xf32>
    %648 = math.exp %647 : vector<2x8xf32>
    %cst_177 = arith.constant dense<0.000000e+00> : vector<2xf32>
    %649 = vector.multi_reduction <add>, %648, %cst_177 [1] : vector<2x8xf32> to vector<2xf32>
    %650 = vector.shape_cast %649 : vector<2xf32> to vector<2x1xf32>
    %651 = vector.broadcast %650 : vector<2x1xf32> to vector<2x8xf32>
    %652 = arith.divf %648, %651 : vector<2x8xf32>
    %653 = vector.broadcast %645 : vector<2x1xf32> to vector<2x8xf32>
    %654 = arith.cmpf oge, %643, %653 : vector<2x8xf32>
    %c8_i32_178 = arith.constant 8 : i32
    %655 = vector.broadcast %c8_i32_178 : i32 to vector<2x8xi32>
    %656 = arith.select %654, %214, %655 : vector<2x8xi1>, vector<2x8xi32>
    %cst_179 = arith.constant dense<2147483647> : vector<2xi32>
    %657 = vector.multi_reduction <minsi>, %656, %cst_179 [1] : vector<2x8xi32> to vector<2xi32>
    %658 = vector.shape_cast %657 : vector<2xi32> to vector<2x1xi32>
    %659 = vector.broadcast %658 : vector<2x1xi32> to vector<2x8xi32>
    %660 = arith.cmpi eq, %214, %659 : vector<2x8xi32>
    %661 = arith.extui %660 : vector<2x8xi1> to vector<2x8xi32>
    %662 = arith.sitofp %661 : vector<2x8xi32> to vector<2x8xf32>
    %663 = arith.mulf %652, %662 : vector<2x8xf32>
    %cst_180 = arith.constant dense<0.000000e+00> : vector<2xf32>
    %664 = vector.multi_reduction <add>, %663, %cst_180 [1] : vector<2x8xf32> to vector<2xf32>
    %665 = vector.shape_cast %664 : vector<2xf32> to vector<2x1xf32>
    %666 = vector.shape_cast %662 : vector<2x8xf32> to vector<2x8x1xf32>
    %667 = vector.broadcast %666 : vector<2x8x1xf32> to vector<2x8x2xf32>
    %668 = arith.mulf %667, %0 : vector<2x8x2xf32>
    %cst_181 = arith.constant dense<0.000000e+00> : vector<2x2xf32>
    %669 = vector.multi_reduction <add>, %668, %cst_181 [1] : vector<2x8x2xf32> to vector<2x2xf32>
    %670 = vector.shape_cast %662 : vector<2x8xf32> to vector<2x8x1xf32>
    %671 = vector.broadcast %670 : vector<2x8x1xf32> to vector<2x8x16xf32>
    %672 = arith.mulf %671, %1 : vector<2x8x16xf32>
    %cst_182 = arith.constant dense<0.000000e+00> : vector<2x16xf32>
    %673 = vector.multi_reduction <add>, %672, %cst_182 [1] : vector<2x8x16xf32> to vector<2x16xf32>
    %674 = arith.addf %579, %662 : vector<2x8xf32>
    %675 = arith.subf %669, %574 : vector<2x2xf32>
    %676 = arith.mulf %675, %675 : vector<2x2xf32>
    %cst_183 = arith.constant dense<0.000000e+00> : vector<2xf32>
    %677 = vector.multi_reduction <add>, %676, %cst_183 [1] : vector<2x2xf32> to vector<2xf32>
    %678 = vector.shape_cast %677 : vector<2xf32> to vector<2x1xf32>
    %679 = math.sqrt %678 : vector<2x1xf32>
    %680 = arith.addf %585, %679 : vector<2x1xf32>
    %c0_184 = arith.constant 0 : index
    %c4_185 = arith.constant 4 : index
    %681 = vector.load %arg11[%c0_184, %c4_185] : memref<2x128xf32, #tpu.memory_space<vmem>>, vector<2x1xf32>
    tpu.vector_store %arg11[%c0_184, %c4_185], %665 {strides = array<i32>} : memref<2x128xf32, #tpu.memory_space<vmem>>, vector<2x1xf32>,
    %682 = arith.sitofp %658 : vector<2x1xi32> to vector<2x1xf32>
    %c0_186 = arith.constant 0 : index
    %c12 = arith.constant 12 : index
    %683 = vector.load %arg11[%c0_186, %c12] : memref<2x128xf32, #tpu.memory_space<vmem>>, vector<2x1xf32>
    tpu.vector_store %arg11[%c0_186, %c12], %682 {strides = array<i32>} : memref<2x128xf32, #tpu.memory_space<vmem>>, vector<2x1xf32>,
    %c0_187 = arith.constant 0 : index
    %c24 = arith.constant 24 : index
    %684 = vector.load %arg11[%c0_187, %c24] : memref<2x128xf32, #tpu.memory_space<vmem>>, vector<2x2xf32>
    tpu.vector_store %arg11[%c0_187, %c24], %669 {strides = array<i32>} : memref<2x128xf32, #tpu.memory_space<vmem>>, vector<2x2xf32>,
    %685 = arith.truncf %673 : vector<2x16xf32> to vector<2x16xbf16>
    %cst_188 = arith.constant dense<0.000000e+00> : vector<2x128xf32>
    %686 = tpu.matmul %685, %6, %cst_188 {dimension_numbers = #tpu.dot_dimension_numbers<[1], [0], [0], [1], [0, 0, 1, 1], [], []>} : vector<2x16xbf16>, vector<16x128xbf16>, vector<2x128xf32> -> vector<2x128xf32>
    %687 = arith.truncf %611 : vector<2x32xf32> to vector<2x32xbf16>
    %cst_189 = arith.constant dense<0.000000e+00> : vector<2x128xf32>
    %688 = tpu.matmul %687, %7, %cst_189 {dimension_numbers = #tpu.dot_dimension_numbers<[1], [0], [0], [1], [0, 0, 1, 1], [], []>} : vector<2x32xbf16>, vector<32x128xbf16>, vector<2x128xf32> -> vector<2x128xf32>
    %689 = arith.addf %686, %688 : vector<2x128xf32>
    %690 = vector.broadcast %8 : vector<1x128xf32> to vector<2x128xf32>
    %691 = arith.addf %689, %690 : vector<2x128xf32>
    %692 = arith.negf %691 : vector<2x128xf32>
    %693 = math.exp %692 : vector<2x128xf32>
    %cst_190 = arith.constant 1.000000e+00 : f32
    %694 = vector.broadcast %cst_190 : f32 to vector<2x128xf32>
    %695 = arith.addf %694, %693 : vector<2x128xf32>
    %696 = arith.divf %694, %695 : vector<2x128xf32>
    %697 = math.tanh %691 : vector<2x128xf32>
    %698 = vector.extract_strided_slice %696 {offsets = [0, 0], sizes = [2, 32], strides = [1, 1]} : vector<2x128xf32> to vector<2x32xf32>
    %699 = vector.extract_strided_slice %696 {offsets = [0, 32], sizes = [2, 32], strides = [1, 1]} : vector<2x128xf32> to vector<2x32xf32>
    %700 = vector.extract_strided_slice %696 {offsets = [0, 96], sizes = [2, 32], strides = [1, 1]} : vector<2x128xf32> to vector<2x32xf32>
    %701 = vector.extract_strided_slice %697 {offsets = [0, 64], sizes = [2, 32], strides = [1, 1]} : vector<2x128xf32> to vector<2x32xf32>
    %702 = arith.mulf %699, %609 : vector<2x32xf32>
    %703 = arith.mulf %698, %701 : vector<2x32xf32>
    %704 = arith.addf %702, %703 : vector<2x32xf32>
    %705 = math.tanh %704 : vector<2x32xf32>
    %706 = arith.mulf %700, %705 : vector<2x32xf32>
    %707 = vector.shape_cast %706 : vector<2x32xf32> to vector<2x1x32xf32>
    %708 = vector.broadcast %707 : vector<2x1x32xf32> to vector<2x8x32xf32>
    %709 = arith.mulf %708, %210 : vector<2x8x32xf32>
    %cst_191 = arith.constant dense<0.000000e+00> : vector<2x8xf32>
    %710 = vector.multi_reduction <add>, %709, %cst_191 [2] : vector<2x8x32xf32> to vector<2x8xf32>
    %cst_192 = arith.constant 0.000000e+00 : f32
    %711 = vector.broadcast %cst_192 : f32 to vector<2x8xf32>
    %712 = arith.cmpf ogt, %674, %711 : vector<2x8xf32>
    %cst_193 = arith.constant -1.000000e+09 : f32
    %713 = vector.broadcast %cst_193 : f32 to vector<2x8xf32>
    %714 = arith.select %712, %713, %710 : vector<2x8xi1>, vector<2x8xf32>
    %cst_194 = arith.constant dense<0xFF800000> : vector<2xf32>
    %715 = vector.multi_reduction <maximumf>, %714, %cst_194 [1] : vector<2x8xf32> to vector<2xf32>
    %716 = vector.shape_cast %715 : vector<2xf32> to vector<2x1xf32>
    %717 = vector.broadcast %716 : vector<2x1xf32> to vector<2x8xf32>
    %718 = arith.subf %714, %717 : vector<2x8xf32>
    %719 = math.exp %718 : vector<2x8xf32>
    %cst_195 = arith.constant dense<0.000000e+00> : vector<2xf32>
    %720 = vector.multi_reduction <add>, %719, %cst_195 [1] : vector<2x8xf32> to vector<2xf32>
    %721 = vector.shape_cast %720 : vector<2xf32> to vector<2x1xf32>
    %722 = vector.broadcast %721 : vector<2x1xf32> to vector<2x8xf32>
    %723 = arith.divf %719, %722 : vector<2x8xf32>
    %724 = vector.shape_cast %723 : vector<2x8xf32> to vector<2x8x1xf32>
    %725 = vector.broadcast %724 : vector<2x8x1xf32> to vector<2x8x32xf32>
    %726 = arith.mulf %725, %210 : vector<2x8x32xf32>
    %cst_196 = arith.constant dense<0.000000e+00> : vector<2x32xf32>
    %727 = vector.multi_reduction <add>, %726, %cst_196 [1] : vector<2x8x32xf32> to vector<2x32xf32>
    %728 = vector.shape_cast %727 : vector<2x32xf32> to vector<2x1x32xf32>
    %729 = vector.broadcast %728 : vector<2x1x32xf32> to vector<2x8x32xf32>
    %730 = arith.mulf %729, %210 : vector<2x8x32xf32>
    %cst_197 = arith.constant dense<0.000000e+00> : vector<2x8xf32>
    %731 = vector.multi_reduction <add>, %730, %cst_197 [2] : vector<2x8x32xf32> to vector<2x8xf32>
    %732 = math.tanh %731 : vector<2x8xf32>
    %cst_198 = arith.constant 1.000000e+01 : f32
    %733 = vector.broadcast %cst_198 : f32 to vector<2x8xf32>
    %734 = arith.mulf %733, %732 : vector<2x8xf32>
    %cst_199 = arith.constant 0.000000e+00 : f32
    %735 = vector.broadcast %cst_199 : f32 to vector<2x8xf32>
    %736 = arith.cmpf ogt, %674, %735 : vector<2x8xf32>
    %cst_200 = arith.constant -1.000000e+09 : f32
    %737 = vector.broadcast %cst_200 : f32 to vector<2x8xf32>
    %738 = arith.select %736, %737, %734 : vector<2x8xi1>, vector<2x8xf32>
    %cst_201 = arith.constant dense<0xFF800000> : vector<2xf32>
    %739 = vector.multi_reduction <maximumf>, %738, %cst_201 [1] : vector<2x8xf32> to vector<2xf32>
    %740 = vector.shape_cast %739 : vector<2xf32> to vector<2x1xf32>
    %741 = vector.broadcast %740 : vector<2x1xf32> to vector<2x8xf32>
    %742 = arith.subf %738, %741 : vector<2x8xf32>
    %743 = math.exp %742 : vector<2x8xf32>
    %cst_202 = arith.constant dense<0.000000e+00> : vector<2xf32>
    %744 = vector.multi_reduction <add>, %743, %cst_202 [1] : vector<2x8xf32> to vector<2xf32>
    %745 = vector.shape_cast %744 : vector<2xf32> to vector<2x1xf32>
    %746 = vector.broadcast %745 : vector<2x1xf32> to vector<2x8xf32>
    %747 = arith.divf %743, %746 : vector<2x8xf32>
    %748 = vector.broadcast %740 : vector<2x1xf32> to vector<2x8xf32>
    %749 = arith.cmpf oge, %738, %748 : vector<2x8xf32>
    %c8_i32_203 = arith.constant 8 : i32
    %750 = vector.broadcast %c8_i32_203 : i32 to vector<2x8xi32>
    %751 = arith.select %749, %214, %750 : vector<2x8xi1>, vector<2x8xi32>
    %cst_204 = arith.constant dense<2147483647> : vector<2xi32>
    %752 = vector.multi_reduction <minsi>, %751, %cst_204 [1] : vector<2x8xi32> to vector<2xi32>
    %753 = vector.shape_cast %752 : vector<2xi32> to vector<2x1xi32>
    %754 = vector.broadcast %753 : vector<2x1xi32> to vector<2x8xi32>
    %755 = arith.cmpi eq, %214, %754 : vector<2x8xi32>
    %756 = arith.extui %755 : vector<2x8xi1> to vector<2x8xi32>
    %757 = arith.sitofp %756 : vector<2x8xi32> to vector<2x8xf32>
    %758 = arith.mulf %747, %757 : vector<2x8xf32>
    %cst_205 = arith.constant dense<0.000000e+00> : vector<2xf32>
    %759 = vector.multi_reduction <add>, %758, %cst_205 [1] : vector<2x8xf32> to vector<2xf32>
    %760 = vector.shape_cast %759 : vector<2xf32> to vector<2x1xf32>
    %761 = vector.shape_cast %757 : vector<2x8xf32> to vector<2x8x1xf32>
    %762 = vector.broadcast %761 : vector<2x8x1xf32> to vector<2x8x2xf32>
    %763 = arith.mulf %762, %0 : vector<2x8x2xf32>
    %cst_206 = arith.constant dense<0.000000e+00> : vector<2x2xf32>
    %764 = vector.multi_reduction <add>, %763, %cst_206 [1] : vector<2x8x2xf32> to vector<2x2xf32>
    %765 = vector.shape_cast %757 : vector<2x8xf32> to vector<2x8x1xf32>
    %766 = vector.broadcast %765 : vector<2x8x1xf32> to vector<2x8x16xf32>
    %767 = arith.mulf %766, %1 : vector<2x8x16xf32>
    %cst_207 = arith.constant dense<0.000000e+00> : vector<2x16xf32>
    %768 = vector.multi_reduction <add>, %767, %cst_207 [1] : vector<2x8x16xf32> to vector<2x16xf32>
    %769 = arith.addf %674, %757 : vector<2x8xf32>
    %770 = arith.subf %764, %669 : vector<2x2xf32>
    %771 = arith.mulf %770, %770 : vector<2x2xf32>
    %cst_208 = arith.constant dense<0.000000e+00> : vector<2xf32>
    %772 = vector.multi_reduction <add>, %771, %cst_208 [1] : vector<2x2xf32> to vector<2xf32>
    %773 = vector.shape_cast %772 : vector<2xf32> to vector<2x1xf32>
    %774 = math.sqrt %773 : vector<2x1xf32>
    %775 = arith.addf %680, %774 : vector<2x1xf32>
    %c0_209 = arith.constant 0 : index
    %c5_210 = arith.constant 5 : index
    %776 = vector.load %arg11[%c0_209, %c5_210] : memref<2x128xf32, #tpu.memory_space<vmem>>, vector<2x1xf32>
    tpu.vector_store %arg11[%c0_209, %c5_210], %760 {strides = array<i32>} : memref<2x128xf32, #tpu.memory_space<vmem>>, vector<2x1xf32>,
    %777 = arith.sitofp %753 : vector<2x1xi32> to vector<2x1xf32>
    %c0_211 = arith.constant 0 : index
    %c13 = arith.constant 13 : index
    %778 = vector.load %arg11[%c0_211, %c13] : memref<2x128xf32, #tpu.memory_space<vmem>>, vector<2x1xf32>
    tpu.vector_store %arg11[%c0_211, %c13], %777 {strides = array<i32>} : memref<2x128xf32, #tpu.memory_space<vmem>>, vector<2x1xf32>,
    %c0_212 = arith.constant 0 : index
    %c26 = arith.constant 26 : index
    %779 = vector.load %arg11[%c0_212, %c26] : memref<2x128xf32, #tpu.memory_space<vmem>>, vector<2x2xf32>
    tpu.vector_store %arg11[%c0_212, %c26], %764 {strides = array<i32>} : memref<2x128xf32, #tpu.memory_space<vmem>>, vector<2x2xf32>,
    %780 = arith.truncf %768 : vector<2x16xf32> to vector<2x16xbf16>
    %cst_213 = arith.constant dense<0.000000e+00> : vector<2x128xf32>
    %781 = tpu.matmul %780, %6, %cst_213 {dimension_numbers = #tpu.dot_dimension_numbers<[1], [0], [0], [1], [0, 0, 1, 1], [], []>} : vector<2x16xbf16>, vector<16x128xbf16>, vector<2x128xf32> -> vector<2x128xf32>
    %782 = arith.truncf %706 : vector<2x32xf32> to vector<2x32xbf16>
    %cst_214 = arith.constant dense<0.000000e+00> : vector<2x128xf32>
    %783 = tpu.matmul %782, %7, %cst_214 {dimension_numbers = #tpu.dot_dimension_numbers<[1], [0], [0], [1], [0, 0, 1, 1], [], []>} : vector<2x32xbf16>, vector<32x128xbf16>, vector<2x128xf32> -> vector<2x128xf32>
    %784 = arith.addf %781, %783 : vector<2x128xf32>
    %785 = vector.broadcast %8 : vector<1x128xf32> to vector<2x128xf32>
    %786 = arith.addf %784, %785 : vector<2x128xf32>
    %787 = arith.negf %786 : vector<2x128xf32>
    %788 = math.exp %787 : vector<2x128xf32>
    %cst_215 = arith.constant 1.000000e+00 : f32
    %789 = vector.broadcast %cst_215 : f32 to vector<2x128xf32>
    %790 = arith.addf %789, %788 : vector<2x128xf32>
    %791 = arith.divf %789, %790 : vector<2x128xf32>
    %792 = math.tanh %786 : vector<2x128xf32>
    %793 = vector.extract_strided_slice %791 {offsets = [0, 0], sizes = [2, 32], strides = [1, 1]} : vector<2x128xf32> to vector<2x32xf32>
    %794 = vector.extract_strided_slice %791 {offsets = [0, 32], sizes = [2, 32], strides = [1, 1]} : vector<2x128xf32> to vector<2x32xf32>
    %795 = vector.extract_strided_slice %791 {offsets = [0, 96], sizes = [2, 32], strides = [1, 1]} : vector<2x128xf32> to vector<2x32xf32>
    %796 = vector.extract_strided_slice %792 {offsets = [0, 64], sizes = [2, 32], strides = [1, 1]} : vector<2x128xf32> to vector<2x32xf32>
    %797 = arith.mulf %794, %704 : vector<2x32xf32>
    %798 = arith.mulf %793, %796 : vector<2x32xf32>
    %799 = arith.addf %797, %798 : vector<2x32xf32>
    %800 = math.tanh %799 : vector<2x32xf32>
    %801 = arith.mulf %795, %800 : vector<2x32xf32>
    %802 = vector.shape_cast %801 : vector<2x32xf32> to vector<2x1x32xf32>
    %803 = vector.broadcast %802 : vector<2x1x32xf32> to vector<2x8x32xf32>
    %804 = arith.mulf %803, %210 : vector<2x8x32xf32>
    %cst_216 = arith.constant dense<0.000000e+00> : vector<2x8xf32>
    %805 = vector.multi_reduction <add>, %804, %cst_216 [2] : vector<2x8x32xf32> to vector<2x8xf32>
    %cst_217 = arith.constant 0.000000e+00 : f32
    %806 = vector.broadcast %cst_217 : f32 to vector<2x8xf32>
    %807 = arith.cmpf ogt, %769, %806 : vector<2x8xf32>
    %cst_218 = arith.constant -1.000000e+09 : f32
    %808 = vector.broadcast %cst_218 : f32 to vector<2x8xf32>
    %809 = arith.select %807, %808, %805 : vector<2x8xi1>, vector<2x8xf32>
    %cst_219 = arith.constant dense<0xFF800000> : vector<2xf32>
    %810 = vector.multi_reduction <maximumf>, %809, %cst_219 [1] : vector<2x8xf32> to vector<2xf32>
    %811 = vector.shape_cast %810 : vector<2xf32> to vector<2x1xf32>
    %812 = vector.broadcast %811 : vector<2x1xf32> to vector<2x8xf32>
    %813 = arith.subf %809, %812 : vector<2x8xf32>
    %814 = math.exp %813 : vector<2x8xf32>
    %cst_220 = arith.constant dense<0.000000e+00> : vector<2xf32>
    %815 = vector.multi_reduction <add>, %814, %cst_220 [1] : vector<2x8xf32> to vector<2xf32>
    %816 = vector.shape_cast %815 : vector<2xf32> to vector<2x1xf32>
    %817 = vector.broadcast %816 : vector<2x1xf32> to vector<2x8xf32>
    %818 = arith.divf %814, %817 : vector<2x8xf32>
    %819 = vector.shape_cast %818 : vector<2x8xf32> to vector<2x8x1xf32>
    %820 = vector.broadcast %819 : vector<2x8x1xf32> to vector<2x8x32xf32>
    %821 = arith.mulf %820, %210 : vector<2x8x32xf32>
    %cst_221 = arith.constant dense<0.000000e+00> : vector<2x32xf32>
    %822 = vector.multi_reduction <add>, %821, %cst_221 [1] : vector<2x8x32xf32> to vector<2x32xf32>
    %823 = vector.shape_cast %822 : vector<2x32xf32> to vector<2x1x32xf32>
    %824 = vector.broadcast %823 : vector<2x1x32xf32> to vector<2x8x32xf32>
    %825 = arith.mulf %824, %210 : vector<2x8x32xf32>
    %cst_222 = arith.constant dense<0.000000e+00> : vector<2x8xf32>
    %826 = vector.multi_reduction <add>, %825, %cst_222 [2] : vector<2x8x32xf32> to vector<2x8xf32>
    %827 = math.tanh %826 : vector<2x8xf32>
    %cst_223 = arith.constant 1.000000e+01 : f32
    %828 = vector.broadcast %cst_223 : f32 to vector<2x8xf32>
    %829 = arith.mulf %828, %827 : vector<2x8xf32>
    %cst_224 = arith.constant 0.000000e+00 : f32
    %830 = vector.broadcast %cst_224 : f32 to vector<2x8xf32>
    %831 = arith.cmpf ogt, %769, %830 : vector<2x8xf32>
    %cst_225 = arith.constant -1.000000e+09 : f32
    %832 = vector.broadcast %cst_225 : f32 to vector<2x8xf32>
    %833 = arith.select %831, %832, %829 : vector<2x8xi1>, vector<2x8xf32>
    %cst_226 = arith.constant dense<0xFF800000> : vector<2xf32>
    %834 = vector.multi_reduction <maximumf>, %833, %cst_226 [1] : vector<2x8xf32> to vector<2xf32>
    %835 = vector.shape_cast %834 : vector<2xf32> to vector<2x1xf32>
    %836 = vector.broadcast %835 : vector<2x1xf32> to vector<2x8xf32>
    %837 = arith.subf %833, %836 : vector<2x8xf32>
    %838 = math.exp %837 : vector<2x8xf32>
    %cst_227 = arith.constant dense<0.000000e+00> : vector<2xf32>
    %839 = vector.multi_reduction <add>, %838, %cst_227 [1] : vector<2x8xf32> to vector<2xf32>
    %840 = vector.shape_cast %839 : vector<2xf32> to vector<2x1xf32>
    %841 = vector.broadcast %840 : vector<2x1xf32> to vector<2x8xf32>
    %842 = arith.divf %838, %841 : vector<2x8xf32>
    %843 = vector.broadcast %835 : vector<2x1xf32> to vector<2x8xf32>
    %844 = arith.cmpf oge, %833, %843 : vector<2x8xf32>
    %c8_i32_228 = arith.constant 8 : i32
    %845 = vector.broadcast %c8_i32_228 : i32 to vector<2x8xi32>
    %846 = arith.select %844, %214, %845 : vector<2x8xi1>, vector<2x8xi32>
    %cst_229 = arith.constant dense<2147483647> : vector<2xi32>
    %847 = vector.multi_reduction <minsi>, %846, %cst_229 [1] : vector<2x8xi32> to vector<2xi32>
    %848 = vector.shape_cast %847 : vector<2xi32> to vector<2x1xi32>
    %849 = vector.broadcast %848 : vector<2x1xi32> to vector<2x8xi32>
    %850 = arith.cmpi eq, %214, %849 : vector<2x8xi32>
    %851 = arith.extui %850 : vector<2x8xi1> to vector<2x8xi32>
    %852 = arith.sitofp %851 : vector<2x8xi32> to vector<2x8xf32>
    %853 = arith.mulf %842, %852 : vector<2x8xf32>
    %cst_230 = arith.constant dense<0.000000e+00> : vector<2xf32>
    %854 = vector.multi_reduction <add>, %853, %cst_230 [1] : vector<2x8xf32> to vector<2xf32>
    %855 = vector.shape_cast %854 : vector<2xf32> to vector<2x1xf32>
    %856 = vector.shape_cast %852 : vector<2x8xf32> to vector<2x8x1xf32>
    %857 = vector.broadcast %856 : vector<2x8x1xf32> to vector<2x8x2xf32>
    %858 = arith.mulf %857, %0 : vector<2x8x2xf32>
    %cst_231 = arith.constant dense<0.000000e+00> : vector<2x2xf32>
    %859 = vector.multi_reduction <add>, %858, %cst_231 [1] : vector<2x8x2xf32> to vector<2x2xf32>
    %860 = vector.shape_cast %852 : vector<2x8xf32> to vector<2x8x1xf32>
    %861 = vector.broadcast %860 : vector<2x8x1xf32> to vector<2x8x16xf32>
    %862 = arith.mulf %861, %1 : vector<2x8x16xf32>
    %cst_232 = arith.constant dense<0.000000e+00> : vector<2x16xf32>
    %863 = vector.multi_reduction <add>, %862, %cst_232 [1] : vector<2x8x16xf32> to vector<2x16xf32>
    %864 = arith.addf %769, %852 : vector<2x8xf32>
    %865 = arith.subf %859, %764 : vector<2x2xf32>
    %866 = arith.mulf %865, %865 : vector<2x2xf32>
    %cst_233 = arith.constant dense<0.000000e+00> : vector<2xf32>
    %867 = vector.multi_reduction <add>, %866, %cst_233 [1] : vector<2x2xf32> to vector<2xf32>
    %868 = vector.shape_cast %867 : vector<2xf32> to vector<2x1xf32>
    %869 = math.sqrt %868 : vector<2x1xf32>
    %870 = arith.addf %775, %869 : vector<2x1xf32>
    %c0_234 = arith.constant 0 : index
    %c6_235 = arith.constant 6 : index
    %871 = vector.load %arg11[%c0_234, %c6_235] : memref<2x128xf32, #tpu.memory_space<vmem>>, vector<2x1xf32>
    tpu.vector_store %arg11[%c0_234, %c6_235], %855 {strides = array<i32>} : memref<2x128xf32, #tpu.memory_space<vmem>>, vector<2x1xf32>,
    %872 = arith.sitofp %848 : vector<2x1xi32> to vector<2x1xf32>
    %c0_236 = arith.constant 0 : index
    %c14 = arith.constant 14 : index
    %873 = vector.load %arg11[%c0_236, %c14] : memref<2x128xf32, #tpu.memory_space<vmem>>, vector<2x1xf32>
    tpu.vector_store %arg11[%c0_236, %c14], %872 {strides = array<i32>} : memref<2x128xf32, #tpu.memory_space<vmem>>, vector<2x1xf32>,
    %c0_237 = arith.constant 0 : index
    %c28 = arith.constant 28 : index
    %874 = vector.load %arg11[%c0_237, %c28] : memref<2x128xf32, #tpu.memory_space<vmem>>, vector<2x2xf32>
    tpu.vector_store %arg11[%c0_237, %c28], %859 {strides = array<i32>} : memref<2x128xf32, #tpu.memory_space<vmem>>, vector<2x2xf32>,
    %875 = arith.truncf %863 : vector<2x16xf32> to vector<2x16xbf16>
    %cst_238 = arith.constant dense<0.000000e+00> : vector<2x128xf32>
    %876 = tpu.matmul %875, %6, %cst_238 {dimension_numbers = #tpu.dot_dimension_numbers<[1], [0], [0], [1], [0, 0, 1, 1], [], []>} : vector<2x16xbf16>, vector<16x128xbf16>, vector<2x128xf32> -> vector<2x128xf32>
    %877 = arith.truncf %801 : vector<2x32xf32> to vector<2x32xbf16>
    %cst_239 = arith.constant dense<0.000000e+00> : vector<2x128xf32>
    %878 = tpu.matmul %877, %7, %cst_239 {dimension_numbers = #tpu.dot_dimension_numbers<[1], [0], [0], [1], [0, 0, 1, 1], [], []>} : vector<2x32xbf16>, vector<32x128xbf16>, vector<2x128xf32> -> vector<2x128xf32>
    %879 = arith.addf %876, %878 : vector<2x128xf32>
    %880 = vector.broadcast %8 : vector<1x128xf32> to vector<2x128xf32>
    %881 = arith.addf %879, %880 : vector<2x128xf32>
    %882 = arith.negf %881 : vector<2x128xf32>
    %883 = math.exp %882 : vector<2x128xf32>
    %cst_240 = arith.constant 1.000000e+00 : f32
    %884 = vector.broadcast %cst_240 : f32 to vector<2x128xf32>
    %885 = arith.addf %884, %883 : vector<2x128xf32>
    %886 = arith.divf %884, %885 : vector<2x128xf32>
    %887 = math.tanh %881 : vector<2x128xf32>
    %888 = vector.extract_strided_slice %886 {offsets = [0, 0], sizes = [2, 32], strides = [1, 1]} : vector<2x128xf32> to vector<2x32xf32>
    %889 = vector.extract_strided_slice %886 {offsets = [0, 32], sizes = [2, 32], strides = [1, 1]} : vector<2x128xf32> to vector<2x32xf32>
    %890 = vector.extract_strided_slice %886 {offsets = [0, 96], sizes = [2, 32], strides = [1, 1]} : vector<2x128xf32> to vector<2x32xf32>
    %891 = vector.extract_strided_slice %887 {offsets = [0, 64], sizes = [2, 32], strides = [1, 1]} : vector<2x128xf32> to vector<2x32xf32>
    %892 = arith.mulf %889, %799 : vector<2x32xf32>
    %893 = arith.mulf %888, %891 : vector<2x32xf32>
    %894 = arith.addf %892, %893 : vector<2x32xf32>
    %895 = math.tanh %894 : vector<2x32xf32>
    %896 = arith.mulf %890, %895 : vector<2x32xf32>
    %897 = vector.shape_cast %896 : vector<2x32xf32> to vector<2x1x32xf32>
    %898 = vector.broadcast %897 : vector<2x1x32xf32> to vector<2x8x32xf32>
    %899 = arith.mulf %898, %210 : vector<2x8x32xf32>
    %cst_241 = arith.constant dense<0.000000e+00> : vector<2x8xf32>
    %900 = vector.multi_reduction <add>, %899, %cst_241 [2] : vector<2x8x32xf32> to vector<2x8xf32>
    %cst_242 = arith.constant 0.000000e+00 : f32
    %901 = vector.broadcast %cst_242 : f32 to vector<2x8xf32>
    %902 = arith.cmpf ogt, %864, %901 : vector<2x8xf32>
    %cst_243 = arith.constant -1.000000e+09 : f32
    %903 = vector.broadcast %cst_243 : f32 to vector<2x8xf32>
    %904 = arith.select %902, %903, %900 : vector<2x8xi1>, vector<2x8xf32>
    %cst_244 = arith.constant dense<0xFF800000> : vector<2xf32>
    %905 = vector.multi_reduction <maximumf>, %904, %cst_244 [1] : vector<2x8xf32> to vector<2xf32>
    %906 = vector.shape_cast %905 : vector<2xf32> to vector<2x1xf32>
    %907 = vector.broadcast %906 : vector<2x1xf32> to vector<2x8xf32>
    %908 = arith.subf %904, %907 : vector<2x8xf32>
    %909 = math.exp %908 : vector<2x8xf32>
    %cst_245 = arith.constant dense<0.000000e+00> : vector<2xf32>
    %910 = vector.multi_reduction <add>, %909, %cst_245 [1] : vector<2x8xf32> to vector<2xf32>
    %911 = vector.shape_cast %910 : vector<2xf32> to vector<2x1xf32>
    %912 = vector.broadcast %911 : vector<2x1xf32> to vector<2x8xf32>
    %913 = arith.divf %909, %912 : vector<2x8xf32>
    %914 = vector.shape_cast %913 : vector<2x8xf32> to vector<2x8x1xf32>
    %915 = vector.broadcast %914 : vector<2x8x1xf32> to vector<2x8x32xf32>
    %916 = arith.mulf %915, %210 : vector<2x8x32xf32>
    %cst_246 = arith.constant dense<0.000000e+00> : vector<2x32xf32>
    %917 = vector.multi_reduction <add>, %916, %cst_246 [1] : vector<2x8x32xf32> to vector<2x32xf32>
    %918 = vector.shape_cast %917 : vector<2x32xf32> to vector<2x1x32xf32>
    %919 = vector.broadcast %918 : vector<2x1x32xf32> to vector<2x8x32xf32>
    %920 = arith.mulf %919, %210 : vector<2x8x32xf32>
    %cst_247 = arith.constant dense<0.000000e+00> : vector<2x8xf32>
    %921 = vector.multi_reduction <add>, %920, %cst_247 [2] : vector<2x8x32xf32> to vector<2x8xf32>
    %922 = math.tanh %921 : vector<2x8xf32>
    %cst_248 = arith.constant 1.000000e+01 : f32
    %923 = vector.broadcast %cst_248 : f32 to vector<2x8xf32>
    %924 = arith.mulf %923, %922 : vector<2x8xf32>
    %cst_249 = arith.constant 0.000000e+00 : f32
    %925 = vector.broadcast %cst_249 : f32 to vector<2x8xf32>
    %926 = arith.cmpf ogt, %864, %925 : vector<2x8xf32>
    %cst_250 = arith.constant -1.000000e+09 : f32
    %927 = vector.broadcast %cst_250 : f32 to vector<2x8xf32>
    %928 = arith.select %926, %927, %924 : vector<2x8xi1>, vector<2x8xf32>
    %cst_251 = arith.constant dense<0xFF800000> : vector<2xf32>
    %929 = vector.multi_reduction <maximumf>, %928, %cst_251 [1] : vector<2x8xf32> to vector<2xf32>
    %930 = vector.shape_cast %929 : vector<2xf32> to vector<2x1xf32>
    %931 = vector.broadcast %930 : vector<2x1xf32> to vector<2x8xf32>
    %932 = arith.subf %928, %931 : vector<2x8xf32>
    %933 = math.exp %932 : vector<2x8xf32>
    %cst_252 = arith.constant dense<0.000000e+00> : vector<2xf32>
    %934 = vector.multi_reduction <add>, %933, %cst_252 [1] : vector<2x8xf32> to vector<2xf32>
    %935 = vector.shape_cast %934 : vector<2xf32> to vector<2x1xf32>
    %936 = vector.broadcast %935 : vector<2x1xf32> to vector<2x8xf32>
    %937 = arith.divf %933, %936 : vector<2x8xf32>
    %938 = vector.broadcast %930 : vector<2x1xf32> to vector<2x8xf32>
    %939 = arith.cmpf oge, %928, %938 : vector<2x8xf32>
    %c8_i32_253 = arith.constant 8 : i32
    %940 = vector.broadcast %c8_i32_253 : i32 to vector<2x8xi32>
    %941 = arith.select %939, %214, %940 : vector<2x8xi1>, vector<2x8xi32>
    %cst_254 = arith.constant dense<2147483647> : vector<2xi32>
    %942 = vector.multi_reduction <minsi>, %941, %cst_254 [1] : vector<2x8xi32> to vector<2xi32>
    %943 = vector.shape_cast %942 : vector<2xi32> to vector<2x1xi32>
    %944 = vector.broadcast %943 : vector<2x1xi32> to vector<2x8xi32>
    %945 = arith.cmpi eq, %214, %944 : vector<2x8xi32>
    %946 = arith.extui %945 : vector<2x8xi1> to vector<2x8xi32>
    %947 = arith.sitofp %946 : vector<2x8xi32> to vector<2x8xf32>
    %948 = arith.mulf %937, %947 : vector<2x8xf32>
    %cst_255 = arith.constant dense<0.000000e+00> : vector<2xf32>
    %949 = vector.multi_reduction <add>, %948, %cst_255 [1] : vector<2x8xf32> to vector<2xf32>
    %950 = vector.shape_cast %949 : vector<2xf32> to vector<2x1xf32>
    %951 = vector.shape_cast %947 : vector<2x8xf32> to vector<2x8x1xf32>
    %952 = vector.broadcast %951 : vector<2x8x1xf32> to vector<2x8x2xf32>
    %953 = arith.mulf %952, %0 : vector<2x8x2xf32>
    %cst_256 = arith.constant dense<0.000000e+00> : vector<2x2xf32>
    %954 = vector.multi_reduction <add>, %953, %cst_256 [1] : vector<2x8x2xf32> to vector<2x2xf32>
    %955 = arith.subf %954, %859 : vector<2x2xf32>
    %956 = arith.mulf %955, %955 : vector<2x2xf32>
    %cst_257 = arith.constant dense<0.000000e+00> : vector<2xf32>
    %957 = vector.multi_reduction <add>, %956, %cst_257 [1] : vector<2x2xf32> to vector<2xf32>
    %958 = vector.shape_cast %957 : vector<2xf32> to vector<2x1xf32>
    %959 = math.sqrt %958 : vector<2x1xf32>
    %960 = arith.addf %870, %959 : vector<2x1xf32>
    %c0_258 = arith.constant 0 : index
    %c7_259 = arith.constant 7 : index
    %961 = vector.load %arg11[%c0_258, %c7_259] : memref<2x128xf32, #tpu.memory_space<vmem>>, vector<2x1xf32>
    tpu.vector_store %arg11[%c0_258, %c7_259], %950 {strides = array<i32>} : memref<2x128xf32, #tpu.memory_space<vmem>>, vector<2x1xf32>,
    %962 = arith.sitofp %943 : vector<2x1xi32> to vector<2x1xf32>
    %c0_260 = arith.constant 0 : index
    %c15 = arith.constant 15 : index
    %963 = vector.load %arg11[%c0_260, %c15] : memref<2x128xf32, #tpu.memory_space<vmem>>, vector<2x1xf32>
    tpu.vector_store %arg11[%c0_260, %c15], %962 {strides = array<i32>} : memref<2x128xf32, #tpu.memory_space<vmem>>, vector<2x1xf32>,
    %c0_261 = arith.constant 0 : index
    %c30 = arith.constant 30 : index
    %964 = vector.load %arg11[%c0_261, %c30] : memref<2x128xf32, #tpu.memory_space<vmem>>, vector<2x2xf32>
    tpu.vector_store %arg11[%c0_261, %c30], %954 {strides = array<i32>} : memref<2x128xf32, #tpu.memory_space<vmem>>, vector<2x2xf32>,
    %965 = arith.mulf %954, %954 : vector<2x2xf32>
    %cst_262 = arith.constant dense<0.000000e+00> : vector<2xf32>
    %966 = vector.multi_reduction <add>, %965, %cst_262 [1] : vector<2x2xf32> to vector<2xf32>
    %967 = vector.shape_cast %966 : vector<2xf32> to vector<2x1xf32>
    %968 = math.sqrt %967 : vector<2x1xf32>
    %969 = arith.addf %960, %968 : vector<2x1xf32>
    %970 = arith.mulf %295, %295 : vector<2x2xf32>
    %cst_263 = arith.constant dense<0.000000e+00> : vector<2xf32>
    %971 = vector.multi_reduction <add>, %970, %cst_263 [1] : vector<2x2xf32> to vector<2xf32>
    %972 = vector.shape_cast %971 : vector<2xf32> to vector<2x1xf32>
    %973 = math.sqrt %972 : vector<2x1xf32>
    %974 = arith.addf %969, %973 : vector<2x1xf32>
    %c0_264 = arith.constant 0 : index
    %c32 = arith.constant 32 : index
    %975 = vector.load %arg11[%c0_264, %c32] : memref<2x128xf32, #tpu.memory_space<vmem>>, vector<2x1xf32>
    tpu.vector_store %arg11[%c0_264, %c32], %974 {strides = array<i32>} : memref<2x128xf32, #tpu.memory_space<vmem>>, vector<2x1xf32>,
    return
  }
  func.func @transform_0(%arg0: i32) -> (i32, i32, i32) {
    %c0_i32 = arith.constant 0 : i32
    %c0_i32_0 = arith.constant 0 : i32
    %c0_i32_1 = arith.constant 0 : i32
    return %arg0, %c0_i32, %c0_i32_0 : i32, i32, i32
  }
  func.func @transform_1(%arg0: i32) -> (i32, i32, i32) {
    %c0_i32 = arith.constant 0 : i32
    %c0_i32_0 = arith.constant 0 : i32
    %c0_i32_1 = arith.constant 0 : i32
    return %arg0, %c0_i32, %c0_i32_0 : i32, i32, i32
  }
  func.func @transform_2(%arg0: i32) -> (i32, i32, i32) {
    %c0_i32 = arith.constant 0 : i32
    %c0_i32_0 = arith.constant 0 : i32
    %c0_i32_1 = arith.constant 0 : i32
    return %c0_i32, %arg0, %c0_i32_0 : i32, i32, i32
  }
  func.func @transform_3(%arg0: i32) -> (i32, i32) {
    %c0_i32 = arith.constant 0 : i32
    %c0_i32_0 = arith.constant 0 : i32
    %c0_i32_1 = arith.constant 0 : i32
    return %c0_i32, %c0_i32_0 : i32, i32
  }
  func.func @transform_4(%arg0: i32) -> (i32, i32) {
    %c0_i32 = arith.constant 0 : i32
    %c0_i32_0 = arith.constant 0 : i32
    %c0_i32_1 = arith.constant 0 : i32
    return %c0_i32, %c0_i32_0 : i32, i32
  }
  func.func @transform_5(%arg0: i32) -> (i32, i32) {
    %c0_i32 = arith.constant 0 : i32
    %c0_i32_0 = arith.constant 0 : i32
    %c0_i32_1 = arith.constant 0 : i32
    return %c0_i32, %c0_i32_0 : i32, i32
  }
  func.func @transform_6(%arg0: i32) -> (i32, i32) {
    %c0_i32 = arith.constant 0 : i32
    %c0_i32_0 = arith.constant 0 : i32
    %c0_i32_1 = arith.constant 0 : i32
    return %c0_i32, %c0_i32_0 : i32, i32
  }
  func.func @transform_7(%arg0: i32) -> (i32, i32) {
    %c0_i32 = arith.constant 0 : i32
    %c0_i32_0 = arith.constant 0 : i32
    %c0_i32_1 = arith.constant 0 : i32
    return %c0_i32, %c0_i32_0 : i32, i32
  }
  func.func @transform_8(%arg0: i32) -> (i32, i32) {
    %c0_i32 = arith.constant 0 : i32
    %c0_i32_0 = arith.constant 0 : i32
    %c0_i32_1 = arith.constant 0 : i32
    return %c0_i32, %c0_i32_0 : i32, i32
  }
  func.func @transform_9(%arg0: i32) -> (i32, i32) {
    %c0_i32 = arith.constant 0 : i32
    %c0_i32_0 = arith.constant 0 : i32
    %c0_i32_1 = arith.constant 0 : i32
    return %c0_i32, %c0_i32_0 : i32, i32
  }
  func.func @transform_10(%arg0: i32) -> (i32, i32) {
    %c0_i32 = arith.constant 0 : i32
    %c0_i32_0 = arith.constant 0 : i32
    return %arg0, %c0_i32 : i32, i32
  }
}

</mosaic_0001>

<llo_original>
// kernel: combinatorial_rl_forward.1
$region0: #{combinatorial_rl_forward.1}
  #allocation0 [shape = 'u32[]', space=smem, size = 0x4, offset = 0x4, fixed_abs, tag = 'smem constant byte address 0x4 - core index']
  #allocation1 [shape = 'u32[144,128]{1,0:T(1,128)}', space=vmem, size = 0x12000, scoped, tag = 'internal scratch']
  #allocation2 [shape = 'f32[2,8,32]{2,1,0:T(8,128)}', space=vmem, size = 0x2000, scoped, tag = 'scratch operand']
  %s0 = inlined_call_operand.vmem [shape: f32[2,8,2], index: 0, kind: input, shape index: {}]
  %s1 = inlined_call_operand.vmem [shape: f32[2,8,16], index: 1, kind: input, shape index: {}]
  %s2 = inlined_call_operand.vmem [shape: f32[8,2,16], index: 2, kind: input, shape index: {}]
  %s3 = inlined_call_operand.vmem [shape: bf16[16,128], index: 3, kind: input, shape index: {}]
  %s4 = inlined_call_operand.vmem [shape: bf16[32,128], index: 4, kind: input, shape index: {}]
  %s5 = inlined_call_operand.vmem [shape: f32[1,128], index: 5, kind: input, shape index: {}]
  %s6 = inlined_call_operand.vmem [shape: bf16[16,128], index: 6, kind: input, shape index: {}]
  %s7 = inlined_call_operand.vmem [shape: bf16[32,128], index: 7, kind: input, shape index: {}]
  %s8 = inlined_call_operand.vmem [shape: f32[1,128], index: 8, kind: input, shape index: {}]
  %s9 = inlined_call_operand.vmem [shape: f32[1,16], index: 9, kind: input, shape index: {}]
  %s10 = inlined_call_operand.vmem [shape: f32[2,128], index: 10, kind: output, shape index: {}]
  %s11 = sld [smem:[#allocation0]]
  $region50: #{combinatorial_rl_forward.1} parent=0
    _
  %s13 = ssub.s32 1, %s11
  %s14 = scalar_select 0, %s13, %s11
  // Predicated region
  $region2: #{combinatorial_rl_forward.1} parent=0 // pred_check
    _
  $region3: #{combinatorial_rl_forward.1} parent=0 // pred_check_branch
    %16 = sbr.rel (0) target = $region5
  $region4: #{combinatorial_rl_forward.1} parent=0 // pred_region
    _
  $region5: #{combinatorial_rl_forward.1} parent=0 // pred_fallthru
    _
  // Predicated region
  $region6: #{combinatorial_rl_forward.1} parent=0 // pred_check
    _
  $region7: #{combinatorial_rl_forward.1} parent=0 // pred_check_branch
    %18 = sbr.rel (0) target = $region9
  $region8: #{combinatorial_rl_forward.1} parent=0 // pred_region
    _
  $region9: #{combinatorial_rl_forward.1} parent=0 // pred_fallthru
    _
  // Predicated region
  $region10: #{combinatorial_rl_forward.1} parent=0 // pred_check
    _
  $region11: #{combinatorial_rl_forward.1} parent=0 // pred_check_branch
    %20 = sbr.rel (0) target = $region13
  $region12: #{combinatorial_rl_forward.1} parent=0 // pred_region
    _
  $region13: #{combinatorial_rl_forward.1} parent=0 // pred_fallthru
    _
  // Predicated region
  $region14: #{combinatorial_rl_forward.1} parent=0 // pred_check
    _
  $region15: #{combinatorial_rl_forward.1} parent=0 // pred_check_branch
    %22 = sbr.rel (0) target = $region17
  $region16: #{combinatorial_rl_forward.1} parent=0 // pred_region
    _
  $region17: #{combinatorial_rl_forward.1} parent=0 // pred_fallthru
    _
  // Predicated region
  $region18: #{combinatorial_rl_forward.1} parent=0 // pred_check
    _
  $region19: #{combinatorial_rl_forward.1} parent=0 // pred_check_branch
    %24 = sbr.rel (0) target = $region21
  $region20: #{combinatorial_rl_forward.1} parent=0 // pred_region
    _
  $region21: #{combinatorial_rl_forward.1} parent=0 // pred_fallthru
    _
  // Predicated region
  $region22: #{combinatorial_rl_forward.1} parent=0 // pred_check
    _
  $region23: #{combinatorial_rl_forward.1} parent=0 // pred_check_branch
    %26 = sbr.rel (0) target = $region25
  $region24: #{combinatorial_rl_forward.1} parent=0 // pred_region
    _
  $region25: #{combinatorial_rl_forward.1} parent=0 // pred_fallthru
    _
  // Predicated region
  $region26: #{combinatorial_rl_forward.1} parent=0 // pred_check
    _
  $region27: #{combinatorial_rl_forward.1} parent=0 // pred_check_branch
    %28 = sbr.rel (0) target = $region29
  $region28: #{combinatorial_rl_forward.1} parent=0 // pred_region
    _
  $region29: #{combinatorial_rl_forward.1} parent=0 // pred_fallthru
    _
  // Predicated region
  $region30: #{combinatorial_rl_forward.1} parent=0 // pred_check
    _
  $region31: #{combinatorial_rl_forward.1} parent=0 // pred_check_branch
    %30 = sbr.rel (0) target = $region33
  $region32: #{combinatorial_rl_forward.1} parent=0 // pred_region
    _
  $region33: #{combinatorial_rl_forward.1} parent=0 // pred_fallthru
    _
  // Predicated region
  $region34: #{combinatorial_rl_forward.1} parent=0 // pred_check
    _
  $region35: #{combinatorial_rl_forward.1} parent=0 // pred_check_branch
    %32 = sbr.rel (0) target = $region37
  $region36: #{combinatorial_rl_forward.1} parent=0 // pred_region
    _
  $region37: #{combinatorial_rl_forward.1} parent=0 // pred_fallthru
    _
  // Predicated region
  $region38: #{combinatorial_rl_forward.1} parent=0 // pred_check
    _
  $region39: #{combinatorial_rl_forward.1} parent=0 // pred_check_branch
    %34 = sbr.rel (0) target = $region41
  $region40: #{combinatorial_rl_forward.1} parent=0 // pred_region
    _
  $region41: #{combinatorial_rl_forward.1} parent=0 // pred_fallthru
    _
  %v36 = vld [vmem:[%s0] sm:$0xff]
  %v37 = vld [vmem:[%s0 + $0x8] sm:$0xff]
  %v38 = vld [vmem:[%s1] sm:$0xff]
  %v39 = vld [vmem:[%s1 + $0x8] sm:$0xff]
  %v40 = vld [vmem:[%s2] sm:$0x3]
  %v41 = vld [vmem:[%s2 + $0x2] sm:$0x3]
  %v42 = vld [vmem:[%s2 + $0x4] sm:$0x3]
  %v43 = vld [vmem:[%s2 + $0x6] sm:$0x3]
  %v44 = vld [vmem:[%s2 + $0x8] sm:$0x3]
  %v45 = vld [vmem:[%s2 + $0xa] sm:$0x3]
  %v46 = vld [vmem:[%s2 + $0xc] sm:$0x3]
  %v47 = vld [vmem:[%s2 + $0xe] sm:$0x3]
  %v48 = vld [vmem:[%s3] sm:$0xf]
  %v49 = vld [vmem:[%s3 + $0x4] sm:$0xf]
  %v50 = vld [vmem:[%s4] sm:$0xf]
  %v51 = vld [vmem:[%s4 + $0x4] sm:$0xf]
  %v52 = vld [vmem:[%s4 + $0x8] sm:$0xf]
  %v53 = vld [vmem:[%s4 + $0xc] sm:$0xf]
  %v54 = vld [vmem:[%s5] sm:$0x1]
  %v55 = vld [vmem:[%s6] sm:$0xf]
  %v56 = vld [vmem:[%s6 + $0x4] sm:$0xf]
  %v57 = vld [vmem:[%s7] sm:$0xf]
  %v58 = vld [vmem:[%s7 + $0x4] sm:$0xf]
  %v59 = vld [vmem:[%s7 + $0x8] sm:$0xf]
  %v60 = vld [vmem:[%s7 + $0xc] sm:$0xf]
  %v61 = vld [vmem:[%s8] sm:$0x1]
  %v62 = vld [vmem:[%s9] sm:$0x1]
  %63 = vst [vmem:[%s10] sm:$0x3] 0.0
  %v72 = vcombine.low %v40, %v41
  %v73 = vcombine.low %v42, %v43
  %v75 = vunpack.c.l.s4 1983009808
  %v76 = vunpack.c.0.s8 %v75
  %v77 = vlaneseq
  %v78 = vshrl.u32 %v77, 7
  %v79 = vsub.s32 %v76, %v78
  %v80 = vrot.slane %v72, %v79
  %v82 = vunpack.c.l.s4 1983009808
  %v83 = vunpack.c.0.s8 %v82
  %v84 = vlaneseq
  %v85 = vshrl.u32 %v84, 7
  %v86 = vsub.s32 %v83, %v85
  %v87 = vrot.slane %v73, %v86
  %v88 = vcombine.low %v80, %v87
  %v89 = vcombine.low %v44, %v45
  %v90 = vcombine.low %v46, %v47
  %v92 = vunpack.c.l.s4 1983009808
  %v93 = vunpack.c.0.s8 %v92
  %v94 = vlaneseq
  %v95 = vshrl.u32 %v94, 7
  %v96 = vsub.s32 %v93, %v95
  %v97 = vrot.slane %v89, %v96
  %v99 = vunpack.c.l.s4 1983009808
  %v100 = vunpack.c.0.s8 %v99
  %v101 = vlaneseq
  %v102 = vshrl.u32 %v101, 7
  %v103 = vsub.s32 %v100, %v102
  %v104 = vrot.slane %v90, %v103
  %v105 = vcombine.low %v97, %v104
  %v108 = vpack.c.bf16 %v105, %v88
  %v111 = vunpack.c.l.b16 %v48
  %v112 = vunpack.c.l.b16 %v49
  %v113 = vpack.c.b16 %v112, %v111
  %vm115 = vcmask 130048
  %v117 = vsel %vm115, %v108, 0
  %119 = vmatprep.subr.bf16.mxu0 0
  %120 = vmatpush1.bf16.msra.mxu0 %v113
  %121 = vmatprep.subr.bf16.mxu0 0
  %122 = vmatpush1.bf16.msra.mxu0 0
  %123 = vmatprep.subr.bf16.mxu0 0
  %124 = vmatpush1.bf16.msra.mxu0 0
  %125 = vmatprep.subr.bf16.mxu0 0
  %126 = vmatpush1.bf16.msra.mxu0 0
  %127 = vmatprep.subr.bf16.mxu0 0
  %128 = vmatpush1.bf16.msra.mxu0 0
  %129 = vmatprep.subr.bf16.mxu0 0
  %130 = vmatpush1.bf16.msra.mxu0 0
  %131 = vmatprep.subr.bf16.mxu0 0
  %132 = vmatpush1.bf16.msra.mxu0 0
  %133 = vmatprep.subr.bf16.mxu0 0
  %134 = vmatpush1.bf16.msra.mxu0 0
  %135 = vmatprep.subr.bf16.mxu0 0
  %136 = vmatpush1.bf16.msra.mxu0 0
  %137 = vmatprep.subr.bf16.mxu0 0
  %138 = vmatpush1.bf16.msra.mxu0 0
  %139 = vmatprep.subr.bf16.mxu0 0
  %140 = vmatpush1.bf16.msra.mxu0 0
  %141 = vmatprep.subr.bf16.mxu0 0
  %142 = vmatpush1.bf16.msra.mxu0 0
  %143 = vmatprep.subr.bf16.mxu0 0
  %144 = vmatpush1.bf16.msra.mxu0 0
  %145 = vmatprep.subr.bf16.mxu0 0
  %146 = vmatpush1.bf16.msra.mxu0 0
  %147 = vmatprep.subr.bf16.mxu0 0
  %148 = vmatpush1.bf16.msra.mxu0 0
  %149 = vmatprep.subr.bf16.mxu0 0
  %150 = vmatpush1.bf16.msra.mxu0 0
  %151 = vmatprep.mubr.bf16.mxu0 0
  %152 = vmatmul.mubr.bf16.gmra.mrb[0].mxu0 %v117
  %v153 = vpop.f32.mrb[0].mxu0
  %v154 = vadd.f32 0.0, %v153
  %v155 = vpop.f32.mrb[0].mxu0
  %v156 = vpop.f32.mrb[0].mxu0
  %v157 = vadd.f32 0.0, %v156
  %v158 = vpop.f32.mrb[0].mxu0
  %159 = vdwg.mxu0
  %v162 = vcombine.high %v154, %v154
  %v164 = vunpack.c.l.s4 1983009808
  %v165 = vunpack.c.0.s8 %v164
  %v166 = vlaneseq
  %v167 = vshrl.u32 %v166, 7
  %v168 = vsub.s32 %v165, %v167
  %v169 = vrot.slane %v154, %v168
  %v171 = vunpack.c.l.s4 1983009808
  %v172 = vunpack.c.0.s8 %v171
  %v173 = vlaneseq
  %v174 = vshrl.u32 %v173, 7
  %v175 = vsub.s32 %v172, %v174
  %v176 = vrot.slane %v162, %v175
  %v177 = vcombine.high %v169, %v169
  %v178 = vcombine.high %v176, %v176
  %v179 = vcombine.high %v157, %v157
  %v181 = vunpack.c.l.s4 1983009808
  %v182 = vunpack.c.0.s8 %v181
  %v183 = vlaneseq
  %v184 = vshrl.u32 %v183, 7
  %v185 = vsub.s32 %v182, %v184
  %v186 = vrot.slane %v157, %v185
  %v188 = vunpack.c.l.s4 1983009808
  %v189 = vunpack.c.0.s8 %v188
  %v190 = vlaneseq
  %v191 = vshrl.u32 %v190, 7
  %v192 = vsub.s32 %v189, %v191
  %v193 = vrot.slane %v179, %v192
  %v194 = vcombine.high %v186, %v186
  %v195 = vcombine.high %v193, %v193
  %v208 = vunpack.c.l.b16 %v50
  %v209 = vunpack.c.l.b16 %v51
  %v210 = vunpack.c.l.b16 %v52
  %v211 = vunpack.c.l.b16 %v53
  %v212 = vpack.c.b16 %v209, %v208
  %v213 = vpack.c.b16 %v211, %v210
  %vm216 = vcmask 261120
  %v218 = vsel %vm216, 0, 0
  %220 = vmatprep.subr.bf16.mxu0 0
  %221 = vmatpush1.bf16.msra.mxu0 %v212
  %222 = vmatprep.subr.bf16.mxu0 0
  %223 = vmatpush1.bf16.msra.mxu0 %v213
  %224 = vmatprep.subr.bf16.mxu0 0
  %225 = vmatpush1.bf16.msra.mxu0 0
  %226 = vmatprep.subr.bf16.mxu0 0
  %227 = vmatpush1.bf16.msra.mxu0 0
  %228 = vmatprep.subr.bf16.mxu0 0
  %229 = vmatpush1.bf16.msra.mxu0 0
  %230 = vmatprep.subr.bf16.mxu0 0
  %231 = vmatpush1.bf16.msra.mxu0 0
  %232 = vmatprep.subr.bf16.mxu0 0
  %233 = vmatpush1.bf16.msra.mxu0 0
  %234 = vmatprep.subr.bf16.mxu0 0
  %235 = vmatpush1.bf16.msra.mxu0 0
  %236 = vmatprep.subr.bf16.mxu0 0
  %237 = vmatpush1.bf16.msra.mxu0 0
  %238 = vmatprep.subr.bf16.mxu0 0
  %239 = vmatpush1.bf16.msra.mxu0 0
  %240 = vmatprep.subr.bf16.mxu0 0
  %241 = vmatpush1.bf16.msra.mxu0 0
  %242 = vmatprep.subr.bf16.mxu0 0
  %243 = vmatpush1.bf16.msra.mxu0 0
  %244 = vmatprep.subr.bf16.mxu0 0
  %245 = vmatpush1.bf16.msra.mxu0 0
  %246 = vmatprep.subr.bf16.mxu0 0
  %247 = vmatpush1.bf16.msra.mxu0 0
  %248 = vmatprep.subr.bf16.mxu0 0
  %249 = vmatpush1.bf16.msra.mxu0 0
  %250 = vmatprep.subr.bf16.mxu0 0
  %251 = vmatpush1.bf16.msra.mxu0 0
  %252 = vmatprep.mubr.bf16.mxu0 0
  %253 = vmatmul.mubr.bf16.gmra.mrb[0].mxu0 %v218
  %v254 = vpop.f32.mrb[0].mxu0
  %v255 = vadd.f32 0.0, %v254
  %v256 = vpop.f32.mrb[0].mxu0
  %v257 = vpop.f32.mrb[0].mxu0
  %v258 = vpop.f32.mrb[0].mxu0
  %259 = vdwg.mxu0
  %v260 = vadd.f32 %v169, %v255
  %v262 = vlaneseq
  %v263 = vshrl.u32 %v262, 7
  %v264 = vsub.s32 0, %v263
  %v265 = vrot.slane %v54, %v264
  %v267 = vadd.f32 %v260, %v265
  %v268 = vxor.u32 %v267, 2147483648
  %v269 = vmul.f32 %v268, 1.442695
  %v270 = vpow.pop %v269
  %v271 = vadd.f32 %v270, 1.0
  %v272 = vrcp.pop %v271
  %v273 = vmul.f32 1.0, %v272
  %v274 = vtanh.pop %v267
  %v275 = vmul.f32 %v273, 0.0
  %277 = vrot.lane.b32.xlu0 %v274, 64
  %v278 = vpop.permute.xlu0 %277
  %v280 = vmul.f32 %v273, %v278
  %282 = vrot.lane.b32.xlu0 %v280, 32
  %v283 = vpop.permute.xlu0 %282
  %v285 = vadd.f32 %v275, %v283
  %v286 = vtanh.pop %v285
  %288 = vrot.lane.b32.xlu0 %v286, 64
  %v289 = vpop.permute.xlu0 %288
  %v291 = vmul.f32 %v273, %v289
  %v294 = vunpack.c.l.s4 1966171168
  %v295 = vunpack.c.0.s8 %v294
  %v296 = vlaneseq
  %v297 = vshrl.u32 %v296, 7
  %v298 = vsub.s32 %v295, %v297
  %v299 = vrot.slane %v291, %v298
  %v300 = vcombine.high %v299, %v299
  %v301 = vlaneseq
  %v302 = vshrl.u32 %v301, 7
  %v303 = vsub.s32 0, %v302
  %v304 = vrot.slane %v299, %v303
  %v305 = vlaneseq
  %v306 = vshrl.u32 %v305, 7
  %v307 = vsub.s32 0, %v306
  %v308 = vrot.slane %v300, %v307
  %309 = vrot.lane.b32.xlu0 %v304, 32
  %v310 = vpop.permute.xlu0 %309
  %311 = vrot.lane.b32.xlu0 %v308, 32
  %v312 = vpop.permute.xlu0 %311
  %vm315 = vcmask 253952
  %316 = vst.msk [vmem:[#allocation2] sm:$0x1] %vm315, %v310
  %317 = vst.msk [vmem:[#allocation2 + $0x8] sm:$0x1] %vm315, %v312
  %v318 = vpack.c.bf16 %v291, %v291
  %320 = vrot.lane.b32.xlu0 %v318, 32
  %v321 = vpop.permute.xlu0 %320
  %v323 = vsel %vm216, %v321, 0
  %325 = vmatprep.subr.bf16.mxu0 0
  %326 = vmatpush1.bf16.msra.mxu0 %v212
  %327 = vmatprep.subr.bf16.mxu0 0
  %328 = vmatpush1.bf16.msra.mxu0 %v213
  %329 = vmatprep.subr.bf16.mxu0 0
  %330 = vmatpush1.bf16.msra.mxu0 0
  %331 = vmatprep.subr.bf16.mxu0 0
  %332 = vmatpush1.bf16.msra.mxu0 0
  %333 = vmatprep.subr.bf16.mxu0 0
  %334 = vmatpush1.bf16.msra.mxu0 0
  %335 = vmatprep.subr.bf16.mxu0 0
  %336 = vmatpush1.bf16.msra.mxu0 0
  %337 = vmatprep.subr.bf16.mxu0 0
  %338 = vmatpush1.bf16.msra.mxu0 0
  %339 = vmatprep.subr.bf16.mxu0 0
  %340 = vmatpush1.bf16.msra.mxu0 0
  %341 = vmatprep.subr.bf16.mxu0 0
  %342 = vmatpush1.bf16.msra.mxu0 0
  %343 = vmatprep.subr.bf16.mxu0 0
  %344 = vmatpush1.bf16.msra.mxu0 0
  %345 = vmatprep.subr.bf16.mxu0 0
  %346 = vmatpush1.bf16.msra.mxu0 0
  %347 = vmatprep.subr.bf16.mxu0 0
  %348 = vmatpush1.bf16.msra.mxu0 0
  %349 = vmatprep.subr.bf16.mxu0 0
  %350 = vmatpush1.bf16.msra.mxu0 0
  %351 = vmatprep.subr.bf16.mxu0 0
  %352 = vmatpush1.bf16.msra.mxu0 0
  %353 = vmatprep.subr.bf16.mxu0 0
  %354 = vmatpush1.bf16.msra.mxu0 0
  %355 = vmatprep.subr.bf16.mxu0 0
  %356 = vmatpush1.bf16.msra.mxu0 0
  %357 = vmatprep.mubr.bf16.mxu0 0
  %358 = vmatmul.mubr.bf16.gmra.mrb[0].mxu0 %v323
  %v359 = vpop.f32.mrb[0].mxu0
  %v360 = vadd.f32 0.0, %v359
  %v361 = vpop.f32.mrb[0].mxu0
  %v362 = vpop.f32.mrb[0].mxu0
  %v363 = vpop.f32.mrb[0].mxu0
  %364 = vdwg.mxu0
  %v365 = vadd.f32 %v177, %v360
  %v366 = vadd.f32 %v365, %v265
  %v367 = vxor.u32 %v366, 2147483648
  %v368 = vmul.f32 %v367, 1.442695
  %v369 = vpow.pop %v368
  %v370 = vadd.f32 %v369, 1.0
  %v371 = vrcp.pop %v370
  %v372 = vmul.f32 1.0, %v371
  %v373 = vtanh.pop %v366
  %v374 = vmul.f32 %v372, %v285
  %376 = vrot.lane.b32.xlu0 %v373, 64
  %v377 = vpop.permute.xlu0 %376
  %v379 = vmul.f32 %v372, %v377
  %381 = vrot.lane.b32.xlu0 %v379, 32
  %v382 = vpop.permute.xlu0 %381
  %v384 = vadd.f32 %v374, %v382
  %v385 = vtanh.pop %v384
  %387 = vrot.lane.b32.xlu0 %v385, 64
  %v388 = vpop.permute.xlu0 %387
  %v390 = vmul.f32 %v372, %v388
  %v393 = vunpack.c.l.s4 1966171168
  %v394 = vunpack.c.0.s8 %v393
  %v395 = vlaneseq
  %v396 = vshrl.u32 %v395, 7
  %v397 = vsub.s32 %v394, %v396
  %v398 = vrot.slane %v390, %v397
  %v399 = vcombine.high %v398, %v398
  %v400 = vlaneseq
  %v401 = vshrl.u32 %v400, 7
  %v402 = vsub.s32 0, %v401
  %v403 = vrot.slane %v398, %v402
  %v404 = vlaneseq
  %v405 = vshrl.u32 %v404, 7
  %v406 = vsub.s32 0, %v405
  %v407 = vrot.slane %v399, %v406
  %408 = vrot.lane.b32.xlu0 %v403, 32
  %v409 = vpop.permute.xlu0 %408
  %410 = vrot.lane.b32.xlu0 %v407, 32
  %v411 = vpop.permute.xlu0 %410
  %414 = vst.msk [vmem:[#allocation2 + $0x1] sm:$0x1] %vm315, %v409
  %415 = vst.msk [vmem:[#allocation2 + $0x9] sm:$0x1] %vm315, %v411
  %v416 = vpack.c.bf16 %v390, %v390
  %418 = vrot.lane.b32.xlu0 %v416, 32
  %v419 = vpop.permute.xlu0 %418
  %v421 = vsel %vm216, %v419, 0
  %423 = vmatprep.subr.bf16.mxu0 0
  %424 = vmatpush1.bf16.msra.mxu0 %v212
  %425 = vmatprep.subr.bf16.mxu0 0
  %426 = vmatpush1.bf16.msra.mxu0 %v213
  %427 = vmatprep.subr.bf16.mxu0 0
  %428 = vmatpush1.bf16.msra.mxu0 0
  %429 = vmatprep.subr.bf16.mxu0 0
  %430 = vmatpush1.bf16.msra.mxu0 0
  %431 = vmatprep.subr.bf16.mxu0 0
  %432 = vmatpush1.bf16.msra.mxu0 0
  %433 = vmatprep.subr.bf16.mxu0 0
  %434 = vmatpush1.bf16.msra.mxu0 0
  %435 = vmatprep.subr.bf16.mxu0 0
  %436 = vmatpush1.bf16.msra.mxu0 0
  %437 = vmatprep.subr.bf16.mxu0 0
  %438 = vmatpush1.bf16.msra.mxu0 0
  %439 = vmatprep.subr.bf16.mxu0 0
  %440 = vmatpush1.bf16.msra.mxu0 0
  %441 = vmatprep.subr.bf16.mxu0 0
  %442 = vmatpush1.bf16.msra.mxu0 0
  %443 = vmatprep.subr.bf16.mxu0 0
  %444 = vmatpush1.bf16.msra.mxu0 0
  %445 = vmatprep.subr.bf16.mxu0 0
  %446 = vmatpush1.bf16.msra.mxu0 0
  %447 = vmatprep.subr.bf16.mxu0 0
  %448 = vmatpush1.bf16.msra.mxu0 0
  %449 = vmatprep.subr.bf16.mxu0 0
  %450 = vmatpush1.bf16.msra.mxu0 0
  %451 = vmatprep.subr.bf16.mxu0 0
  %452 = vmatpush1.bf16.msra.mxu0 0
  %453 = vmatprep.subr.bf16.mxu0 0
  %454 = vmatpush1.bf16.msra.mxu0 0
  %455 = vmatprep.mubr.bf16.mxu0 0
  %456 = vmatmul.mubr.bf16.gmra.mrb[0].mxu0 %v421
  %v457 = vpop.f32.mrb[0].mxu0
  %v458 = vadd.f32 0.0, %v457
  %v459 = vpop.f32.mrb[0].mxu0
  %v460 = vpop.f32.mrb[0].mxu0
  %v461 = vpop.f32.mrb[0].mxu0
  %462 = vdwg.mxu0
  %v463 = vadd.f32 %v176, %v458
  %v464 = vadd.f32 %v463, %v265
  %v465 = vxor.u32 %v464, 2147483648
  %v466 = vmul.f32 %v465, 1.442695
  %v467 = vpow.pop %v466
  %v468 = vadd.f32 %v467, 1.0
  %v469 = vrcp.pop %v468
  %v470 = vmul.f32 1.0, %v469
  %v471 = vtanh.pop %v464
  %v472 = vmul.f32 %v470, %v384
  %474 = vrot.lane.b32.xlu0 %v471, 64
  %v475 = vpop.permute.xlu0 %474
  %v477 = vmul.f32 %v470, %v475
  %479 = vrot.lane.b32.xlu0 %v477, 32
  %v480 = vpop.permute.xlu0 %479
  %v482 = vadd.f32 %v472, %v480
  %v483 = vtanh.pop %v482
  %485 = vrot.lane.b32.xlu0 %v483, 64
  %v486 = vpop.permute.xlu0 %485
  %v488 = vmul.f32 %v470, %v486
  %v491 = vunpack.c.l.s4 1966171168
  %v492 = vunpack.c.0.s8 %v491
  %v493 = vlaneseq
  %v494 = vshrl.u32 %v493, 7
  %v495 = vsub.s32 %v492, %v494
  %v496 = vrot.slane %v488, %v495
  %v497 = vcombine.high %v496, %v496
  %v498 = vlaneseq
  %v499 = vshrl.u32 %v498, 7
  %v500 = vsub.s32 0, %v499
  %v501 = vrot.slane %v496, %v500
  %v502 = vlaneseq
  %v503 = vshrl.u32 %v502, 7
  %v504 = vsub.s32 0, %v503
  %v505 = vrot.slane %v497, %v504
  %506 = vrot.lane.b32.xlu0 %v501, 32
  %v507 = vpop.permute.xlu0 %506
  %508 = vrot.lane.b32.xlu0 %v505, 32
  %v509 = vpop.permute.xlu0 %508
  %512 = vst.msk [vmem:[#allocation2 + $0x2] sm:$0x1] %vm315, %v507
  %513 = vst.msk [vmem:[#allocation2 + $0xa] sm:$0x1] %vm315, %v509
  %v514 = vpack.c.bf16 %v488, %v488
  %516 = vrot.lane.b32.xlu0 %v514, 32
  %v517 = vpop.permute.xlu0 %516
  %v519 = vsel %vm216, %v517, 0
  %521 = vmatprep.subr.bf16.mxu0 0
  %522 = vmatpush1.bf16.msra.mxu0 %v212
  %523 = vmatprep.subr.bf16.mxu0 0
  %524 = vmatpush1.bf16.msra.mxu0 %v213
  %525 = vmatprep.subr.bf16.mxu0 0
  %526 = vmatpush1.bf16.msra.mxu0 0
  %527 = vmatprep.subr.bf16.mxu0 0
  %528 = vmatpush1.bf16.msra.mxu0 0
  %529 = vmatprep.subr.bf16.mxu0 0
  %530 = vmatpush1.bf16.msra.mxu0 0
  %531 = vmatprep.subr.bf16.mxu0 0
  %532 = vmatpush1.bf16.msra.mxu0 0
  %533 = vmatprep.subr.bf16.mxu0 0
  %534 = vmatpush1.bf16.msra.mxu0 0
  %535 = vmatprep.subr.bf16.mxu0 0
  %536 = vmatpush1.bf16.msra.mxu0 0
  %537 = vmatprep.subr.bf16.mxu0 0
  %538 = vmatpush1.bf16.msra.mxu0 0
  %539 = vmatprep.subr.bf16.mxu0 0
  %540 = vmatpush1.bf16.msra.mxu0 0
  %541 = vmatprep.subr.bf16.mxu0 0
  %542 = vmatpush1.bf16.msra.mxu0 0
  %543 = vmatprep.subr.bf16.mxu0 0
  %544 = vmatpush1.bf16.msra.mxu0 0
  %545 = vmatprep.subr.bf16.mxu0 0
  %546 = vmatpush1.bf16.msra.mxu0 0
  %547 = vmatprep.subr.bf16.mxu0 0
  %548 = vmatpush1.bf16.msra.mxu0 0
  %549 = vmatprep.subr.bf16.mxu0 0
  %550 = vmatpush1.bf16.msra.mxu0 0
  %551 = vmatprep.subr.bf16.mxu0 0
  %552 = vmatpush1.bf16.msra.mxu0 0
  %553 = vmatprep.mubr.bf16.mxu0 0
  %554 = vmatmul.mubr.bf16.gmra.mrb[0].mxu0 %v519
  %v555 = vpop.f32.mrb[0].mxu0
  %v556 = vadd.f32 0.0, %v555
  %v557 = vpop.f32.mrb[0].mxu0
  %v558 = vpop.f32.mrb[0].mxu0
  %v559 = vpop.f32.mrb[0].mxu0
  %560 = vdwg.mxu0
  %v561 = vadd.f32 %v178, %v556
  %v562 = vadd.f32 %v561, %v265
  %v563 = vxor.u32 %v562, 2147483648
  %v564 = vmul.f32 %v563, 1.442695
  %v565 = vpow.pop %v564
  %v566 = vadd.f32 %v565, 1.0
  %v567 = vrcp.pop %v566
  %v568 = vmul.f32 1.0, %v567
  %v569 = vtanh.pop %v562
  %v570 = vmul.f32 %v568, %v482
  %572 = vrot.lane.b32.xlu0 %v569, 64
  %v573 = vpop.permute.xlu0 %572
  %v575 = vmul.f32 %v568, %v573
  %577 = vrot.lane.b32.xlu0 %v575, 32
  %v578 = vpop.permute.xlu0 %577
  %v580 = vadd.f32 %v570, %v578
  %v581 = vtanh.pop %v580
  %583 = vrot.lane.b32.xlu0 %v581, 64
  %v584 = vpop.permute.xlu0 %583
  %v586 = vmul.f32 %v568, %v584
  %v589 = vunpack.c.l.s4 1966171168
  %v590 = vunpack.c.0.s8 %v589
  %v591 = vlaneseq
  %v592 = vshrl.u32 %v591, 7
  %v593 = vsub.s32 %v590, %v592
  %v594 = vrot.slane %v586, %v593
  %v595 = vcombine.high %v594, %v594
  %v596 = vlaneseq
  %v597 = vshrl.u32 %v596, 7
  %v598 = vsub.s32 0, %v597
  %v599 = vrot.slane %v594, %v598
  %v600 = vlaneseq
  %v601 = vshrl.u32 %v600, 7
  %v602 = vsub.s32 0, %v601
  %v603 = vrot.slane %v595, %v602
  %604 = vrot.lane.b32.xlu0 %v599, 32
  %v605 = vpop.permute.xlu0 %604
  %606 = vrot.lane.b32.xlu0 %v603, 32
  %v607 = vpop.permute.xlu0 %606
  %610 = vst.msk [vmem:[#allocation2 + $0x3] sm:$0x1] %vm315, %v605
  %611 = vst.msk [vmem:[#allocation2 + $0xb] sm:$0x1] %vm315, %v607
  %v612 = vpack.c.bf16 %v586, %v586
  %614 = vrot.lane.b32.xlu0 %v612, 32
  %v615 = vpop.permute.xlu0 %614
  %v617 = vsel %vm216, %v615, 0
  %619 = vmatprep.subr.bf16.mxu0 0
  %620 = vmatpush1.bf16.msra.mxu0 %v212
  %621 = vmatprep.subr.bf16.mxu0 0
  %622 = vmatpush1.bf16.msra.mxu0 %v213
  %623 = vmatprep.subr.bf16.mxu0 0
  %624 = vmatpush1.bf16.msra.mxu0 0
  %625 = vmatprep.subr.bf16.mxu0 0
  %626 = vmatpush1.bf16.msra.mxu0 0
  %627 = vmatprep.subr.bf16.mxu0 0
  %628 = vmatpush1.bf16.msra.mxu0 0
  %629 = vmatprep.subr.bf16.mxu0 0
  %630 = vmatpush1.bf16.msra.mxu0 0
  %631 = vmatprep.subr.bf16.mxu0 0
  %632 = vmatpush1.bf16.msra.mxu0 0
  %633 = vmatprep.subr.bf16.mxu0 0
  %634 = vmatpush1.bf16.msra.mxu0 0
  %635 = vmatprep.subr.bf16.mxu0 0
  %636 = vmatpush1.bf16.msra.mxu0 0
  %637 = vmatprep.subr.bf16.mxu0 0
  %638 = vmatpush1.bf16.msra.mxu0 0
  %639 = vmatprep.subr.bf16.mxu0 0
  %640 = vmatpush1.bf16.msra.mxu0 0
  %641 = vmatprep.subr.bf16.mxu0 0
  %642 = vmatpush1.bf16.msra.mxu0 0
  %643 = vmatprep.subr.bf16.mxu0 0
  %644 = vmatpush1.bf16.msra.mxu0 0
  %645 = vmatprep.subr.bf16.mxu0 0
  %646 = vmatpush1.bf16.msra.mxu0 0
  %647 = vmatprep.subr.bf16.mxu0 0
  %648 = vmatpush1.bf16.msra.mxu0 0
  %649 = vmatprep.subr.bf16.mxu0 0
  %650 = vmatpush1.bf16.msra.mxu0 0
  %651 = vmatprep.mubr.bf16.mxu0 0
  %652 = vmatmul.mubr.bf16.gmra.mrb[0].mxu0 %v617
  %v653 = vpop.f32.mrb[0].mxu0
  %v654 = vadd.f32 0.0, %v653
  %v655 = vpop.f32.mrb[0].mxu0
  %v656 = vpop.f32.mrb[0].mxu0
  %v657 = vpop.f32.mrb[0].mxu0
  %658 = vdwg.mxu0
  %v659 = vadd.f32 %v186, %v654
  %v660 = vadd.f32 %v659, %v265
  %v661 = vxor.u32 %v660, 2147483648
  %v662 = vmul.f32 %v661, 1.442695
  %v663 = vpow.pop %v662
  %v664 = vadd.f32 %v663, 1.0
  %v665 = vrcp.pop %v664
  %v666 = vmul.f32 1.0, %v665
  %v667 = vtanh.pop %v660
  %v668 = vmul.f32 %v666, %v580
  %670 = vrot.lane.b32.xlu0 %v667, 64
  %v671 = vpop.permute.xlu0 %670
  %v673 = vmul.f32 %v666, %v671
  %675 = vrot.lane.b32.xlu0 %v673, 32
  %v676 = vpop.permute.xlu0 %675
  %v678 = vadd.f32 %v668, %v676
  %v679 = vtanh.pop %v678
  %681 = vrot.lane.b32.xlu0 %v679, 64
  %v682 = vpop.permute.xlu0 %681
  %v684 = vmul.f32 %v666, %v682
  %v687 = vunpack.c.l.s4 1966171168
  %v688 = vunpack.c.0.s8 %v687
  %v689 = vlaneseq
  %v690 = vshrl.u32 %v689, 7
  %v691 = vsub.s32 %v688, %v690
  %v692 = vrot.slane %v684, %v691
  %v693 = vcombine.high %v692, %v692
  %v694 = vlaneseq
  %v695 = vshrl.u32 %v694, 7
  %v696 = vsub.s32 0, %v695
  %v697 = vrot.slane %v692, %v696
  %v698 = vlaneseq
  %v699 = vshrl.u32 %v698, 7
  %v700 = vsub.s32 0, %v699
  %v701 = vrot.slane %v693, %v700
  %702 = vrot.lane.b32.xlu0 %v697, 32
  %v703 = vpop.permute.xlu0 %702
  %704 = vrot.lane.b32.xlu0 %v701, 32
  %v705 = vpop.permute.xlu0 %704
  %708 = vst.msk [vmem:[#allocation2 + $0x4] sm:$0x1] %vm315, %v703
  %709 = vst.msk [vmem:[#allocation2 + $0xc] sm:$0x1] %vm315, %v705
  %v710 = vpack.c.bf16 %v684, %v684
  %712 = vrot.lane.b32.xlu0 %v710, 32
  %v713 = vpop.permute.xlu0 %712
  %v715 = vsel %vm216, %v713, 0
  %717 = vmatprep.subr.bf16.mxu0 0
  %718 = vmatpush1.bf16.msra.mxu0 %v212
  %719 = vmatprep.subr.bf16.mxu0 0
  %720 = vmatpush1.bf16.msra.mxu0 %v213
  %721 = vmatprep.subr.bf16.mxu0 0
  %722 = vmatpush1.bf16.msra.mxu0 0
  %723 = vmatprep.subr.bf16.mxu0 0
  %724 = vmatpush1.bf16.msra.mxu0 0
  %725 = vmatprep.subr.bf16.mxu0 0
  %726 = vmatpush1.bf16.msra.mxu0 0
  %727 = vmatprep.subr.bf16.mxu0 0
  %728 = vmatpush1.bf16.msra.mxu0 0
  %729 = vmatprep.subr.bf16.mxu0 0
  %730 = vmatpush1.bf16.msra.mxu0 0
  %731 = vmatprep.subr.bf16.mxu0 0
  %732 = vmatpush1.bf16.msra.mxu0 0
  %733 = vmatprep.subr.bf16.mxu0 0
  %734 = vmatpush1.bf16.msra.mxu0 0
  %735 = vmatprep.subr.bf16.mxu0 0
  %736 = vmatpush1.bf16.msra.mxu0 0
  %737 = vmatprep.subr.bf16.mxu0 0
  %738 = vmatpush1.bf16.msra.mxu0 0
  %739 = vmatprep.subr.bf16.mxu0 0
  %740 = vmatpush1.bf16.msra.mxu0 0
  %741 = vmatprep.subr.bf16.mxu0 0
  %742 = vmatpush1.bf16.msra.mxu0 0
  %743 = vmatprep.subr.bf16.mxu0 0
  %744 = vmatpush1.bf16.msra.mxu0 0
  %745 = vmatprep.subr.bf16.mxu0 0
  %746 = vmatpush1.bf16.msra.mxu0 0
  %747 = vmatprep.subr.bf16.mxu0 0
  %748 = vmatpush1.bf16.msra.mxu0 0
  %749 = vmatprep.mubr.bf16.mxu0 0
  %750 = vmatmul.mubr.bf16.gmra.mrb[0].mxu0 %v715
  %v751 = vpop.f32.mrb[0].mxu0
  %v752 = vadd.f32 0.0, %v751
  %v753 = vpop.f32.mrb[0].mxu0
  %v754 = vpop.f32.mrb[0].mxu0
  %v755 = vpop.f32.mrb[0].mxu0
  %756 = vdwg.mxu0
  %v757 = vadd.f32 %v194, %v752
  %v758 = vadd.f32 %v757, %v265
  %v759 = vxor.u32 %v758, 2147483648
  %v760 = vmul.f32 %v759, 1.442695
  %v761 = vpow.pop %v760
  %v762 = vadd.f32 %v761, 1.0
  %v763 = vrcp.pop %v762
  %v764 = vmul.f32 1.0, %v763
  %v765 = vtanh.pop %v758
  %v766 = vmul.f32 %v764, %v678
  %768 = vrot.lane.b32.xlu0 %v765, 64
  %v769 = vpop.permute.xlu0 %768
  %v771 = vmul.f32 %v764, %v769
  %773 = vrot.lane.b32.xlu0 %v771, 32
  %v774 = vpop.permute.xlu0 %773
  %v776 = vadd.f32 %v766, %v774
  %v777 = vtanh.pop %v776
  %779 = vrot.lane.b32.xlu0 %v777, 64
  %v780 = vpop.permute.xlu0 %779
  %v782 = vmul.f32 %v764, %v780
  %v785 = vunpack.c.l.s4 1966171168
  %v786 = vunpack.c.0.s8 %v785
  %v787 = vlaneseq
  %v788 = vshrl.u32 %v787, 7
  %v789 = vsub.s32 %v786, %v788
  %v790 = vrot.slane %v782, %v789
  %v791 = vcombine.high %v790, %v790
  %v792 = vlaneseq
  %v793 = vshrl.u32 %v792, 7
  %v794 = vsub.s32 0, %v793
  %v795 = vrot.slane %v790, %v794
  %v796 = vlaneseq
  %v797 = vshrl.u32 %v796, 7
  %v798 = vsub.s32 0, %v797
  %v799 = vrot.slane %v791, %v798
  %800 = vrot.lane.b32.xlu0 %v795, 32
  %v801 = vpop.permute.xlu0 %800
  %802 = vrot.lane.b32.xlu0 %v799, 32
  %v803 = vpop.permute.xlu0 %802
  %806 = vst.msk [vmem:[#allocation2 + $0x5] sm:$0x1] %vm315, %v801
  %807 = vst.msk [vmem:[#allocation2 + $0xd] sm:$0x1] %vm315, %v803
  %v808 = vpack.c.bf16 %v782, %v782
  %810 = vrot.lane.b32.xlu0 %v808, 32
  %v811 = vpop.permute.xlu0 %810
  %v813 = vsel %vm216, %v811, 0
  %815 = vmatprep.subr.bf16.mxu0 0
  %816 = vmatpush1.bf16.msra.mxu0 %v212
  %817 = vmatprep.subr.bf16.mxu0 0
  %818 = vmatpush1.bf16.msra.mxu0 %v213
  %819 = vmatprep.subr.bf16.mxu0 0
  %820 = vmatpush1.bf16.msra.mxu0 0
  %821 = vmatprep.subr.bf16.mxu0 0
  %822 = vmatpush1.bf16.msra.mxu0 0
  %823 = vmatprep.subr.bf16.mxu0 0
  %824 = vmatpush1.bf16.msra.mxu0 0
  %825 = vmatprep.subr.bf16.mxu0 0
  %826 = vmatpush1.bf16.msra.mxu0 0
  %827 = vmatprep.subr.bf16.mxu0 0
  %828 = vmatpush1.bf16.msra.mxu0 0
  %829 = vmatprep.subr.bf16.mxu0 0
  %830 = vmatpush1.bf16.msra.mxu0 0
  %831 = vmatprep.subr.bf16.mxu0 0
  %832 = vmatpush1.bf16.msra.mxu0 0
  %833 = vmatprep.subr.bf16.mxu0 0
  %834 = vmatpush1.bf16.msra.mxu0 0
  %835 = vmatprep.subr.bf16.mxu0 0
  %836 = vmatpush1.bf16.msra.mxu0 0
  %837 = vmatprep.subr.bf16.mxu0 0
  %838 = vmatpush1.bf16.msra.mxu0 0
  %839 = vmatprep.subr.bf16.mxu0 0
  %840 = vmatpush1.bf16.msra.mxu0 0
  %841 = vmatprep.subr.bf16.mxu0 0
  %842 = vmatpush1.bf16.msra.mxu0 0
  %843 = vmatprep.subr.bf16.mxu0 0
  %844 = vmatpush1.bf16.msra.mxu0 0
  %845 = vmatprep.subr.bf16.mxu0 0
  %846 = vmatpush1.bf16.msra.mxu0 0
  %847 = vmatprep.mubr.bf16.mxu0 0
  %848 = vmatmul.mubr.bf16.gmra.mrb[0].mxu0 %v813
  %v849 = vpop.f32.mrb[0].mxu0
  %v850 = vadd.f32 0.0, %v849
  %v851 = vpop.f32.mrb[0].mxu0
  %v852 = vpop.f32.mrb[0].mxu0
  %v853 = vpop.f32.mrb[0].mxu0
  %854 = vdwg.mxu0
  %v855 = vadd.f32 %v193, %v850
  %v856 = vadd.f32 %v855, %v265
  %v857 = vxor.u32 %v856, 2147483648
  %v858 = vmul.f32 %v857, 1.442695
  %v859 = vpow.pop %v858
  %v860 = vadd.f32 %v859, 1.0
  %v861 = vrcp.pop %v860
  %v862 = vmul.f32 1.0, %v861
  %v863 = vtanh.pop %v856
  %v864 = vmul.f32 %v862, %v776
  %866 = vrot.lane.b32.xlu0 %v863, 64
  %v867 = vpop.permute.xlu0 %866
  %v869 = vmul.f32 %v862, %v867
  %871 = vrot.lane.b32.xlu0 %v869, 32
  %v872 = vpop.permute.xlu0 %871
  %v874 = vadd.f32 %v864, %v872
  %v875 = vtanh.pop %v874
  %877 = vrot.lane.b32.xlu0 %v875, 64
  %v878 = vpop.permute.xlu0 %877
  %v880 = vmul.f32 %v862, %v878
  %v883 = vunpack.c.l.s4 1966171168
  %v884 = vunpack.c.0.s8 %v883
  %v885 = vlaneseq
  %v886 = vshrl.u32 %v885, 7
  %v887 = vsub.s32 %v884, %v886
  %v888 = vrot.slane %v880, %v887
  %v889 = vcombine.high %v888, %v888
  %v890 = vlaneseq
  %v891 = vshrl.u32 %v890, 7
  %v892 = vsub.s32 0, %v891
  %v893 = vrot.slane %v888, %v892
  %v894 = vlaneseq
  %v895 = vshrl.u32 %v894, 7
  %v896 = vsub.s32 0, %v895
  %v897 = vrot.slane %v889, %v896
  %898 = vrot.lane.b32.xlu0 %v893, 32
  %v899 = vpop.permute.xlu0 %898
  %900 = vrot.lane.b32.xlu0 %v897, 32
  %v901 = vpop.permute.xlu0 %900
  %904 = vst.msk [vmem:[#allocation2 + $0x6] sm:$0x1] %vm315, %v899
  %905 = vst.msk [vmem:[#allocation2 + $0xe] sm:$0x1] %vm315, %v901
  %v906 = vpack.c.bf16 %v880, %v880
  %908 = vrot.lane.b32.xlu0 %v906, 32
  %v909 = vpop.permute.xlu0 %908
  %v911 = vsel %vm216, %v909, 0
  %913 = vmatprep.subr.bf16.mxu0 0
  %914 = vmatpush1.bf16.msra.mxu0 %v212
  %915 = vmatprep.subr.bf16.mxu0 0
  %916 = vmatpush1.bf16.msra.mxu0 %v213
  %917 = vmatprep.subr.bf16.mxu0 0
  %918 = vmatpush1.bf16.msra.mxu0 0
  %919 = vmatprep.subr.bf16.mxu0 0
  %920 = vmatpush1.bf16.msra.mxu0 0
  %921 = vmatprep.subr.bf16.mxu0 0
  %922 = vmatpush1.bf16.msra.mxu0 0
  %923 = vmatprep.subr.bf16.mxu0 0
  %924 = vmatpush1.bf16.msra.mxu0 0
  %925 = vmatprep.subr.bf16.mxu0 0
  %926 = vmatpush1.bf16.msra.mxu0 0
  %927 = vmatprep.subr.bf16.mxu0 0
  %928 = vmatpush1.bf16.msra.mxu0 0
  %929 = vmatprep.subr.bf16.mxu0 0
  %930 = vmatpush1.bf16.msra.mxu0 0
  %931 = vmatprep.subr.bf16.mxu0 0
  %932 = vmatpush1.bf16.msra.mxu0 0
  %933 = vmatprep.subr.bf16.mxu0 0
  %934 = vmatpush1.bf16.msra.mxu0 0
  %935 = vmatprep.subr.bf16.mxu0 0
  %936 = vmatpush1.bf16.msra.mxu0 0
  %937 = vmatprep.subr.bf16.mxu0 0
  %938 = vmatpush1.bf16.msra.mxu0 0
  %939 = vmatprep.subr.bf16.mxu0 0
  %940 = vmatpush1.bf16.msra.mxu0 0
  %941 = vmatprep.subr.bf16.mxu0 0
  %942 = vmatpush1.bf16.msra.mxu0 0
  %943 = vmatprep.subr.bf16.mxu0 0
  %944 = vmatpush1.bf16.msra.mxu0 0
  %945 = vmatprep.mubr.bf16.mxu0 0
  %946 = vmatmul.mubr.bf16.gmra.mrb[0].mxu0 %v911
  %v947 = vpop.f32.mrb[0].mxu0
  %v948 = vadd.f32 0.0, %v947
  %v949 = vpop.f32.mrb[0].mxu0
  %v950 = vpop.f32.mrb[0].mxu0
  %v951 = vpop.f32.mrb[0].mxu0
  %952 = vdwg.mxu0
  %v953 = vadd.f32 %v195, %v948
  %v954 = vadd.f32 %v953, %v265
  %v955 = vxor.u32 %v954, 2147483648
  %v956 = vmul.f32 %v955, 1.442695
  %v957 = vpow.pop %v956
  %v958 = vadd.f32 %v957, 1.0
  %v959 = vrcp.pop %v958
  %v960 = vmul.f32 1.0, %v959
  %v961 = vtanh.pop %v954
  %v962 = vmul.f32 %v960, %v874
  %964 = vrot.lane.b32.xlu0 %v961, 64
  %v965 = vpop.permute.xlu0 %964
  %v967 = vmul.f32 %v960, %v965
  %969 = vrot.lane.b32.xlu0 %v967, 32
  %v970 = vpop.permute.xlu0 %969
  %v972 = vadd.f32 %v962, %v970
  %v973 = vtanh.pop %v972
  %975 = vrot.lane.b32.xlu0 %v973, 64
  %v976 = vpop.permute.xlu0 %975
  %v978 = vmul.f32 %v960, %v976
  %v981 = vunpack.c.l.s4 1966171168
  %v982 = vunpack.c.0.s8 %v981
  %v983 = vlaneseq
  %v984 = vshrl.u32 %v983, 7
  %v985 = vsub.s32 %v982, %v984
  %v986 = vrot.slane %v978, %v985
  %v987 = vcombine.high %v986, %v986
  %v988 = vlaneseq
  %v989 = vshrl.u32 %v988, 7
  %v990 = vsub.s32 0, %v989
  %v991 = vrot.slane %v986, %v990
  %v992 = vlaneseq
  %v993 = vshrl.u32 %v992, 7
  %v994 = vsub.s32 0, %v993
  %v995 = vrot.slane %v987, %v994
  %996 = vrot.lane.b32.xlu0 %v991, 32
  %v997 = vpop.permute.xlu0 %996
  %998 = vrot.lane.b32.xlu0 %v995, 32
  %v999 = vpop.permute.xlu0 %998
  %1002 = vst.msk [vmem:[#allocation2 + $0x7] sm:$0x1] %vm315, %v997
  %1003 = vst.msk [vmem:[#allocation2 + $0xf] sm:$0x1] %vm315, %v999
  %v1004 = vld [vmem:[#allocation2] sm:$0xff]
  %v1005 = vld [vmem:[#allocation2 + $0x8] sm:$0xff]
  %v1007 = vlaneseq
  %v1008 = vshrl.u32 %v1007, 7
  %v1009 = vsub.s32 0, %v1008
  %v1010 = vrot.slane %v62, %v1009
  %v1012 = vlaneseq
  %v1013 = vand.u32 %v1012, 127
  %v1014 = vpack.c.bf16 %v1010, %v1010
  %v1015 = vpack.c.bf16 %v978, %v978
  %1017 = vrot.lane.b32.xlu0 %v1015, 32
  %v1018 = vpop.permute.xlu0 %1017
  %v1023 = vunpack.c.l.b16 %v57
  %v1024 = vunpack.c.l.b16 %v58
  %v1025 = vunpack.c.l.b16 %v59
  %v1026 = vunpack.c.l.b16 %v60
  %v1027 = vpack.c.b16 %v1024, %v1023
  %v1028 = vpack.c.b16 %v1026, %v1025
  %v1032 = vsel %vm216, %v1018, 0
  %1034 = vmatprep.subr.bf16.mxu0 0
  %1035 = vmatpush1.bf16.msra.mxu0 %v1027
  %1036 = vmatprep.subr.bf16.mxu0 0
  %1037 = vmatpush1.bf16.msra.mxu0 %v1028
  %1038 = vmatprep.subr.bf16.mxu0 0
  %1039 = vmatpush1.bf16.msra.mxu0 0
  %1040 = vmatprep.subr.bf16.mxu0 0
  %1041 = vmatpush1.bf16.msra.mxu0 0
  %1042 = vmatprep.subr.bf16.mxu0 0
  %1043 = vmatpush1.bf16.msra.mxu0 0
  %1044 = vmatprep.subr.bf16.mxu0 0
  %1045 = vmatpush1.bf16.msra.mxu0 0
  %1046 = vmatprep.subr.bf16.mxu0 0
  %1047 = vmatpush1.bf16.msra.mxu0 0
  %1048 = vmatprep.subr.bf16.mxu0 0
  %1049 = vmatpush1.bf16.msra.mxu0 0
  %1050 = vmatprep.subr.bf16.mxu0 0
  %1051 = vmatpush1.bf16.msra.mxu0 0
  %1052 = vmatprep.subr.bf16.mxu0 0
  %1053 = vmatpush1.bf16.msra.mxu0 0
  %1054 = vmatprep.subr.bf16.mxu0 0
  %1055 = vmatpush1.bf16.msra.mxu0 0
  %1056 = vmatprep.subr.bf16.mxu0 0
  %1057 = vmatpush1.bf16.msra.mxu0 0
  %1058 = vmatprep.subr.bf16.mxu0 0
  %1059 = vmatpush1.bf16.msra.mxu0 0
  %1060 = vmatprep.subr.bf16.mxu0 0
  %1061 = vmatpush1.bf16.msra.mxu0 0
  %1062 = vmatprep.subr.bf16.mxu0 0
  %1063 = vmatpush1.bf16.msra.mxu0 0
  %1064 = vmatprep.subr.bf16.mxu0 0
  %1065 = vmatpush1.bf16.msra.mxu0 0
  %1066 = vmatprep.mubr.bf16.mxu0 0
  %1067 = vmatmul.mubr.bf16.gmra.mrb[0].mxu0 %v1032
  %v1068 = vpop.f32.mrb[0].mxu0
  %v1069 = vadd.f32 0.0, %v1068
  %v1070 = vpop.f32.mrb[0].mxu0
  %v1071 = vpop.f32.mrb[0].mxu0
  %v1072 = vpop.f32.mrb[0].mxu0
  %1073 = vdwg.mxu0
  %v1076 = vunpack.c.l.b16 %v55
  %v1077 = vunpack.c.l.b16 %v56
  %v1078 = vpack.c.b16 %v1077, %v1076
  %v1081 = vsel %vm115, %v1014, 0
  %1083 = vmatprep.subr.bf16.mxu0 0
  %1084 = vmatpush1.bf16.msra.mxu0 %v1078
  %1085 = vmatprep.subr.bf16.mxu0 0
  %1086 = vmatpush1.bf16.msra.mxu0 0
  %1087 = vmatprep.subr.bf16.mxu0 0
  %1088 = vmatpush1.bf16.msra.mxu0 0
  %1089 = vmatprep.subr.bf16.mxu0 0
  %1090 = vmatpush1.bf16.msra.mxu0 0
  %1091 = vmatprep.subr.bf16.mxu0 0
  %1092 = vmatpush1.bf16.msra.mxu0 0
  %1093 = vmatprep.subr.bf16.mxu0 0
  %1094 = vmatpush1.bf16.msra.mxu0 0
  %1095 = vmatprep.subr.bf16.mxu0 0
  %1096 = vmatpush1.bf16.msra.mxu0 0
  %1097 = vmatprep.subr.bf16.mxu0 0
  %1098 = vmatpush1.bf16.msra.mxu0 0
  %1099 = vmatprep.subr.bf16.mxu0 0
  %1100 = vmatpush1.bf16.msra.mxu0 0
  %1101 = vmatprep.subr.bf16.mxu0 0
  %1102 = vmatpush1.bf16.msra.mxu0 0
  %1103 = vmatprep.subr.bf16.mxu0 0
  %1104 = vmatpush1.bf16.msra.mxu0 0
  %1105 = vmatprep.subr.bf16.mxu0 0
  %1106 = vmatpush1.bf16.msra.mxu0 0
  %1107 = vmatprep.subr.bf16.mxu0 0
  %1108 = vmatpush1.bf16.msra.mxu0 0
  %1109 = vmatprep.subr.bf16.mxu0 0
  %1110 = vmatpush1.bf16.msra.mxu0 0
  %1111 = vmatprep.subr.bf16.mxu0 0
  %1112 = vmatpush1.bf16.msra.mxu0 0
  %1113 = vmatprep.subr.bf16.mxu0 0
  %1114 = vmatpush1.bf16.msra.mxu0 0
  %1115 = vmatprep.mubr.bf16.mxu0 0
  %1116 = vmatmul.mubr.bf16.gmra.mrb[0].mxu0 %v1081
  %v1117 = vpop.f32.mrb[0].mxu0
  %v1118 = vadd.f32 %v1069, %v1117
  %v1119 = vpop.f32.mrb[0].mxu0
  %v1120 = vpop.f32.mrb[0].mxu0
  %v1121 = vpop.f32.mrb[0].mxu0
  %1122 = vdwg.mxu0
  %v1124 = vlaneseq
  %v1125 = vshrl.u32 %v1124, 7
  %v1126 = vsub.s32 0, %v1125
  %v1127 = vrot.slane %v61, %v1126
  %v1129 = vadd.f32 %v1118, %v1127
  %v1130 = vxor.u32 %v1129, 2147483648
  %v1131 = vmul.f32 %v1130, 1.442695
  %v1132 = vpow.pop %v1131
  %v1133 = vadd.f32 %v1132, 1.0
  %v1134 = vrcp.pop %v1133
  %v1135 = vmul.f32 1.0, %v1134
  %v1136 = vtanh.pop %v1129
  %v1137 = vmul.f32 %v1135, %v972
  %1139 = vrot.lane.b32.xlu0 %v1136, 64
  %v1140 = vpop.permute.xlu0 %1139
  %v1142 = vmul.f32 %v1135, %v1140
  %1144 = vrot.lane.b32.xlu0 %v1142, 32
  %v1145 = vpop.permute.xlu0 %1144
  %v1147 = vadd.f32 %v1137, %v1145
  %v1148 = vtanh.pop %v1147
  %1150 = vrot.lane.b32.xlu0 %v1148, 64
  %v1151 = vpop.permute.xlu0 %1150
  %v1153 = vmul.f32 %v1135, %v1151
  %v1156 = vunpack.c.l.s4 1966171168
  %v1157 = vunpack.c.0.s8 %v1156
  %v1158 = vlaneseq
  %v1159 = vshrl.u32 %v1158, 7
  %v1160 = vsub.s32 %v1157, %v1159
  %v1161 = vrot.slane %v1153, %v1160
  %v1162 = vcombine.high %v1161, %v1161
  %v1164 = vunpack.c.l.s4 1966171168
  %v1165 = vunpack.c.0.s8 %v1164
  %v1166 = vlaneseq
  %v1167 = vshrl.u32 %v1166, 7
  %v1168 = vsub.s32 %v1165, %v1167
  %v1169 = vrot.slane %v1161, %v1168
  %v1171 = vunpack.c.l.s4 1966171168
  %v1172 = vunpack.c.0.s8 %v1171
  %v1173 = vlaneseq
  %v1174 = vshrl.u32 %v1173, 7
  %v1175 = vsub.s32 %v1172, %v1174
  %v1176 = vrot.slane %v1162, %v1175
  %v1177 = vlaneseq
  %v1178 = vshrl.u32 %v1177, 7
  %v1179 = vsub.s32 0, %v1178
  %v1180 = vrot.slane %v1169, %v1179
  %v1181 = vlaneseq
  %v1182 = vshrl.u32 %v1181, 7
  %v1183 = vsub.s32 0, %v1182
  %v1184 = vrot.slane %v1176, %v1183
  %1189 = vrot.lane.b32.xlu0 %v1004, 96
  %v1190 = vpop.permute.xlu0 %1189
  %1191 = vrot.lane.b32.xlu0 %v1005, 96
  %v1192 = vpop.permute.xlu0 %1191
  %v1195 = vmul.f32 %v1180, %v1190
  %v1196 = vmul.f32 %v1184, %v1192
  %1199 = vrot.lane.b32.xlu0 %v1195, 32
  %v1200 = vpop.permute.xlu0 %1199
  %1201 = vrot.lane.b32.xlu0 %v1196, 32
  %v1202 = vpop.permute.xlu0 %1201
  %v1205 = vsel %vm216, %v1200, 0.0
  %1206 = vadd.xlane.f32.xlu0 %v1205
  %v1207 = vpop.xlane.xlu0 %1206
  %v1208 = vsel %vm216, %v1202, 0.0
  %1209 = vadd.xlane.f32.xlu0 %v1208
  %v1210 = vpop.xlane.xlu0 %1209
  %vm1211 = vcmp.gt.f32.partialorder 0.0, 0.0
  %v1212 = vsel %vm1211, -1e+09, %v1207
  %v1213 = vsel %vm1211, -1e+09, %v1210
  %v1216 = vlaneseq
  %v1217 = vshrl.u32 %v1216, 7
  %v1218 = vsub.s32 %v1013, %v1217
  %v1219 = vrot.slane %v1212, %v1218
  %v1220 = vlaneseq
  %v1221 = vshrl.u32 %v1220, 7
  %v1222 = vsub.s32 %v1013, %v1221
  %v1223 = vrot.slane %v1213, %v1222
  %vm1224 = vcmask 1041409
  %v1225 = vsel %vm1224, %v1223, %v1219
  %vm1227 = vcmask 58368
  %v1228 = vsel %vm1227, %v1225, -inf
  %1229 = vmax.xlane.f32.xlu0 %v1228
  %v1230 = vpop.xlane.xlu0 %1229
  %v1232 = vlaneseq
  %v1233 = vshrl.u32 %v1232, 7
  %v1234 = vsub.s32 0, %v1233
  %v1235 = vrot.slane %v1230, %v1234
  %v1236 = vlaneseq
  %v1237 = vshrl.u32 %v1236, 7
  %v1238 = vsub.s32 1, %v1237
  %v1239 = vrot.slane %v1230, %v1238
  %v1242 = vsub.f32 %v1212, %v1235
  %v1243 = vsub.f32 %v1213, %v1239
  %v1244 = vmul.f32 %v1242, 1.442695
  %v1245 = vpow.pop %v1244
  %v1246 = vmul.f32 %v1243, 1.442695
  %v1247 = vpow.pop %v1246
  %1250 = vset.pattern.permute.xlu0 0
  %1251 = vperm.xlu0 %1250, %v1245
  %v1252 = vpop.permute.xlu0 %1251
  %1253 = vset.pattern.permute.xlu0 0
  %1254 = vperm.xlu0 %1253, %v1247
  %v1255 = vpop.permute.xlu0 %1254
  %v1256 = vlaneseq
  %v1257 = vshrl.u32 %v1256, 7
  %v1258 = vsub.s32 %v1013, %v1257
  %v1259 = vrot.slane %v1252, %v1258
  %v1260 = vlaneseq
  %v1261 = vshrl.u32 %v1260, 7
  %v1262 = vsub.s32 %v1013, %v1261
  %v1263 = vrot.slane %v1255, %v1262
  %v1264 = vsel %vm1224, %v1263, %v1259
  %v1266 = vsel %vm1227, %v1264, 0.0
  %1267 = vadd.xlane.f32.xlu0 %v1266
  %v1268 = vpop.xlane.xlu0 %1267
  %v1270 = vlaneseq
  %v1271 = vshrl.u32 %v1270, 7
  %v1272 = vsub.s32 0, %v1271
  %v1273 = vrot.slane %v1268, %v1272
  %v1274 = vlaneseq
  %v1275 = vshrl.u32 %v1274, 7
  %v1276 = vsub.s32 1, %v1275
  %v1277 = vrot.slane %v1268, %v1276
  %v1280 = vrcp.pop %v1273
  %v1281 = vmul.f32 %v1245, %v1280
  %v1282 = vrcp.pop %v1277
  %v1283 = vmul.f32 %v1247, %v1282
  %1285 = vset.pattern.permute.xlu0 0
  %1286 = vperm.xlu0 %1285, %v1281
  %v1287 = vpop.permute.xlu0 %1286
  %1290 = vset.pattern.permute.xlu0 0
  %1291 = vperm.xlu0 %1290, %v1283
  %v1292 = vpop.permute.xlu0 %1291
  %v1294 = vmul.f32 %v1287, %v1004
  %v1295 = vmul.f32 %v1292, %v1005
  %v1296 = vsel %vm216, %v1294, 0.0
  %v1297 = vrot.slane %v1296, 4
  %v1298 = vadd.f32 %v1296, %v1297
  %v1299 = vrot.slane %v1298, 2
  %v1300 = vadd.f32 %v1298, %v1299
  %v1301 = vrot.slane %v1300, 1
  %v1302 = vadd.f32 %v1300, %v1301
  %v1303 = vsel %vm216, %v1295, 0.0
  %v1304 = vrot.slane %v1303, 4
  %v1305 = vadd.f32 %v1303, %v1304
  %v1306 = vrot.slane %v1305, 2
  %v1307 = vadd.f32 %v1305, %v1306
  %v1308 = vrot.slane %v1307, 1
  %v1309 = vadd.f32 %v1307, %v1308
  %v1310 = vmul.f32 %v1302, %v1004
  %v1311 = vmul.f32 %v1309, %v1005
  %v1312 = vsel %vm216, %v1310, 0.0
  %1313 = vadd.xlane.f32.xlu0 %v1312
  %v1314 = vpop.xlane.xlu0 %1313
  %v1315 = vsel %vm216, %v1311, 0.0
  %1316 = vadd.xlane.f32.xlu0 %v1315
  %v1317 = vpop.xlane.xlu0 %1316
  %v1318 = vtanh.pop %v1314
  %v1319 = vtanh.pop %v1317
  %v1320 = vmul.f32 %v1318, 10.0
  %v1321 = vmul.f32 %v1319, 10.0
  %v1322 = vsel %vm1211, -1e+09, %v1320
  %v1323 = vsel %vm1211, -1e+09, %v1321
  %v1326 = vlaneseq
  %v1327 = vshrl.u32 %v1326, 7
  %v1328 = vsub.s32 %v1013, %v1327
  %v1329 = vrot.slane %v1322, %v1328
  %v1330 = vlaneseq
  %v1331 = vshrl.u32 %v1330, 7
  %v1332 = vsub.s32 %v1013, %v1331
  %v1333 = vrot.slane %v1323, %v1332
  %v1334 = vsel %vm1224, %v1333, %v1329
  %v1336 = vsel %vm1227, %v1334, -inf
  %1337 = vmax.xlane.f32.xlu0 %v1336
  %v1338 = vpop.xlane.xlu0 %1337
  %v1340 = vlaneseq
  %v1341 = vshrl.u32 %v1340, 7
  %v1342 = vsub.s32 0, %v1341
  %v1343 = vrot.slane %v1338, %v1342
  %v1344 = vlaneseq
  %v1345 = vshrl.u32 %v1344, 7
  %v1346 = vsub.s32 1, %v1345
  %v1347 = vrot.slane %v1338, %v1346
  %v1350 = vsub.f32 %v1322, %v1343
  %v1351 = vsub.f32 %v1323, %v1347
  %v1352 = vmul.f32 %v1350, 1.442695
  %v1353 = vpow.pop %v1352
  %v1354 = vmul.f32 %v1351, 1.442695
  %v1355 = vpow.pop %v1354
  %1358 = vset.pattern.permute.xlu0 0
  %1359 = vperm.xlu0 %1358, %v1353
  %v1360 = vpop.permute.xlu0 %1359
  %1361 = vset.pattern.permute.xlu0 0
  %1362 = vperm.xlu0 %1361, %v1355
  %v1363 = vpop.permute.xlu0 %1362
  %v1364 = vlaneseq
  %v1365 = vshrl.u32 %v1364, 7
  %v1366 = vsub.s32 %v1013, %v1365
  %v1367 = vrot.slane %v1360, %v1366
  %v1368 = vlaneseq
  %v1369 = vshrl.u32 %v1368, 7
  %v1370 = vsub.s32 %v1013, %v1369
  %v1371 = vrot.slane %v1363, %v1370
  %v1372 = vsel %vm1224, %v1371, %v1367
  %v1374 = vsel %vm1227, %v1372, 0.0
  %1375 = vadd.xlane.f32.xlu0 %v1374
  %v1376 = vpop.xlane.xlu0 %1375
  %v1378 = vlaneseq
  %v1379 = vshrl.u32 %v1378, 7
  %v1380 = vsub.s32 0, %v1379
  %v1381 = vrot.slane %v1376, %v1380
  %v1382 = vlaneseq
  %v1383 = vshrl.u32 %v1382, 7
  %v1384 = vsub.s32 1, %v1383
  %v1385 = vrot.slane %v1376, %v1384
  %v1388 = vrcp.pop %v1381
  %v1389 = vmul.f32 %v1353, %v1388
  %v1390 = vrcp.pop %v1385
  %v1391 = vmul.f32 %v1355, %v1390
  %vm1392 = vcmp.ge.f32.partialorder %v1322, %v1343
  %vm1393 = vcmp.ge.f32.partialorder %v1323, %v1347
  %1395 = vbcast.lane.b32.xlu0 %v1013, 256
  %v1396 = vpop.permute.xlu0 %1395
  %v1397 = vsel %vm1392, %v1396, 8
  %v1398 = vsel %vm1393, %v1396, 8
  %1399 = vset.pattern.permute.xlu0 0
  %1400 = vperm.xlu0 %1399, %v1397
  %v1401 = vpop.permute.xlu0 %1400
  %1402 = vset.pattern.permute.xlu0 0
  %1403 = vperm.xlu0 %1402, %v1398
  %v1404 = vpop.permute.xlu0 %1403
  %v1405 = vlaneseq
  %v1406 = vshrl.u32 %v1405, 7
  %v1407 = vsub.s32 %v1013, %v1406
  %v1408 = vrot.slane %v1401, %v1407
  %v1409 = vlaneseq
  %v1410 = vshrl.u32 %v1409, 7
  %v1411 = vsub.s32 %v1013, %v1410
  %v1412 = vrot.slane %v1404, %v1411
  %v1413 = vsel %vm1224, %v1412, %v1408
  %v1414 = vsel %vm1227, %v1413, 2147483647
  %v1415 = vand.u32 %v1414, 65535
  %v1416 = vshra.s32 %v1414, 16
  %v1417 = vcvt.s32.f32 %v1415
  %v1418 = vcvt.s32.f32 %v1416
  %1419 = vmin.xlane.f32.xlu0 %v1418
  %v1420 = vpop.xlane.xlu0 %1419
  %vm1421 = vcmp.eq.f32.partialorder %v1418, %v1420
  %v1422 = vsel %vm1421, %v1417, inf
  %1423 = vmin.xlane.f32.xlu0 %v1422
  %v1424 = vpop.xlane.xlu0 %1423
  %v1425 = vcvt.f32.s32 %v1424
  %v1426 = vcvt.f32.s32 %v1420
  %v1427 = vshll.u32 %v1426, 16
  %v1428 = vadd.s32 %v1427, %v1425
  %vm1429 = vcmp.eq.s32.totalorder %v1013, %v1428
  %v1430 = vsel %vm1429, 1, 0
  %v1431 = vcvt.s32.f32 %v1430
  %v1433 = vlaneseq
  %v1434 = vshrl.u32 %v1433, 7
  %v1435 = vsub.s32 0, %v1434
  %v1436 = vrot.slane %v1431, %v1435
  %1438 = vbcast.lane.b32.xlu0 %v1436, 256
  %v1439 = vpop.permute.xlu0 %1438
  %v1440 = vlaneseq
  %v1441 = vshrl.u32 %v1440, 7
  %v1442 = vsub.s32 1, %v1441
  %v1443 = vrot.slane %v1431, %v1442
  %1445 = vbcast.lane.b32.xlu0 %v1443, 256
  %v1446 = vpop.permute.xlu0 %1445
  %v1449 = vmul.f32 %v1389, %v1439
  %v1450 = vmul.f32 %v1391, %v1446
  %1453 = vset.pattern.permute.xlu0 0
  %1454 = vperm.xlu0 %1453, %v1449
  %v1455 = vpop.permute.xlu0 %1454
  %1456 = vset.pattern.permute.xlu0 0
  %1457 = vperm.xlu0 %1456, %v1450
  %v1458 = vpop.permute.xlu0 %1457
  %v1459 = vlaneseq
  %v1460 = vshrl.u32 %v1459, 7
  %v1461 = vsub.s32 %v1013, %v1460
  %v1462 = vrot.slane %v1455, %v1461
  %v1463 = vlaneseq
  %v1464 = vshrl.u32 %v1463, 7
  %v1465 = vsub.s32 %v1013, %v1464
  %v1466 = vrot.slane %v1458, %v1465
  %v1467 = vsel %vm1224, %v1466, %v1462
  %v1469 = vsel %vm1227, %v1467, 0.0
  %1470 = vadd.xlane.f32.xlu0 %v1469
  %v1471 = vpop.xlane.xlu0 %1470
  %v1472 = vlaneseq
  %v1473 = vshrl.u32 %v1472, 7
  %v1474 = vsub.s32 0, %v1473
  %v1475 = vrot.slane %v1431, %v1474
  %1477 = vbcast.lane.b32.xlu0 %v1475, 256
  %v1478 = vpop.permute.xlu0 %1477
  %v1479 = vlaneseq
  %v1480 = vshrl.u32 %v1479, 7
  %v1481 = vsub.s32 1, %v1480
  %v1482 = vrot.slane %v1431, %v1481
  %1484 = vbcast.lane.b32.xlu0 %v1482, 256
  %v1485 = vpop.permute.xlu0 %1484
  %v1486 = vmul.f32 %v1478, %v36
  %v1487 = vmul.f32 %v1485, %v37
  %vm1488 = vcmask 15360
  %v1489 = vsel %vm1488, %v1486, 0.0
  %v1490 = vrot.slane %v1489, 4
  %v1491 = vadd.f32 %v1489, %v1490
  %v1492 = vrot.slane %v1491, 2
  %v1493 = vadd.f32 %v1491, %v1492
  %v1494 = vrot.slane %v1493, 1
  %v1495 = vadd.f32 %v1493, %v1494
  %v1496 = vsel %vm1488, %v1487, 0.0
  %v1497 = vrot.slane %v1496, 4
  %v1498 = vadd.f32 %v1496, %v1497
  %v1499 = vrot.slane %v1498, 2
  %v1500 = vadd.f32 %v1498, %v1499
  %v1501 = vrot.slane %v1500, 1
  %v1502 = vadd.f32 %v1500, %v1501
  %v1503 = vmul.f32 %v1478, %v38
  %v1504 = vmul.f32 %v1485, %v39
  %v1505 = vsel %vm115, %v1503, 0.0
  %v1506 = vrot.slane %v1505, 4
  %v1507 = vadd.f32 %v1505, %v1506
  %v1508 = vrot.slane %v1507, 2
  %v1509 = vadd.f32 %v1507, %v1508
  %v1510 = vrot.slane %v1509, 1
  %v1511 = vadd.f32 %v1509, %v1510
  %v1512 = vsel %vm115, %v1504, 0.0
  %v1513 = vrot.slane %v1512, 4
  %v1514 = vadd.f32 %v1512, %v1513
  %v1515 = vrot.slane %v1514, 2
  %v1516 = vadd.f32 %v1514, %v1515
  %v1517 = vrot.slane %v1516, 1
  %v1518 = vadd.f32 %v1516, %v1517
  %v1519 = vadd.f32 %v1431, 0.0
  %vm1520 = vcmask 1024
  %1521 = vst.msk [vmem:[%s10] sm:$0x3] %vm1520, %v1471
  %v1522 = vcvt.s32.f32 %v1428
  %vm1523 = vcmask 66624
  %1524 = vst.msk [vmem:[%s10] sm:$0x3] %vm1523, %v1522
  %v1527 = vsel %vm1224, %v1502, %v1495
  %1528 = vrot.lane.b32.xlu0 %v1527, 16
  %v1529 = vpop.permute.xlu0 %1528
  %vm1531 = vcmask 140416
  %1532 = vst.msk [vmem:[%s10] sm:$0x3] %vm1531, %v1529
  %v1533 = vpack.c.bf16 %v1511, %v1511
  %v1534 = vpack.c.bf16 %v1518, %v1518
  %v1535 = vpack.c.bf16 %v1153, %v1153
  %1537 = vrot.lane.b32.xlu0 %v1535, 32
  %v1538 = vpop.permute.xlu0 %1537
  %v1540 = vsel %vm216, %v1538, 0
  %1542 = vmatprep.subr.bf16.mxu0 0
  %1543 = vmatpush1.bf16.msra.mxu0 %v1027
  %1544 = vmatprep.subr.bf16.mxu0 0
  %1545 = vmatpush1.bf16.msra.mxu0 %v1028
  %1546 = vmatprep.subr.bf16.mxu0 0
  %1547 = vmatpush1.bf16.msra.mxu0 0
  %1548 = vmatprep.subr.bf16.mxu0 0
  %1549 = vmatpush1.bf16.msra.mxu0 0
  %1550 = vmatprep.subr.bf16.mxu0 0
  %1551 = vmatpush1.bf16.msra.mxu0 0
  %1552 = vmatprep.subr.bf16.mxu0 0
  %1553 = vmatpush1.bf16.msra.mxu0 0
  %1554 = vmatprep.subr.bf16.mxu0 0
  %1555 = vmatpush1.bf16.msra.mxu0 0
  %1556 = vmatprep.subr.bf16.mxu0 0
  %1557 = vmatpush1.bf16.msra.mxu0 0
  %1558 = vmatprep.subr.bf16.mxu0 0
  %1559 = vmatpush1.bf16.msra.mxu0 0
  %1560 = vmatprep.subr.bf16.mxu0 0
  %1561 = vmatpush1.bf16.msra.mxu0 0
  %1562 = vmatprep.subr.bf16.mxu0 0
  %1563 = vmatpush1.bf16.msra.mxu0 0
  %1564 = vmatprep.subr.bf16.mxu0 0
  %1565 = vmatpush1.bf16.msra.mxu0 0
  %1566 = vmatprep.subr.bf16.mxu0 0
  %1567 = vmatpush1.bf16.msra.mxu0 0
  %1568 = vmatprep.subr.bf16.mxu0 0
  %1569 = vmatpush1.bf16.msra.mxu0 0
  %1570 = vmatprep.subr.bf16.mxu0 0
  %1571 = vmatpush1.bf16.msra.mxu0 0
  %1572 = vmatprep.subr.bf16.mxu0 0
  %1573 = vmatpush1.bf16.msra.mxu0 0
  %1574 = vmatprep.mubr.bf16.mxu0 0
  %1575 = vmatmul.mubr.bf16.gmra.mrb[0].mxu0 %v1540
  %v1576 = vpop.f32.mrb[0].mxu0
  %v1577 = vadd.f32 0.0, %v1576
  %v1578 = vpop.f32.mrb[0].mxu0
  %v1579 = vpop.f32.mrb[0].mxu0
  %v1580 = vpop.f32.mrb[0].mxu0
  %1581 = vdwg.mxu0
  %v1584 = vunpack.c.l.b16 %v1533
  %v1585 = vunpack.c.l.b16 %v1534
  %v1586 = vsel %vm1224, %v1585, %v1584
  %v1587 = vpack.c.b16 %v1586, %v1586
  %v1589 = vsel %vm115, %v1587, 0
  %1591 = vmatprep.subr.bf16.mxu0 0
  %1592 = vmatpush1.bf16.msra.mxu0 %v1078
  %1593 = vmatprep.subr.bf16.mxu0 0
  %1594 = vmatpush1.bf16.msra.mxu0 0
  %1595 = vmatprep.subr.bf16.mxu0 0
  %1596 = vmatpush1.bf16.msra.mxu0 0
  %1597 = vmatprep.subr.bf16.mxu0 0
  %1598 = vmatpush1.bf16.msra.mxu0 0
  %1599 = vmatprep.subr.bf16.mxu0 0
  %1600 = vmatpush1.bf16.msra.mxu0 0
  %1601 = vmatprep.subr.bf16.mxu0 0
  %1602 = vmatpush1.bf16.msra.mxu0 0
  %1603 = vmatprep.subr.bf16.mxu0 0
  %1604 = vmatpush1.bf16.msra.mxu0 0
  %1605 = vmatprep.subr.bf16.mxu0 0
  %1606 = vmatpush1.bf16.msra.mxu0 0
  %1607 = vmatprep.subr.bf16.mxu0 0
  %1608 = vmatpush1.bf16.msra.mxu0 0
  %1609 = vmatprep.subr.bf16.mxu0 0
  %1610 = vmatpush1.bf16.msra.mxu0 0
  %1611 = vmatprep.subr.bf16.mxu0 0
  %1612 = vmatpush1.bf16.msra.mxu0 0
  %1613 = vmatprep.subr.bf16.mxu0 0
  %1614 = vmatpush1.bf16.msra.mxu0 0
  %1615 = vmatprep.subr.bf16.mxu0 0
  %1616 = vmatpush1.bf16.msra.mxu0 0
  %1617 = vmatprep.subr.bf16.mxu0 0
  %1618 = vmatpush1.bf16.msra.mxu0 0
  %1619 = vmatprep.subr.bf16.mxu0 0
  %1620 = vmatpush1.bf16.msra.mxu0 0
  %1621 = vmatprep.subr.bf16.mxu0 0
  %1622 = vmatpush1.bf16.msra.mxu0 0
  %1623 = vmatprep.mubr.bf16.mxu0 0
  %1624 = vmatmul.mubr.bf16.gmra.mrb[0].mxu0 %v1589
  %v1625 = vpop.f32.mrb[0].mxu0
  %v1626 = vadd.f32 %v1577, %v1625
  %v1627 = vpop.f32.mrb[0].mxu0
  %v1628 = vpop.f32.mrb[0].mxu0
  %v1629 = vpop.f32.mrb[0].mxu0
  %1630 = vdwg.mxu0
  %v1631 = vadd.f32 %v1626, %v1127
  %v1632 = vxor.u32 %v1631, 2147483648
  %v1633 = vmul.f32 %v1632, 1.442695
  %v1634 = vpow.pop %v1633
  %v1635 = vadd.f32 %v1634, 1.0
  %v1636 = vrcp.pop %v1635
  %v1637 = vmul.f32 1.0, %v1636
  %v1638 = vtanh.pop %v1631
  %v1639 = vmul.f32 %v1637, %v1147
  %1641 = vrot.lane.b32.xlu0 %v1638, 64
  %v1642 = vpop.permute.xlu0 %1641
  %v1644 = vmul.f32 %v1637, %v1642
  %1646 = vrot.lane.b32.xlu0 %v1644, 32
  %v1647 = vpop.permute.xlu0 %1646
  %v1649 = vadd.f32 %v1639, %v1647
  %v1650 = vtanh.pop %v1649
  %1652 = vrot.lane.b32.xlu0 %v1650, 64
  %v1653 = vpop.permute.xlu0 %1652
  %v1655 = vmul.f32 %v1637, %v1653
  %v1658 = vunpack.c.l.s4 1966171168
  %v1659 = vunpack.c.0.s8 %v1658
  %v1660 = vlaneseq
  %v1661 = vshrl.u32 %v1660, 7
  %v1662 = vsub.s32 %v1659, %v1661
  %v1663 = vrot.slane %v1655, %v1662
  %v1664 = vcombine.high %v1663, %v1663
  %v1666 = vunpack.c.l.s4 1966171168
  %v1667 = vunpack.c.0.s8 %v1666
  %v1668 = vlaneseq
  %v1669 = vshrl.u32 %v1668, 7
  %v1670 = vsub.s32 %v1667, %v1669
  %v1671 = vrot.slane %v1663, %v1670
  %v1673 = vunpack.c.l.s4 1966171168
  %v1674 = vunpack.c.0.s8 %v1673
  %v1675 = vlaneseq
  %v1676 = vshrl.u32 %v1675, 7
  %v1677 = vsub.s32 %v1674, %v1676
  %v1678 = vrot.slane %v1664, %v1677
  %v1679 = vlaneseq
  %v1680 = vshrl.u32 %v1679, 7
  %v1681 = vsub.s32 0, %v1680
  %v1682 = vrot.slane %v1671, %v1681
  %v1683 = vlaneseq
  %v1684 = vshrl.u32 %v1683, 7
  %v1685 = vsub.s32 0, %v1684
  %v1686 = vrot.slane %v1678, %v1685
  %v1689 = vmul.f32 %v1682, %v1190
  %v1690 = vmul.f32 %v1686, %v1192
  %1693 = vrot.lane.b32.xlu0 %v1689, 32
  %v1694 = vpop.permute.xlu0 %1693
  %1695 = vrot.lane.b32.xlu0 %v1690, 32
  %v1696 = vpop.permute.xlu0 %1695
  %v1699 = vsel %vm216, %v1694, 0.0
  %1700 = vadd.xlane.f32.xlu0 %v1699
  %v1701 = vpop.xlane.xlu0 %1700
  %v1702 = vsel %vm216, %v1696, 0.0
  %1703 = vadd.xlane.f32.xlu0 %v1702
  %v1704 = vpop.xlane.xlu0 %1703
  %vm1705 = vcmp.gt.f32.partialorder %v1519, 0.0
  %v1708 = vlaneseq
  %v1709 = vshrl.u32 %v1708, 7
  %v1710 = vsub.s32 %v1013, %v1709
  %v1711 = vrot.slane %v1701, %v1710
  %v1712 = vlaneseq
  %v1713 = vshrl.u32 %v1712, 7
  %v1714 = vsub.s32 %v1013, %v1713
  %v1715 = vrot.slane %v1704, %v1714
  %v1716 = vsel %vm1224, %v1715, %v1711
  %v1718 = vsel %vm1705, -1e+09, %v1716
  %v1719 = vsel %vm1227, %v1718, -inf
  %1720 = vmax.xlane.f32.xlu0 %v1719
  %v1721 = vpop.xlane.xlu0 %1720
  %v1722 = vsub.f32 %v1718, %v1721
  %v1723 = vmul.f32 %v1722, 1.442695
  %v1724 = vpow.pop %v1723
  %v1725 = vsel %vm1227, %v1724, 0.0
  %1726 = vadd.xlane.f32.xlu0 %v1725
  %v1727 = vpop.xlane.xlu0 %1726
  %v1728 = vrcp.pop %v1727
  %v1729 = vmul.f32 %v1724, %v1728
  %v1730 = vlaneseq
  %v1731 = vshrl.u32 %v1730, 7
  %v1732 = vsub.s32 0, %v1731
  %v1733 = vrot.slane %v1729, %v1732
  %1735 = vbcast.lane.b32.xlu0 %v1733, 256
  %v1736 = vpop.permute.xlu0 %1735
  %v1737 = vlaneseq
  %v1738 = vshrl.u32 %v1737, 7
  %v1739 = vsub.s32 1, %v1738
  %v1740 = vrot.slane %v1729, %v1739
  %1742 = vbcast.lane.b32.xlu0 %v1740, 256
  %v1743 = vpop.permute.xlu0 %1742
  %v1744 = vmul.f32 %v1736, %v1004
  %v1745 = vmul.f32 %v1743, %v1005
  %v1746 = vsel %vm216, %v1744, 0.0
  %v1747 = vrot.slane %v1746, 4
  %v1748 = vadd.f32 %v1746, %v1747
  %v1749 = vrot.slane %v1748, 2
  %v1750 = vadd.f32 %v1748, %v1749
  %v1751 = vrot.slane %v1750, 1
  %v1752 = vadd.f32 %v1750, %v1751
  %v1753 = vsel %vm216, %v1745, 0.0
  %v1754 = vrot.slane %v1753, 4
  %v1755 = vadd.f32 %v1753, %v1754
  %v1756 = vrot.slane %v1755, 2
  %v1757 = vadd.f32 %v1755, %v1756
  %v1758 = vrot.slane %v1757, 1
  %v1759 = vadd.f32 %v1757, %v1758
  %v1760 = vmul.f32 %v1752, %v1004
  %v1761 = vmul.f32 %v1759, %v1005
  %v1762 = vsel %vm216, %v1760, 0.0
  %1763 = vadd.xlane.f32.xlu0 %v1762
  %v1764 = vpop.xlane.xlu0 %1763
  %v1765 = vsel %vm216, %v1761, 0.0
  %1766 = vadd.xlane.f32.xlu0 %v1765
  %v1767 = vpop.xlane.xlu0 %1766
  %v1768 = vtanh.pop %v1764
  %v1769 = vtanh.pop %v1767
  %v1770 = vmul.f32 %v1768, 10.0
  %v1771 = vmul.f32 %v1769, 10.0
  %v1774 = vlaneseq
  %v1775 = vshrl.u32 %v1774, 7
  %v1776 = vsub.s32 %v1013, %v1775
  %v1777 = vrot.slane %v1770, %v1776
  %v1778 = vlaneseq
  %v1779 = vshrl.u32 %v1778, 7
  %v1780 = vsub.s32 %v1013, %v1779
  %v1781 = vrot.slane %v1771, %v1780
  %v1782 = vsel %vm1224, %v1781, %v1777
  %v1784 = vsel %vm1705, -1e+09, %v1782
  %v1785 = vsel %vm1227, %v1784, -inf
  %1786 = vmax.xlane.f32.xlu0 %v1785
  %v1787 = vpop.xlane.xlu0 %1786
  %v1788 = vsub.f32 %v1784, %v1787
  %v1789 = vmul.f32 %v1788, 1.442695
  %v1790 = vpow.pop %v1789
  %v1791 = vsel %vm1227, %v1790, 0.0
  %1792 = vadd.xlane.f32.xlu0 %v1791
  %v1793 = vpop.xlane.xlu0 %1792
  %v1794 = vrcp.pop %v1793
  %v1795 = vmul.f32 %v1790, %v1794
  %vm1796 = vcmp.ge.f32.partialorder %v1784, %v1787
  %v1797 = vsel %vm1796, %v1013, 8
  %v1798 = vsel %vm1227, %v1797, 2147483647
  %v1799 = vand.u32 %v1798, 65535
  %v1800 = vshra.s32 %v1798, 16
  %v1801 = vcvt.s32.f32 %v1799
  %v1802 = vcvt.s32.f32 %v1800
  %1803 = vmin.xlane.f32.xlu0 %v1802
  %v1804 = vpop.xlane.xlu0 %1803
  %vm1805 = vcmp.eq.f32.partialorder %v1802, %v1804
  %v1806 = vsel %vm1805, %v1801, inf
  %1807 = vmin.xlane.f32.xlu0 %v1806
  %v1808 = vpop.xlane.xlu0 %1807
  %v1809 = vcvt.f32.s32 %v1808
  %v1810 = vcvt.f32.s32 %v1804
  %v1811 = vshll.u32 %v1810, 16
  %v1812 = vadd.s32 %v1811, %v1809
  %vm1813 = vcmp.eq.s32.totalorder %v1013, %v1812
  %v1814 = vsel %vm1813, 1, 0
  %v1815 = vcvt.s32.f32 %v1814
  %v1816 = vmul.f32 %v1795, %v1815
  %v1817 = vsel %vm1227, %v1816, 0.0
  %1818 = vadd.xlane.f32.xlu0 %v1817
  %v1819 = vpop.xlane.xlu0 %1818
  %v1820 = vlaneseq
  %v1821 = vshrl.u32 %v1820, 7
  %v1822 = vsub.s32 0, %v1821
  %v1823 = vrot.slane %v1815, %v1822
  %1825 = vbcast.lane.b32.xlu0 %v1823, 256
  %v1826 = vpop.permute.xlu0 %1825
  %v1827 = vlaneseq
  %v1828 = vshrl.u32 %v1827, 7
  %v1829 = vsub.s32 1, %v1828
  %v1830 = vrot.slane %v1815, %v1829
  %1832 = vbcast.lane.b32.xlu0 %v1830, 256
  %v1833 = vpop.permute.xlu0 %1832
  %v1834 = vmul.f32 %v1826, %v36
  %v1835 = vmul.f32 %v1833, %v37
  %v1836 = vsel %vm1488, %v1834, 0.0
  %v1837 = vrot.slane %v1836, 4
  %v1838 = vadd.f32 %v1836, %v1837
  %v1839 = vrot.slane %v1838, 2
  %v1840 = vadd.f32 %v1838, %v1839
  %v1841 = vrot.slane %v1840, 1
  %v1842 = vadd.f32 %v1840, %v1841
  %v1843 = vsel %vm1488, %v1835, 0.0
  %v1844 = vrot.slane %v1843, 4
  %v1845 = vadd.f32 %v1843, %v1844
  %v1846 = vrot.slane %v1845, 2
  %v1847 = vadd.f32 %v1845, %v1846
  %v1848 = vrot.slane %v1847, 1
  %v1849 = vadd.f32 %v1847, %v1848
  %v1850 = vmul.f32 %v1826, %v38
  %v1851 = vmul.f32 %v1833, %v39
  %v1852 = vsel %vm115, %v1850, 0.0
  %v1853 = vrot.slane %v1852, 4
  %v1854 = vadd.f32 %v1852, %v1853
  %v1855 = vrot.slane %v1854, 2
  %v1856 = vadd.f32 %v1854, %v1855
  %v1857 = vrot.slane %v1856, 1
  %v1858 = vadd.f32 %v1856, %v1857
  %v1859 = vsel %vm115, %v1851, 0.0
  %v1860 = vrot.slane %v1859, 4
  %v1861 = vadd.f32 %v1859, %v1860
  %v1862 = vrot.slane %v1861, 2
  %v1863 = vadd.f32 %v1861, %v1862
  %v1864 = vrot.slane %v1863, 1
  %v1865 = vadd.f32 %v1863, %v1864
  %v1866 = vadd.f32 %v1519, %v1815
  %v1867 = vsub.f32 %v1842, %v1495
  %v1868 = vsub.f32 %v1849, %v1502
  %v1869 = vmul.f32 %v1867, %v1867
  %v1870 = vmul.f32 %v1868, %v1868
  %v1873 = vsel %vm1224, %v1870, %v1869
  %vm1875 = vcmask 9216
  %v1876 = vsel %vm1875, %v1873, 0.0
  %1877 = vadd.xlane.f32.xlu0 %v1876
  %v1878 = vpop.xlane.xlu0 %1877
  %v1879 = vrsqrt.pop %v1878
  %v1880 = vmul.f32 %v1878, %v1879
  %vm1881 = vcmp.eq.f32.partialorder %v1878, inf
  %v1882 = vsel %vm1881, %v1878, %v1880
  %vm1883 = vcmp.eq.f32.partialorder %v1878, 0.0
  %v1884 = vand.u32 %v1878, 2147483648
  %v1885 = vsel %vm1883, %v1884, %v1882
  %v1886 = vadd.f32 %v1885, 0.0
  %vm1887 = vcmask 9224
  %1888 = vst.msk [vmem:[%s10] sm:$0x3] %vm1887, %v1819
  %v1889 = vcvt.s32.f32 %v1812
  %vm1890 = vcmask 74824
  %1891 = vst.msk [vmem:[%s10] sm:$0x3] %vm1890, %v1889
  %v1894 = vsel %vm1224, %v1849, %v1842
  %1895 = vrot.lane.b32.xlu0 %v1894, 18
  %v1896 = vpop.permute.xlu0 %1895
  %vm1898 = vcmask 156816
  %1899 = vst.msk [vmem:[%s10] sm:$0x3] %vm1898, %v1896
  %v1900 = vpack.c.bf16 %v1858, %v1858
  %v1901 = vpack.c.bf16 %v1865, %v1865
  %v1902 = vpack.c.bf16 %v1655, %v1655
  %1904 = vrot.lane.b32.xlu0 %v1902, 32
  %v1905 = vpop.permute.xlu0 %1904
  %v1907 = vsel %vm216, %v1905, 0
  %1909 = vmatprep.subr.bf16.mxu0 0
  %1910 = vmatpush1.bf16.msra.mxu0 %v1027
  %1911 = vmatprep.subr.bf16.mxu0 0
  %1912 = vmatpush1.bf16.msra.mxu0 %v1028
  %1913 = vmatprep.subr.bf16.mxu0 0
  %1914 = vmatpush1.bf16.msra.mxu0 0
  %1915 = vmatprep.subr.bf16.mxu0 0
  %1916 = vmatpush1.bf16.msra.mxu0 0
  %1917 = vmatprep.subr.bf16.mxu0 0
  %1918 = vmatpush1.bf16.msra.mxu0 0
  %1919 = vmatprep.subr.bf16.mxu0 0
  %1920 = vmatpush1.bf16.msra.mxu0 0
  %1921 = vmatprep.subr.bf16.mxu0 0
  %1922 = vmatpush1.bf16.msra.mxu0 0
  %1923 = vmatprep.subr.bf16.mxu0 0
  %1924 = vmatpush1.bf16.msra.mxu0 0
  %1925 = vmatprep.subr.bf16.mxu0 0
  %1926 = vmatpush1.bf16.msra.mxu0 0
  %1927 = vmatprep.subr.bf16.mxu0 0
  %1928 = vmatpush1.bf16.msra.mxu0 0
  %1929 = vmatprep.subr.bf16.mxu0 0
  %1930 = vmatpush1.bf16.msra.mxu0 0
  %1931 = vmatprep.subr.bf16.mxu0 0
  %1932 = vmatpush1.bf16.msra.mxu0 0
  %1933 = vmatprep.subr.bf16.mxu0 0
  %1934 = vmatpush1.bf16.msra.mxu0 0
  %1935 = vmatprep.subr.bf16.mxu0 0
  %1936 = vmatpush1.bf16.msra.mxu0 0
  %1937 = vmatprep.subr.bf16.mxu0 0
  %1938 = vmatpush1.bf16.msra.mxu0 0
  %1939 = vmatprep.subr.bf16.mxu0 0
  %1940 = vmatpush1.bf16.msra.mxu0 0
  %1941 = vmatprep.mubr.bf16.mxu0 0
  %1942 = vmatmul.mubr.bf16.gmra.mrb[0].mxu0 %v1907
  %v1943 = vpop.f32.mrb[0].mxu0
  %v1944 = vadd.f32 0.0, %v1943
  %v1945 = vpop.f32.mrb[0].mxu0
  %v1946 = vpop.f32.mrb[0].mxu0
  %v1947 = vpop.f32.mrb[0].mxu0
  %1948 = vdwg.mxu0
  %v1951 = vunpack.c.l.b16 %v1900
  %v1952 = vunpack.c.l.b16 %v1901
  %v1953 = vsel %vm1224, %v1952, %v1951
  %v1954 = vpack.c.b16 %v1953, %v1953
  %v1956 = vsel %vm115, %v1954, 0
  %1958 = vmatprep.subr.bf16.mxu0 0
  %1959 = vmatpush1.bf16.msra.mxu0 %v1078
  %1960 = vmatprep.subr.bf16.mxu0 0
  %1961 = vmatpush1.bf16.msra.mxu0 0
  %1962 = vmatprep.subr.bf16.mxu0 0
  %1963 = vmatpush1.bf16.msra.mxu0 0
  %1964 = vmatprep.subr.bf16.mxu0 0
  %1965 = vmatpush1.bf16.msra.mxu0 0
  %1966 = vmatprep.subr.bf16.mxu0 0
  %1967 = vmatpush1.bf16.msra.mxu0 0
  %1968 = vmatprep.subr.bf16.mxu0 0
  %1969 = vmatpush1.bf16.msra.mxu0 0
  %1970 = vmatprep.subr.bf16.mxu0 0
  %1971 = vmatpush1.bf16.msra.mxu0 0
  %1972 = vmatprep.subr.bf16.mxu0 0
  %1973 = vmatpush1.bf16.msra.mxu0 0
  %1974 = vmatprep.subr.bf16.mxu0 0
  %1975 = vmatpush1.bf16.msra.mxu0 0
  %1976 = vmatprep.subr.bf16.mxu0 0
  %1977 = vmatpush1.bf16.msra.mxu0 0
  %1978 = vmatprep.subr.bf16.mxu0 0
  %1979 = vmatpush1.bf16.msra.mxu0 0
  %1980 = vmatprep.subr.bf16.mxu0 0
  %1981 = vmatpush1.bf16.msra.mxu0 0
  %1982 = vmatprep.subr.bf16.mxu0 0
  %1983 = vmatpush1.bf16.msra.mxu0 0
  %1984 = vmatprep.subr.bf16.mxu0 0
  %1985 = vmatpush1.bf16.msra.mxu0 0
  %1986 = vmatprep.subr.bf16.mxu0 0
  %1987 = vmatpush1.bf16.msra.mxu0 0
  %1988 = vmatprep.subr.bf16.mxu0 0
  %1989 = vmatpush1.bf16.msra.mxu0 0
  %1990 = vmatprep.mubr.bf16.mxu0 0
  %1991 = vmatmul.mubr.bf16.gmra.mrb[0].mxu0 %v1956
  %v1992 = vpop.f32.mrb[0].mxu0
  %v1993 = vadd.f32 %v1944, %v1992
  %v1994 = vpop.f32.mrb[0].mxu0
  %v1995 = vpop.f32.mrb[0].mxu0
  %v1996 = vpop.f32.mrb[0].mxu0
  %1997 = vdwg.mxu0
  %v1998 = vadd.f32 %v1993, %v1127
  %v1999 = vxor.u32 %v1998, 2147483648
  %v2000 = vmul.f32 %v1999, 1.442695
  %v2001 = vpow.pop %v2000
  %v2002 = vadd.f32 %v2001, 1.0
  %v2003 = vrcp.pop %v2002
  %v2004 = vmul.f32 1.0, %v2003
  %v2005 = vtanh.pop %v1998
  %v2006 = vmul.f32 %v2004, %v1649
  %2008 = vrot.lane.b32.xlu0 %v2005, 64
  %v2009 = vpop.permute.xlu0 %2008
  %v2011 = vmul.f32 %v2004, %v2009
  %2013 = vrot.lane.b32.xlu0 %v2011, 32
  %v2014 = vpop.permute.xlu0 %2013
  %v2016 = vadd.f32 %v2006, %v2014
  %v2017 = vtanh.pop %v2016
  %2019 = vrot.lane.b32.xlu0 %v2017, 64
  %v2020 = vpop.permute.xlu0 %2019
  %v2022 = vmul.f32 %v2004, %v2020
  %v2025 = vunpack.c.l.s4 1966171168
  %v2026 = vunpack.c.0.s8 %v2025
  %v2027 = vlaneseq
  %v2028 = vshrl.u32 %v2027, 7
  %v2029 = vsub.s32 %v2026, %v2028
  %v2030 = vrot.slane %v2022, %v2029
  %v2031 = vcombine.high %v2030, %v2030
  %v2033 = vunpack.c.l.s4 1966171168
  %v2034 = vunpack.c.0.s8 %v2033
  %v2035 = vlaneseq
  %v2036 = vshrl.u32 %v2035, 7
  %v2037 = vsub.s32 %v2034, %v2036
  %v2038 = vrot.slane %v2030, %v2037
  %v2040 = vunpack.c.l.s4 1966171168
  %v2041 = vunpack.c.0.s8 %v2040
  %v2042 = vlaneseq
  %v2043 = vshrl.u32 %v2042, 7
  %v2044 = vsub.s32 %v2041, %v2043
  %v2045 = vrot.slane %v2031, %v2044
  %v2046 = vlaneseq
  %v2047 = vshrl.u32 %v2046, 7
  %v2048 = vsub.s32 0, %v2047
  %v2049 = vrot.slane %v2038, %v2048
  %v2050 = vlaneseq
  %v2051 = vshrl.u32 %v2050, 7
  %v2052 = vsub.s32 0, %v2051
  %v2053 = vrot.slane %v2045, %v2052
  %v2056 = vmul.f32 %v2049, %v1190
  %v2057 = vmul.f32 %v2053, %v1192
  %2060 = vrot.lane.b32.xlu0 %v2056, 32
  %v2061 = vpop.permute.xlu0 %2060
  %2062 = vrot.lane.b32.xlu0 %v2057, 32
  %v2063 = vpop.permute.xlu0 %2062
  %v2066 = vsel %vm216, %v2061, 0.0
  %2067 = vadd.xlane.f32.xlu0 %v2066
  %v2068 = vpop.xlane.xlu0 %2067
  %v2069 = vsel %vm216, %v2063, 0.0
  %2070 = vadd.xlane.f32.xlu0 %v2069
  %v2071 = vpop.xlane.xlu0 %2070
  %vm2072 = vcmp.gt.f32.partialorder %v1866, 0.0
  %v2075 = vlaneseq
  %v2076 = vshrl.u32 %v2075, 7
  %v2077 = vsub.s32 %v1013, %v2076
  %v2078 = vrot.slane %v2068, %v2077
  %v2079 = vlaneseq
  %v2080 = vshrl.u32 %v2079, 7
  %v2081 = vsub.s32 %v1013, %v2080
  %v2082 = vrot.slane %v2071, %v2081
  %v2083 = vsel %vm1224, %v2082, %v2078
  %v2085 = vsel %vm2072, -1e+09, %v2083
  %v2086 = vsel %vm1227, %v2085, -inf
  %2087 = vmax.xlane.f32.xlu0 %v2086
  %v2088 = vpop.xlane.xlu0 %2087
  %v2089 = vsub.f32 %v2085, %v2088
  %v2090 = vmul.f32 %v2089, 1.442695
  %v2091 = vpow.pop %v2090
  %v2092 = vsel %vm1227, %v2091, 0.0
  %2093 = vadd.xlane.f32.xlu0 %v2092
  %v2094 = vpop.xlane.xlu0 %2093
  %v2095 = vrcp.pop %v2094
  %v2096 = vmul.f32 %v2091, %v2095
  %v2097 = vlaneseq
  %v2098 = vshrl.u32 %v2097, 7
  %v2099 = vsub.s32 0, %v2098
  %v2100 = vrot.slane %v2096, %v2099
  %2102 = vbcast.lane.b32.xlu0 %v2100, 256
  %v2103 = vpop.permute.xlu0 %2102
  %v2104 = vlaneseq
  %v2105 = vshrl.u32 %v2104, 7
  %v2106 = vsub.s32 1, %v2105
  %v2107 = vrot.slane %v2096, %v2106
  %2109 = vbcast.lane.b32.xlu0 %v2107, 256
  %v2110 = vpop.permute.xlu0 %2109
  %v2111 = vmul.f32 %v2103, %v1004
  %v2112 = vmul.f32 %v2110, %v1005
  %v2113 = vsel %vm216, %v2111, 0.0
  %v2114 = vrot.slane %v2113, 4
  %v2115 = vadd.f32 %v2113, %v2114
  %v2116 = vrot.slane %v2115, 2
  %v2117 = vadd.f32 %v2115, %v2116
  %v2118 = vrot.slane %v2117, 1
  %v2119 = vadd.f32 %v2117, %v2118
  %v2120 = vsel %vm216, %v2112, 0.0
  %v2121 = vrot.slane %v2120, 4
  %v2122 = vadd.f32 %v2120, %v2121
  %v2123 = vrot.slane %v2122, 2
  %v2124 = vadd.f32 %v2122, %v2123
  %v2125 = vrot.slane %v2124, 1
  %v2126 = vadd.f32 %v2124, %v2125
  %v2127 = vmul.f32 %v2119, %v1004
  %v2128 = vmul.f32 %v2126, %v1005
  %v2129 = vsel %vm216, %v2127, 0.0
  %2130 = vadd.xlane.f32.xlu0 %v2129
  %v2131 = vpop.xlane.xlu0 %2130
  %v2132 = vsel %vm216, %v2128, 0.0
  %2133 = vadd.xlane.f32.xlu0 %v2132
  %v2134 = vpop.xlane.xlu0 %2133
  %v2135 = vtanh.pop %v2131
  %v2136 = vtanh.pop %v2134
  %v2137 = vmul.f32 %v2135, 10.0
  %v2138 = vmul.f32 %v2136, 10.0
  %v2141 = vlaneseq
  %v2142 = vshrl.u32 %v2141, 7
  %v2143 = vsub.s32 %v1013, %v2142
  %v2144 = vrot.slane %v2137, %v2143
  %v2145 = vlaneseq
  %v2146 = vshrl.u32 %v2145, 7
  %v2147 = vsub.s32 %v1013, %v2146
  %v2148 = vrot.slane %v2138, %v2147
  %v2149 = vsel %vm1224, %v2148, %v2144
  %v2151 = vsel %vm2072, -1e+09, %v2149
  %v2152 = vsel %vm1227, %v2151, -inf
  %2153 = vmax.xlane.f32.xlu0 %v2152
  %v2154 = vpop.xlane.xlu0 %2153
  %v2155 = vsub.f32 %v2151, %v2154
  %v2156 = vmul.f32 %v2155, 1.442695
  %v2157 = vpow.pop %v2156
  %v2158 = vsel %vm1227, %v2157, 0.0
  %2159 = vadd.xlane.f32.xlu0 %v2158
  %v2160 = vpop.xlane.xlu0 %2159
  %v2161 = vrcp.pop %v2160
  %v2162 = vmul.f32 %v2157, %v2161
  %vm2163 = vcmp.ge.f32.partialorder %v2151, %v2154
  %v2164 = vsel %vm2163, %v1013, 8
  %v2165 = vsel %vm1227, %v2164, 2147483647
  %v2166 = vand.u32 %v2165, 65535
  %v2167 = vshra.s32 %v2165, 16
  %v2168 = vcvt.s32.f32 %v2166
  %v2169 = vcvt.s32.f32 %v2167
  %2170 = vmin.xlane.f32.xlu0 %v2169
  %v2171 = vpop.xlane.xlu0 %2170
  %vm2172 = vcmp.eq.f32.partialorder %v2169, %v2171
  %v2173 = vsel %vm2172, %v2168, inf
  %2174 = vmin.xlane.f32.xlu0 %v2173
  %v2175 = vpop.xlane.xlu0 %2174
  %v2176 = vcvt.f32.s32 %v2175
  %v2177 = vcvt.f32.s32 %v2171
  %v2178 = vshll.u32 %v2177, 16
  %v2179 = vadd.s32 %v2178, %v2176
  %vm2180 = vcmp.eq.s32.totalorder %v1013, %v2179
  %v2181 = vsel %vm2180, 1, 0
  %v2182 = vcvt.s32.f32 %v2181
  %v2183 = vmul.f32 %v2162, %v2182
  %v2184 = vsel %vm1227, %v2183, 0.0
  %2185 = vadd.xlane.f32.xlu0 %v2184
  %v2186 = vpop.xlane.xlu0 %2185
  %v2187 = vlaneseq
  %v2188 = vshrl.u32 %v2187, 7
  %v2189 = vsub.s32 0, %v2188
  %v2190 = vrot.slane %v2182, %v2189
  %2192 = vbcast.lane.b32.xlu0 %v2190, 256
  %v2193 = vpop.permute.xlu0 %2192
  %v2194 = vlaneseq
  %v2195 = vshrl.u32 %v2194, 7
  %v2196 = vsub.s32 1, %v2195
  %v2197 = vrot.slane %v2182, %v2196
  %2199 = vbcast.lane.b32.xlu0 %v2197, 256
  %v2200 = vpop.permute.xlu0 %2199
  %v2201 = vmul.f32 %v2193, %v36
  %v2202 = vmul.f32 %v2200, %v37
  %v2203 = vsel %vm1488, %v2201, 0.0
  %v2204 = vrot.slane %v2203, 4
  %v2205 = vadd.f32 %v2203, %v2204
  %v2206 = vrot.slane %v2205, 2
  %v2207 = vadd.f32 %v2205, %v2206
  %v2208 = vrot.slane %v2207, 1
  %v2209 = vadd.f32 %v2207, %v2208
  %v2210 = vsel %vm1488, %v2202, 0.0
  %v2211 = vrot.slane %v2210, 4
  %v2212 = vadd.f32 %v2210, %v2211
  %v2213 = vrot.slane %v2212, 2
  %v2214 = vadd.f32 %v2212, %v2213
  %v2215 = vrot.slane %v2214, 1
  %v2216 = vadd.f32 %v2214, %v2215
  %v2217 = vmul.f32 %v2193, %v38
  %v2218 = vmul.f32 %v2200, %v39
  %v2219 = vsel %vm115, %v2217, 0.0
  %v2220 = vrot.slane %v2219, 4
  %v2221 = vadd.f32 %v2219, %v2220
  %v2222 = vrot.slane %v2221, 2
  %v2223 = vadd.f32 %v2221, %v2222
  %v2224 = vrot.slane %v2223, 1
  %v2225 = vadd.f32 %v2223, %v2224
  %v2226 = vsel %vm115, %v2218, 0.0
  %v2227 = vrot.slane %v2226, 4
  %v2228 = vadd.f32 %v2226, %v2227
  %v2229 = vrot.slane %v2228, 2
  %v2230 = vadd.f32 %v2228, %v2229
  %v2231 = vrot.slane %v2230, 1
  %v2232 = vadd.f32 %v2230, %v2231
  %v2233 = vadd.f32 %v1866, %v2182
  %v2234 = vsub.f32 %v2209, %v1842
  %v2235 = vsub.f32 %v2216, %v1849
  %v2236 = vmul.f32 %v2234, %v2234
  %v2237 = vmul.f32 %v2235, %v2235
  %v2240 = vsel %vm1224, %v2237, %v2236
  %v2242 = vsel %vm1875, %v2240, 0.0
  %2243 = vadd.xlane.f32.xlu0 %v2242
  %v2244 = vpop.xlane.xlu0 %2243
  %v2245 = vrsqrt.pop %v2244
  %v2246 = vmul.f32 %v2244, %v2245
  %vm2247 = vcmp.eq.f32.partialorder %v2244, inf
  %v2248 = vsel %vm2247, %v2244, %v2246
  %vm2249 = vcmp.eq.f32.partialorder %v2244, 0.0
  %v2250 = vand.u32 %v2244, 2147483648
  %v2251 = vsel %vm2249, %v2250, %v2248
  %v2252 = vadd.f32 %v1886, %v2251
  %vm2253 = vcmask 17424
  %2254 = vst.msk [vmem:[%s10] sm:$0x3] %vm2253, %v2186
  %v2255 = vcvt.s32.f32 %v2179
  %vm2256 = vcmask 83024
  %2257 = vst.msk [vmem:[%s10] sm:$0x3] %vm2256, %v2255
  %v2260 = vsel %vm1224, %v2216, %v2209
  %2261 = vrot.lane.b32.xlu0 %v2260, 20
  %v2262 = vpop.permute.xlu0 %2261
  %vm2264 = vcmask 173216
  %2265 = vst.msk [vmem:[%s10] sm:$0x3] %vm2264, %v2262
  %v2266 = vpack.c.bf16 %v2225, %v2225
  %v2267 = vpack.c.bf16 %v2232, %v2232
  %v2268 = vpack.c.bf16 %v2022, %v2022
  %2270 = vrot.lane.b32.xlu0 %v2268, 32
  %v2271 = vpop.permute.xlu0 %2270
  %v2273 = vsel %vm216, %v2271, 0
  %2275 = vmatprep.subr.bf16.mxu0 0
  %2276 = vmatpush1.bf16.msra.mxu0 %v1027
  %2277 = vmatprep.subr.bf16.mxu0 0
  %2278 = vmatpush1.bf16.msra.mxu0 %v1028
  %2279 = vmatprep.subr.bf16.mxu0 0
  %2280 = vmatpush1.bf16.msra.mxu0 0
  %2281 = vmatprep.subr.bf16.mxu0 0
  %2282 = vmatpush1.bf16.msra.mxu0 0
  %2283 = vmatprep.subr.bf16.mxu0 0
  %2284 = vmatpush1.bf16.msra.mxu0 0
  %2285 = vmatprep.subr.bf16.mxu0 0
  %2286 = vmatpush1.bf16.msra.mxu0 0
  %2287 = vmatprep.subr.bf16.mxu0 0
  %2288 = vmatpush1.bf16.msra.mxu0 0
  %2289 = vmatprep.subr.bf16.mxu0 0
  %2290 = vmatpush1.bf16.msra.mxu0 0
  %2291 = vmatprep.subr.bf16.mxu0 0
  %2292 = vmatpush1.bf16.msra.mxu0 0
  %2293 = vmatprep.subr.bf16.mxu0 0
  %2294 = vmatpush1.bf16.msra.mxu0 0
  %2295 = vmatprep.subr.bf16.mxu0 0
  %2296 = vmatpush1.bf16.msra.mxu0 0
  %2297 = vmatprep.subr.bf16.mxu0 0
  %2298 = vmatpush1.bf16.msra.mxu0 0
  %2299 = vmatprep.subr.bf16.mxu0 0
  %2300 = vmatpush1.bf16.msra.mxu0 0
  %2301 = vmatprep.subr.bf16.mxu0 0
  %2302 = vmatpush1.bf16.msra.mxu0 0
  %2303 = vmatprep.subr.bf16.mxu0 0
  %2304 = vmatpush1.bf16.msra.mxu0 0
  %2305 = vmatprep.subr.bf16.mxu0 0
  %2306 = vmatpush1.bf16.msra.mxu0 0
  %2307 = vmatprep.mubr.bf16.mxu0 0
  %2308 = vmatmul.mubr.bf16.gmra.mrb[0].mxu0 %v2273
  %v2309 = vpop.f32.mrb[0].mxu0
  %v2310 = vadd.f32 0.0, %v2309
  %v2311 = vpop.f32.mrb[0].mxu0
  %v2312 = vpop.f32.mrb[0].mxu0
  %v2313 = vpop.f32.mrb[0].mxu0
  %2314 = vdwg.mxu0
  %v2317 = vunpack.c.l.b16 %v2266
  %v2318 = vunpack.c.l.b16 %v2267
  %v2319 = vsel %vm1224, %v2318, %v2317
  %v2320 = vpack.c.b16 %v2319, %v2319
  %v2322 = vsel %vm115, %v2320, 0
  %2324 = vmatprep.subr.bf16.mxu0 0
  %2325 = vmatpush1.bf16.msra.mxu0 %v1078
  %2326 = vmatprep.subr.bf16.mxu0 0
  %2327 = vmatpush1.bf16.msra.mxu0 0
  %2328 = vmatprep.subr.bf16.mxu0 0
  %2329 = vmatpush1.bf16.msra.mxu0 0
  %2330 = vmatprep.subr.bf16.mxu0 0
  %2331 = vmatpush1.bf16.msra.mxu0 0
  %2332 = vmatprep.subr.bf16.mxu0 0
  %2333 = vmatpush1.bf16.msra.mxu0 0
  %2334 = vmatprep.subr.bf16.mxu0 0
  %2335 = vmatpush1.bf16.msra.mxu0 0
  %2336 = vmatprep.subr.bf16.mxu0 0
  %2337 = vmatpush1.bf16.msra.mxu0 0
  %2338 = vmatprep.subr.bf16.mxu0 0
  %2339 = vmatpush1.bf16.msra.mxu0 0
  %2340 = vmatprep.subr.bf16.mxu0 0
  %2341 = vmatpush1.bf16.msra.mxu0 0
  %2342 = vmatprep.subr.bf16.mxu0 0
  %2343 = vmatpush1.bf16.msra.mxu0 0
  %2344 = vmatprep.subr.bf16.mxu0 0
  %2345 = vmatpush1.bf16.msra.mxu0 0
  %2346 = vmatprep.subr.bf16.mxu0 0
  %2347 = vmatpush1.bf16.msra.mxu0 0
  %2348 = vmatprep.subr.bf16.mxu0 0
  %2349 = vmatpush1.bf16.msra.mxu0 0
  %2350 = vmatprep.subr.bf16.mxu0 0
  %2351 = vmatpush1.bf16.msra.mxu0 0
  %2352 = vmatprep.subr.bf16.mxu0 0
  %2353 = vmatpush1.bf16.msra.mxu0 0
  %2354 = vmatprep.subr.bf16.mxu0 0
  %2355 = vmatpush1.bf16.msra.mxu0 0
  %2356 = vmatprep.mubr.bf16.mxu0 0
  %2357 = vmatmul.mubr.bf16.gmra.mrb[0].mxu0 %v2322
  %v2358 = vpop.f32.mrb[0].mxu0
  %v2359 = vadd.f32 %v2310, %v2358
  %v2360 = vpop.f32.mrb[0].mxu0
  %v2361 = vpop.f32.mrb[0].mxu0
  %v2362 = vpop.f32.mrb[0].mxu0
  %2363 = vdwg.mxu0
  %v2364 = vadd.f32 %v2359, %v1127
  %v2365 = vxor.u32 %v2364, 2147483648
  %v2366 = vmul.f32 %v2365, 1.442695
  %v2367 = vpow.pop %v2366
  %v2368 = vadd.f32 %v2367, 1.0
  %v2369 = vrcp.pop %v2368
  %v2370 = vmul.f32 1.0, %v2369
  %v2371 = vtanh.pop %v2364
  %v2372 = vmul.f32 %v2370, %v2016
  %2374 = vrot.lane.b32.xlu0 %v2371, 64
  %v2375 = vpop.permute.xlu0 %2374
  %v2377 = vmul.f32 %v2370, %v2375
  %2379 = vrot.lane.b32.xlu0 %v2377, 32
  %v2380 = vpop.permute.xlu0 %2379
  %v2382 = vadd.f32 %v2372, %v2380
  %v2383 = vtanh.pop %v2382
  %2385 = vrot.lane.b32.xlu0 %v2383, 64
  %v2386 = vpop.permute.xlu0 %2385
  %v2388 = vmul.f32 %v2370, %v2386
  %v2391 = vunpack.c.l.s4 1966171168
  %v2392 = vunpack.c.0.s8 %v2391
  %v2393 = vlaneseq
  %v2394 = vshrl.u32 %v2393, 7
  %v2395 = vsub.s32 %v2392, %v2394
  %v2396 = vrot.slane %v2388, %v2395
  %v2397 = vcombine.high %v2396, %v2396
  %v2399 = vunpack.c.l.s4 1966171168
  %v2400 = vunpack.c.0.s8 %v2399
  %v2401 = vlaneseq
  %v2402 = vshrl.u32 %v2401, 7
  %v2403 = vsub.s32 %v2400, %v2402
  %v2404 = vrot.slane %v2396, %v2403
  %v2406 = vunpack.c.l.s4 1966171168
  %v2407 = vunpack.c.0.s8 %v2406
  %v2408 = vlaneseq
  %v2409 = vshrl.u32 %v2408, 7
  %v2410 = vsub.s32 %v2407, %v2409
  %v2411 = vrot.slane %v2397, %v2410
  %v2412 = vlaneseq
  %v2413 = vshrl.u32 %v2412, 7
  %v2414 = vsub.s32 0, %v2413
  %v2415 = vrot.slane %v2404, %v2414
  %v2416 = vlaneseq
  %v2417 = vshrl.u32 %v2416, 7
  %v2418 = vsub.s32 0, %v2417
  %v2419 = vrot.slane %v2411, %v2418
  %v2422 = vmul.f32 %v2415, %v1190
  %v2423 = vmul.f32 %v2419, %v1192
  %2426 = vrot.lane.b32.xlu0 %v2422, 32
  %v2427 = vpop.permute.xlu0 %2426
  %2428 = vrot.lane.b32.xlu0 %v2423, 32
  %v2429 = vpop.permute.xlu0 %2428
  %v2432 = vsel %vm216, %v2427, 0.0
  %2433 = vadd.xlane.f32.xlu0 %v2432
  %v2434 = vpop.xlane.xlu0 %2433
  %v2435 = vsel %vm216, %v2429, 0.0
  %2436 = vadd.xlane.f32.xlu0 %v2435
  %v2437 = vpop.xlane.xlu0 %2436
  %vm2438 = vcmp.gt.f32.partialorder %v2233, 0.0
  %v2441 = vlaneseq
  %v2442 = vshrl.u32 %v2441, 7
  %v2443 = vsub.s32 %v1013, %v2442
  %v2444 = vrot.slane %v2434, %v2443
  %v2445 = vlaneseq
  %v2446 = vshrl.u32 %v2445, 7
  %v2447 = vsub.s32 %v1013, %v2446
  %v2448 = vrot.slane %v2437, %v2447
  %v2449 = vsel %vm1224, %v2448, %v2444
  %v2451 = vsel %vm2438, -1e+09, %v2449
  %v2452 = vsel %vm1227, %v2451, -inf
  %2453 = vmax.xlane.f32.xlu0 %v2452
  %v2454 = vpop.xlane.xlu0 %2453
  %v2455 = vsub.f32 %v2451, %v2454
  %v2456 = vmul.f32 %v2455, 1.442695
  %v2457 = vpow.pop %v2456
  %v2458 = vsel %vm1227, %v2457, 0.0
  %2459 = vadd.xlane.f32.xlu0 %v2458
  %v2460 = vpop.xlane.xlu0 %2459
  %v2461 = vrcp.pop %v2460
  %v2462 = vmul.f32 %v2457, %v2461
  %v2463 = vlaneseq
  %v2464 = vshrl.u32 %v2463, 7
  %v2465 = vsub.s32 0, %v2464
  %v2466 = vrot.slane %v2462, %v2465
  %2468 = vbcast.lane.b32.xlu0 %v2466, 256
  %v2469 = vpop.permute.xlu0 %2468
  %v2470 = vlaneseq
  %v2471 = vshrl.u32 %v2470, 7
  %v2472 = vsub.s32 1, %v2471
  %v2473 = vrot.slane %v2462, %v2472
  %2475 = vbcast.lane.b32.xlu0 %v2473, 256
  %v2476 = vpop.permute.xlu0 %2475
  %v2477 = vmul.f32 %v2469, %v1004
  %v2478 = vmul.f32 %v2476, %v1005
  %v2479 = vsel %vm216, %v2477, 0.0
  %v2480 = vrot.slane %v2479, 4
  %v2481 = vadd.f32 %v2479, %v2480
  %v2482 = vrot.slane %v2481, 2
  %v2483 = vadd.f32 %v2481, %v2482
  %v2484 = vrot.slane %v2483, 1
  %v2485 = vadd.f32 %v2483, %v2484
  %v2486 = vsel %vm216, %v2478, 0.0
  %v2487 = vrot.slane %v2486, 4
  %v2488 = vadd.f32 %v2486, %v2487
  %v2489 = vrot.slane %v2488, 2
  %v2490 = vadd.f32 %v2488, %v2489
  %v2491 = vrot.slane %v2490, 1
  %v2492 = vadd.f32 %v2490, %v2491
  %v2493 = vmul.f32 %v2485, %v1004
  %v2494 = vmul.f32 %v2492, %v1005
  %v2495 = vsel %vm216, %v2493, 0.0
  %2496 = vadd.xlane.f32.xlu0 %v2495
  %v2497 = vpop.xlane.xlu0 %2496
  %v2498 = vsel %vm216, %v2494, 0.0
  %2499 = vadd.xlane.f32.xlu0 %v2498
  %v2500 = vpop.xlane.xlu0 %2499
  %v2501 = vtanh.pop %v2497
  %v2502 = vtanh.pop %v2500
  %v2503 = vmul.f32 %v2501, 10.0
  %v2504 = vmul.f32 %v2502, 10.0
  %v2507 = vlaneseq
  %v2508 = vshrl.u32 %v2507, 7
  %v2509 = vsub.s32 %v1013, %v2508
  %v2510 = vrot.slane %v2503, %v2509
  %v2511 = vlaneseq
  %v2512 = vshrl.u32 %v2511, 7
  %v2513 = vsub.s32 %v1013, %v2512
  %v2514 = vrot.slane %v2504, %v2513
  %v2515 = vsel %vm1224, %v2514, %v2510
  %v2517 = vsel %vm2438, -1e+09, %v2515
  %v2518 = vsel %vm1227, %v2517, -inf
  %2519 = vmax.xlane.f32.xlu0 %v2518
  %v2520 = vpop.xlane.xlu0 %2519
  %v2521 = vsub.f32 %v2517, %v2520
  %v2522 = vmul.f32 %v2521, 1.442695
  %v2523 = vpow.pop %v2522
  %v2524 = vsel %vm1227, %v2523, 0.0
  %2525 = vadd.xlane.f32.xlu0 %v2524
  %v2526 = vpop.xlane.xlu0 %2525
  %v2527 = vrcp.pop %v2526
  %v2528 = vmul.f32 %v2523, %v2527
  %vm2529 = vcmp.ge.f32.partialorder %v2517, %v2520
  %v2530 = vsel %vm2529, %v1013, 8
  %v2531 = vsel %vm1227, %v2530, 2147483647
  %v2532 = vand.u32 %v2531, 65535
  %v2533 = vshra.s32 %v2531, 16
  %v2534 = vcvt.s32.f32 %v2532
  %v2535 = vcvt.s32.f32 %v2533
  %2536 = vmin.xlane.f32.xlu0 %v2535
  %v2537 = vpop.xlane.xlu0 %2536
  %vm2538 = vcmp.eq.f32.partialorder %v2535, %v2537
  %v2539 = vsel %vm2538, %v2534, inf
  %2540 = vmin.xlane.f32.xlu0 %v2539
  %v2541 = vpop.xlane.xlu0 %2540
  %v2542 = vcvt.f32.s32 %v2541
  %v2543 = vcvt.f32.s32 %v2537
  %v2544 = vshll.u32 %v2543, 16
  %v2545 = vadd.s32 %v2544, %v2542
  %vm2546 = vcmp.eq.s32.totalorder %v1013, %v2545
  %v2547 = vsel %vm2546, 1, 0
  %v2548 = vcvt.s32.f32 %v2547
  %v2549 = vmul.f32 %v2528, %v2548
  %v2550 = vsel %vm1227, %v2549, 0.0
  %2551 = vadd.xlane.f32.xlu0 %v2550
  %v2552 = vpop.xlane.xlu0 %2551
  %v2553 = vlaneseq
  %v2554 = vshrl.u32 %v2553, 7
  %v2555 = vsub.s32 0, %v2554
  %v2556 = vrot.slane %v2548, %v2555
  %2558 = vbcast.lane.b32.xlu0 %v2556, 256
  %v2559 = vpop.permute.xlu0 %2558
  %v2560 = vlaneseq
  %v2561 = vshrl.u32 %v2560, 7
  %v2562 = vsub.s32 1, %v2561
  %v2563 = vrot.slane %v2548, %v2562
  %2565 = vbcast.lane.b32.xlu0 %v2563, 256
  %v2566 = vpop.permute.xlu0 %2565
  %v2567 = vmul.f32 %v2559, %v36
  %v2568 = vmul.f32 %v2566, %v37
  %v2569 = vsel %vm1488, %v2567, 0.0
  %v2570 = vrot.slane %v2569, 4
  %v2571 = vadd.f32 %v2569, %v2570
  %v2572 = vrot.slane %v2571, 2
  %v2573 = vadd.f32 %v2571, %v2572
  %v2574 = vrot.slane %v2573, 1
  %v2575 = vadd.f32 %v2573, %v2574
  %v2576 = vsel %vm1488, %v2568, 0.0
  %v2577 = vrot.slane %v2576, 4
  %v2578 = vadd.f32 %v2576, %v2577
  %v2579 = vrot.slane %v2578, 2
  %v2580 = vadd.f32 %v2578, %v2579
  %v2581 = vrot.slane %v2580, 1
  %v2582 = vadd.f32 %v2580, %v2581
  %v2583 = vmul.f32 %v2559, %v38
  %v2584 = vmul.f32 %v2566, %v39
  %v2585 = vsel %vm115, %v2583, 0.0
  %v2586 = vrot.slane %v2585, 4
  %v2587 = vadd.f32 %v2585, %v2586
  %v2588 = vrot.slane %v2587, 2
  %v2589 = vadd.f32 %v2587, %v2588
  %v2590 = vrot.slane %v2589, 1
  %v2591 = vadd.f32 %v2589, %v2590
  %v2592 = vsel %vm115, %v2584, 0.0
  %v2593 = vrot.slane %v2592, 4
  %v2594 = vadd.f32 %v2592, %v2593
  %v2595 = vrot.slane %v2594, 2
  %v2596 = vadd.f32 %v2594, %v2595
  %v2597 = vrot.slane %v2596, 1
  %v2598 = vadd.f32 %v2596, %v2597
  %v2599 = vadd.f32 %v2233, %v2548
  %v2600 = vsub.f32 %v2575, %v2209
  %v2601 = vsub.f32 %v2582, %v2216
  %v2602 = vmul.f32 %v2600, %v2600
  %v2603 = vmul.f32 %v2601, %v2601
  %v2606 = vsel %vm1224, %v2603, %v2602
  %v2608 = vsel %vm1875, %v2606, 0.0
  %2609 = vadd.xlane.f32.xlu0 %v2608
  %v2610 = vpop.xlane.xlu0 %2609
  %v2611 = vrsqrt.pop %v2610
  %v2612 = vmul.f32 %v2610, %v2611
  %vm2613 = vcmp.eq.f32.partialorder %v2610, inf
  %v2614 = vsel %vm2613, %v2610, %v2612
  %vm2615 = vcmp.eq.f32.partialorder %v2610, 0.0
  %v2616 = vand.u32 %v2610, 2147483648
  %v2617 = vsel %vm2615, %v2616, %v2614
  %v2618 = vadd.f32 %v2252, %v2617
  %vm2619 = vcmask 25624
  %2620 = vst.msk [vmem:[%s10] sm:$0x3] %vm2619, %v2552
  %v2621 = vcvt.s32.f32 %v2545
  %vm2622 = vcmask 91224
  %2623 = vst.msk [vmem:[%s10] sm:$0x3] %vm2622, %v2621
  %v2626 = vsel %vm1224, %v2582, %v2575
  %2627 = vrot.lane.b32.xlu0 %v2626, 22
  %v2628 = vpop.permute.xlu0 %2627
  %vm2630 = vcmask 189616
  %2631 = vst.msk [vmem:[%s10] sm:$0x3] %vm2630, %v2628
  %v2632 = vpack.c.bf16 %v2591, %v2591
  %v2633 = vpack.c.bf16 %v2598, %v2598
  %v2634 = vpack.c.bf16 %v2388, %v2388
  %2636 = vrot.lane.b32.xlu0 %v2634, 32
  %v2637 = vpop.permute.xlu0 %2636
  %v2639 = vsel %vm216, %v2637, 0
  %2641 = vmatprep.subr.bf16.mxu0 0
  %2642 = vmatpush1.bf16.msra.mxu0 %v1027
  %2643 = vmatprep.subr.bf16.mxu0 0
  %2644 = vmatpush1.bf16.msra.mxu0 %v1028
  %2645 = vmatprep.subr.bf16.mxu0 0
  %2646 = vmatpush1.bf16.msra.mxu0 0
  %2647 = vmatprep.subr.bf16.mxu0 0
  %2648 = vmatpush1.bf16.msra.mxu0 0
  %2649 = vmatprep.subr.bf16.mxu0 0
  %2650 = vmatpush1.bf16.msra.mxu0 0
  %2651 = vmatprep.subr.bf16.mxu0 0
  %2652 = vmatpush1.bf16.msra.mxu0 0
  %2653 = vmatprep.subr.bf16.mxu0 0
  %2654 = vmatpush1.bf16.msra.mxu0 0
  %2655 = vmatprep.subr.bf16.mxu0 0
  %2656 = vmatpush1.bf16.msra.mxu0 0
  %2657 = vmatprep.subr.bf16.mxu0 0
  %2658 = vmatpush1.bf16.msra.mxu0 0
  %2659 = vmatprep.subr.bf16.mxu0 0
  %2660 = vmatpush1.bf16.msra.mxu0 0
  %2661 = vmatprep.subr.bf16.mxu0 0
  %2662 = vmatpush1.bf16.msra.mxu0 0
  %2663 = vmatprep.subr.bf16.mxu0 0
  %2664 = vmatpush1.bf16.msra.mxu0 0
  %2665 = vmatprep.subr.bf16.mxu0 0
  %2666 = vmatpush1.bf16.msra.mxu0 0
  %2667 = vmatprep.subr.bf16.mxu0 0
  %2668 = vmatpush1.bf16.msra.mxu0 0
  %2669 = vmatprep.subr.bf16.mxu0 0
  %2670 = vmatpush1.bf16.msra.mxu0 0
  %2671 = vmatprep.subr.bf16.mxu0 0
  %2672 = vmatpush1.bf16.msra.mxu0 0
  %2673 = vmatprep.mubr.bf16.mxu0 0
  %2674 = vmatmul.mubr.bf16.gmra.mrb[0].mxu0 %v2639
  %v2675 = vpop.f32.mrb[0].mxu0
  %v2676 = vadd.f32 0.0, %v2675
  %v2677 = vpop.f32.mrb[0].mxu0
  %v2678 = vpop.f32.mrb[0].mxu0
  %v2679 = vpop.f32.mrb[0].mxu0
  %2680 = vdwg.mxu0
  %v2683 = vunpack.c.l.b16 %v2632
  %v2684 = vunpack.c.l.b16 %v2633
  %v2685 = vsel %vm1224, %v2684, %v2683
  %v2686 = vpack.c.b16 %v2685, %v2685
  %v2688 = vsel %vm115, %v2686, 0
  %2690 = vmatprep.subr.bf16.mxu0 0
  %2691 = vmatpush1.bf16.msra.mxu0 %v1078
  %2692 = vmatprep.subr.bf16.mxu0 0
  %2693 = vmatpush1.bf16.msra.mxu0 0
  %2694 = vmatprep.subr.bf16.mxu0 0
  %2695 = vmatpush1.bf16.msra.mxu0 0
  %2696 = vmatprep.subr.bf16.mxu0 0
  %2697 = vmatpush1.bf16.msra.mxu0 0
  %2698 = vmatprep.subr.bf16.mxu0 0
  %2699 = vmatpush1.bf16.msra.mxu0 0
  %2700 = vmatprep.subr.bf16.mxu0 0
  %2701 = vmatpush1.bf16.msra.mxu0 0
  %2702 = vmatprep.subr.bf16.mxu0 0
  %2703 = vmatpush1.bf16.msra.mxu0 0
  %2704 = vmatprep.subr.bf16.mxu0 0
  %2705 = vmatpush1.bf16.msra.mxu0 0
  %2706 = vmatprep.subr.bf16.mxu0 0
  %2707 = vmatpush1.bf16.msra.mxu0 0
  %2708 = vmatprep.subr.bf16.mxu0 0
  %2709 = vmatpush1.bf16.msra.mxu0 0
  %2710 = vmatprep.subr.bf16.mxu0 0
  %2711 = vmatpush1.bf16.msra.mxu0 0
  %2712 = vmatprep.subr.bf16.mxu0 0
  %2713 = vmatpush1.bf16.msra.mxu0 0
  %2714 = vmatprep.subr.bf16.mxu0 0
  %2715 = vmatpush1.bf16.msra.mxu0 0
  %2716 = vmatprep.subr.bf16.mxu0 0
  %2717 = vmatpush1.bf16.msra.mxu0 0
  %2718 = vmatprep.subr.bf16.mxu0 0
  %2719 = vmatpush1.bf16.msra.mxu0 0
  %2720 = vmatprep.subr.bf16.mxu0 0
  %2721 = vmatpush1.bf16.msra.mxu0 0
  %2722 = vmatprep.mubr.bf16.mxu0 0
  %2723 = vmatmul.mubr.bf16.gmra.mrb[0].mxu0 %v2688
  %v2724 = vpop.f32.mrb[0].mxu0
  %v2725 = vadd.f32 %v2676, %v2724
  %v2726 = vpop.f32.mrb[0].mxu0
  %v2727 = vpop.f32.mrb[0].mxu0
  %v2728 = vpop.f32.mrb[0].mxu0
  %2729 = vdwg.mxu0
  %v2730 = vadd.f32 %v2725, %v1127
  %v2731 = vxor.u32 %v2730, 2147483648
  %v2732 = vmul.f32 %v2731, 1.442695
  %v2733 = vpow.pop %v2732
  %v2734 = vadd.f32 %v2733, 1.0
  %v2735 = vrcp.pop %v2734
  %v2736 = vmul.f32 1.0, %v2735
  %v2737 = vtanh.pop %v2730
  %v2738 = vmul.f32 %v2736, %v2382
  %2740 = vrot.lane.b32.xlu0 %v2737, 64
  %v2741 = vpop.permute.xlu0 %2740
  %v2743 = vmul.f32 %v2736, %v2741
  %2745 = vrot.lane.b32.xlu0 %v2743, 32
  %v2746 = vpop.permute.xlu0 %2745
  %v2748 = vadd.f32 %v2738, %v2746
  %v2749 = vtanh.pop %v2748
  %2751 = vrot.lane.b32.xlu0 %v2749, 64
  %v2752 = vpop.permute.xlu0 %2751
  %v2754 = vmul.f32 %v2736, %v2752
  %v2757 = vunpack.c.l.s4 1966171168
  %v2758 = vunpack.c.0.s8 %v2757
  %v2759 = vlaneseq
  %v2760 = vshrl.u32 %v2759, 7
  %v2761 = vsub.s32 %v2758, %v2760
  %v2762 = vrot.slane %v2754, %v2761
  %v2763 = vcombine.high %v2762, %v2762
  %v2765 = vunpack.c.l.s4 1966171168
  %v2766 = vunpack.c.0.s8 %v2765
  %v2767 = vlaneseq
  %v2768 = vshrl.u32 %v2767, 7
  %v2769 = vsub.s32 %v2766, %v2768
  %v2770 = vrot.slane %v2762, %v2769
  %v2772 = vunpack.c.l.s4 1966171168
  %v2773 = vunpack.c.0.s8 %v2772
  %v2774 = vlaneseq
  %v2775 = vshrl.u32 %v2774, 7
  %v2776 = vsub.s32 %v2773, %v2775
  %v2777 = vrot.slane %v2763, %v2776
  %v2778 = vlaneseq
  %v2779 = vshrl.u32 %v2778, 7
  %v2780 = vsub.s32 0, %v2779
  %v2781 = vrot.slane %v2770, %v2780
  %v2782 = vlaneseq
  %v2783 = vshrl.u32 %v2782, 7
  %v2784 = vsub.s32 0, %v2783
  %v2785 = vrot.slane %v2777, %v2784
  %v2788 = vmul.f32 %v2781, %v1190
  %v2789 = vmul.f32 %v2785, %v1192
  %2792 = vrot.lane.b32.xlu0 %v2788, 32
  %v2793 = vpop.permute.xlu0 %2792
  %2794 = vrot.lane.b32.xlu0 %v2789, 32
  %v2795 = vpop.permute.xlu0 %2794
  %v2798 = vsel %vm216, %v2793, 0.0
  %2799 = vadd.xlane.f32.xlu0 %v2798
  %v2800 = vpop.xlane.xlu0 %2799
  %v2801 = vsel %vm216, %v2795, 0.0
  %2802 = vadd.xlane.f32.xlu0 %v2801
  %v2803 = vpop.xlane.xlu0 %2802
  %vm2804 = vcmp.gt.f32.partialorder %v2599, 0.0
  %v2807 = vlaneseq
  %v2808 = vshrl.u32 %v2807, 7
  %v2809 = vsub.s32 %v1013, %v2808
  %v2810 = vrot.slane %v2800, %v2809
  %v2811 = vlaneseq
  %v2812 = vshrl.u32 %v2811, 7
  %v2813 = vsub.s32 %v1013, %v2812
  %v2814 = vrot.slane %v2803, %v2813
  %v2815 = vsel %vm1224, %v2814, %v2810
  %v2817 = vsel %vm2804, -1e+09, %v2815
  %v2818 = vsel %vm1227, %v2817, -inf
  %2819 = vmax.xlane.f32.xlu0 %v2818
  %v2820 = vpop.xlane.xlu0 %2819
  %v2821 = vsub.f32 %v2817, %v2820
  %v2822 = vmul.f32 %v2821, 1.442695
  %v2823 = vpow.pop %v2822
  %v2824 = vsel %vm1227, %v2823, 0.0
  %2825 = vadd.xlane.f32.xlu0 %v2824
  %v2826 = vpop.xlane.xlu0 %2825
  %v2827 = vrcp.pop %v2826
  %v2828 = vmul.f32 %v2823, %v2827
  %v2829 = vlaneseq
  %v2830 = vshrl.u32 %v2829, 7
  %v2831 = vsub.s32 0, %v2830
  %v2832 = vrot.slane %v2828, %v2831
  %2834 = vbcast.lane.b32.xlu0 %v2832, 256
  %v2835 = vpop.permute.xlu0 %2834
  %v2836 = vlaneseq
  %v2837 = vshrl.u32 %v2836, 7
  %v2838 = vsub.s32 1, %v2837
  %v2839 = vrot.slane %v2828, %v2838
  %2841 = vbcast.lane.b32.xlu0 %v2839, 256
  %v2842 = vpop.permute.xlu0 %2841
  %v2843 = vmul.f32 %v2835, %v1004
  %v2844 = vmul.f32 %v2842, %v1005
  %v2845 = vsel %vm216, %v2843, 0.0
  %v2846 = vrot.slane %v2845, 4
  %v2847 = vadd.f32 %v2845, %v2846
  %v2848 = vrot.slane %v2847, 2
  %v2849 = vadd.f32 %v2847, %v2848
  %v2850 = vrot.slane %v2849, 1
  %v2851 = vadd.f32 %v2849, %v2850
  %v2852 = vsel %vm216, %v2844, 0.0
  %v2853 = vrot.slane %v2852, 4
  %v2854 = vadd.f32 %v2852, %v2853
  %v2855 = vrot.slane %v2854, 2
  %v2856 = vadd.f32 %v2854, %v2855
  %v2857 = vrot.slane %v2856, 1
  %v2858 = vadd.f32 %v2856, %v2857
  %v2859 = vmul.f32 %v2851, %v1004
  %v2860 = vmul.f32 %v2858, %v1005
  %v2861 = vsel %vm216, %v2859, 0.0
  %2862 = vadd.xlane.f32.xlu0 %v2861
  %v2863 = vpop.xlane.xlu0 %2862
  %v2864 = vsel %vm216, %v2860, 0.0
  %2865 = vadd.xlane.f32.xlu0 %v2864
  %v2866 = vpop.xlane.xlu0 %2865
  %v2867 = vtanh.pop %v2863
  %v2868 = vtanh.pop %v2866
  %v2869 = vmul.f32 %v2867, 10.0
  %v2870 = vmul.f32 %v2868, 10.0
  %v2873 = vlaneseq
  %v2874 = vshrl.u32 %v2873, 7
  %v2875 = vsub.s32 %v1013, %v2874
  %v2876 = vrot.slane %v2869, %v2875
  %v2877 = vlaneseq
  %v2878 = vshrl.u32 %v2877, 7
  %v2879 = vsub.s32 %v1013, %v2878
  %v2880 = vrot.slane %v2870, %v2879
  %v2881 = vsel %vm1224, %v2880, %v2876
  %v2883 = vsel %vm2804, -1e+09, %v2881
  %v2884 = vsel %vm1227, %v2883, -inf
  %2885 = vmax.xlane.f32.xlu0 %v2884
  %v2886 = vpop.xlane.xlu0 %2885
  %v2887 = vsub.f32 %v2883, %v2886
  %v2888 = vmul.f32 %v2887, 1.442695
  %v2889 = vpow.pop %v2888
  %v2890 = vsel %vm1227, %v2889, 0.0
  %2891 = vadd.xlane.f32.xlu0 %v2890
  %v2892 = vpop.xlane.xlu0 %2891
  %v2893 = vrcp.pop %v2892
  %v2894 = vmul.f32 %v2889, %v2893
  %vm2895 = vcmp.ge.f32.partialorder %v2883, %v2886
  %v2896 = vsel %vm2895, %v1013, 8
  %v2897 = vsel %vm1227, %v2896, 2147483647
  %v2898 = vand.u32 %v2897, 65535
  %v2899 = vshra.s32 %v2897, 16
  %v2900 = vcvt.s32.f32 %v2898
  %v2901 = vcvt.s32.f32 %v2899
  %2902 = vmin.xlane.f32.xlu0 %v2901
  %v2903 = vpop.xlane.xlu0 %2902
  %vm2904 = vcmp.eq.f32.partialorder %v2901, %v2903
  %v2905 = vsel %vm2904, %v2900, inf
  %2906 = vmin.xlane.f32.xlu0 %v2905
  %v2907 = vpop.xlane.xlu0 %2906
  %v2908 = vcvt.f32.s32 %v2907
  %v2909 = vcvt.f32.s32 %v2903
  %v2910 = vshll.u32 %v2909, 16
  %v2911 = vadd.s32 %v2910, %v2908
  %vm2912 = vcmp.eq.s32.totalorder %v1013, %v2911
  %v2913 = vsel %vm2912, 1, 0
  %v2914 = vcvt.s32.f32 %v2913
  %v2915 = vmul.f32 %v2894, %v2914
  %v2916 = vsel %vm1227, %v2915, 0.0
  %2917 = vadd.xlane.f32.xlu0 %v2916
  %v2918 = vpop.xlane.xlu0 %2917
  %v2919 = vlaneseq
  %v2920 = vshrl.u32 %v2919, 7
  %v2921 = vsub.s32 0, %v2920
  %v2922 = vrot.slane %v2914, %v2921
  %2924 = vbcast.lane.b32.xlu0 %v2922, 256
  %v2925 = vpop.permute.xlu0 %2924
  %v2926 = vlaneseq
  %v2927 = vshrl.u32 %v2926, 7
  %v2928 = vsub.s32 1, %v2927
  %v2929 = vrot.slane %v2914, %v2928
  %2931 = vbcast.lane.b32.xlu0 %v2929, 256
  %v2932 = vpop.permute.xlu0 %2931
  %v2933 = vmul.f32 %v2925, %v36
  %v2934 = vmul.f32 %v2932, %v37
  %v2935 = vsel %vm1488, %v2933, 0.0
  %v2936 = vrot.slane %v2935, 4
  %v2937 = vadd.f32 %v2935, %v2936
  %v2938 = vrot.slane %v2937, 2
  %v2939 = vadd.f32 %v2937, %v2938
  %v2940 = vrot.slane %v2939, 1
  %v2941 = vadd.f32 %v2939, %v2940
  %v2942 = vsel %vm1488, %v2934, 0.0
  %v2943 = vrot.slane %v2942, 4
  %v2944 = vadd.f32 %v2942, %v2943
  %v2945 = vrot.slane %v2944, 2
  %v2946 = vadd.f32 %v2944, %v2945
  %v2947 = vrot.slane %v2946, 1
  %v2948 = vadd.f32 %v2946, %v2947
  %v2949 = vmul.f32 %v2925, %v38
  %v2950 = vmul.f32 %v2932, %v39
  %v2951 = vsel %vm115, %v2949, 0.0
  %v2952 = vrot.slane %v2951, 4
  %v2953 = vadd.f32 %v2951, %v2952
  %v2954 = vrot.slane %v2953, 2
  %v2955 = vadd.f32 %v2953, %v2954
  %v2956 = vrot.slane %v2955, 1
  %v2957 = vadd.f32 %v2955, %v2956
  %v2958 = vsel %vm115, %v2950, 0.0
  %v2959 = vrot.slane %v2958, 4
  %v2960 = vadd.f32 %v2958, %v2959
  %v2961 = vrot.slane %v2960, 2
  %v2962 = vadd.f32 %v2960, %v2961
  %v2963 = vrot.slane %v2962, 1
  %v2964 = vadd.f32 %v2962, %v2963
  %v2965 = vadd.f32 %v2599, %v2914
  %v2966 = vsub.f32 %v2941, %v2575
  %v2967 = vsub.f32 %v2948, %v2582
  %v2968 = vmul.f32 %v2966, %v2966
  %v2969 = vmul.f32 %v2967, %v2967
  %v2972 = vsel %vm1224, %v2969, %v2968
  %v2974 = vsel %vm1875, %v2972, 0.0
  %2975 = vadd.xlane.f32.xlu0 %v2974
  %v2976 = vpop.xlane.xlu0 %2975
  %v2977 = vrsqrt.pop %v2976
  %v2978 = vmul.f32 %v2976, %v2977
  %vm2979 = vcmp.eq.f32.partialorder %v2976, inf
  %v2980 = vsel %vm2979, %v2976, %v2978
  %vm2981 = vcmp.eq.f32.partialorder %v2976, 0.0
  %v2982 = vand.u32 %v2976, 2147483648
  %v2983 = vsel %vm2981, %v2982, %v2980
  %v2984 = vadd.f32 %v2618, %v2983
  %vm2985 = vcmask 33824
  %2986 = vst.msk [vmem:[%s10] sm:$0x3] %vm2985, %v2918
  %v2987 = vcvt.s32.f32 %v2911
  %vm2988 = vcmask 99424
  %2989 = vst.msk [vmem:[%s10] sm:$0x3] %vm2988, %v2987
  %v2992 = vsel %vm1224, %v2948, %v2941
  %2993 = vrot.lane.b32.xlu0 %v2992, 24
  %v2994 = vpop.permute.xlu0 %2993
  %vm2996 = vcmask 206016
  %2997 = vst.msk [vmem:[%s10] sm:$0x3] %vm2996, %v2994
  %v2998 = vpack.c.bf16 %v2957, %v2957
  %v2999 = vpack.c.bf16 %v2964, %v2964
  %v3000 = vpack.c.bf16 %v2754, %v2754
  %3002 = vrot.lane.b32.xlu0 %v3000, 32
  %v3003 = vpop.permute.xlu0 %3002
  %v3005 = vsel %vm216, %v3003, 0
  %3007 = vmatprep.subr.bf16.mxu0 0
  %3008 = vmatpush1.bf16.msra.mxu0 %v1027
  %3009 = vmatprep.subr.bf16.mxu0 0
  %3010 = vmatpush1.bf16.msra.mxu0 %v1028
  %3011 = vmatprep.subr.bf16.mxu0 0
  %3012 = vmatpush1.bf16.msra.mxu0 0
  %3013 = vmatprep.subr.bf16.mxu0 0
  %3014 = vmatpush1.bf16.msra.mxu0 0
  %3015 = vmatprep.subr.bf16.mxu0 0
  %3016 = vmatpush1.bf16.msra.mxu0 0
  %3017 = vmatprep.subr.bf16.mxu0 0
  %3018 = vmatpush1.bf16.msra.mxu0 0
  %3019 = vmatprep.subr.bf16.mxu0 0
  %3020 = vmatpush1.bf16.msra.mxu0 0
  %3021 = vmatprep.subr.bf16.mxu0 0
  %3022 = vmatpush1.bf16.msra.mxu0 0
  %3023 = vmatprep.subr.bf16.mxu0 0
  %3024 = vmatpush1.bf16.msra.mxu0 0
  %3025 = vmatprep.subr.bf16.mxu0 0
  %3026 = vmatpush1.bf16.msra.mxu0 0
  %3027 = vmatprep.subr.bf16.mxu0 0
  %3028 = vmatpush1.bf16.msra.mxu0 0
  %3029 = vmatprep.subr.bf16.mxu0 0
  %3030 = vmatpush1.bf16.msra.mxu0 0
  %3031 = vmatprep.subr.bf16.mxu0 0
  %3032 = vmatpush1.bf16.msra.mxu0 0
  %3033 = vmatprep.subr.bf16.mxu0 0
  %3034 = vmatpush1.bf16.msra.mxu0 0
  %3035 = vmatprep.subr.bf16.mxu0 0
  %3036 = vmatpush1.bf16.msra.mxu0 0
  %3037 = vmatprep.subr.bf16.mxu0 0
  %3038 = vmatpush1.bf16.msra.mxu0 0
  %3039 = vmatprep.mubr.bf16.mxu0 0
  %3040 = vmatmul.mubr.bf16.gmra.mrb[0].mxu0 %v3005
  %v3041 = vpop.f32.mrb[0].mxu0
  %v3042 = vadd.f32 0.0, %v3041
  %v3043 = vpop.f32.mrb[0].mxu0
  %v3044 = vpop.f32.mrb[0].mxu0
  %v3045 = vpop.f32.mrb[0].mxu0
  %3046 = vdwg.mxu0
  %v3049 = vunpack.c.l.b16 %v2998
  %v3050 = vunpack.c.l.b16 %v2999
  %v3051 = vsel %vm1224, %v3050, %v3049
  %v3052 = vpack.c.b16 %v3051, %v3051
  %v3054 = vsel %vm115, %v3052, 0
  %3056 = vmatprep.subr.bf16.mxu0 0
  %3057 = vmatpush1.bf16.msra.mxu0 %v1078
  %3058 = vmatprep.subr.bf16.mxu0 0
  %3059 = vmatpush1.bf16.msra.mxu0 0
  %3060 = vmatprep.subr.bf16.mxu0 0
  %3061 = vmatpush1.bf16.msra.mxu0 0
  %3062 = vmatprep.subr.bf16.mxu0 0
  %3063 = vmatpush1.bf16.msra.mxu0 0
  %3064 = vmatprep.subr.bf16.mxu0 0
  %3065 = vmatpush1.bf16.msra.mxu0 0
  %3066 = vmatprep.subr.bf16.mxu0 0
  %3067 = vmatpush1.bf16.msra.mxu0 0
  %3068 = vmatprep.subr.bf16.mxu0 0
  %3069 = vmatpush1.bf16.msra.mxu0 0
  %3070 = vmatprep.subr.bf16.mxu0 0
  %3071 = vmatpush1.bf16.msra.mxu0 0
  %3072 = vmatprep.subr.bf16.mxu0 0
  %3073 = vmatpush1.bf16.msra.mxu0 0
  %3074 = vmatprep.subr.bf16.mxu0 0
  %3075 = vmatpush1.bf16.msra.mxu0 0
  %3076 = vmatprep.subr.bf16.mxu0 0
  %3077 = vmatpush1.bf16.msra.mxu0 0
  %3078 = vmatprep.subr.bf16.mxu0 0
  %3079 = vmatpush1.bf16.msra.mxu0 0
  %3080 = vmatprep.subr.bf16.mxu0 0
  %3081 = vmatpush1.bf16.msra.mxu0 0
  %3082 = vmatprep.subr.bf16.mxu0 0
  %3083 = vmatpush1.bf16.msra.mxu0 0
  %3084 = vmatprep.subr.bf16.mxu0 0
  %3085 = vmatpush1.bf16.msra.mxu0 0
  %3086 = vmatprep.subr.bf16.mxu0 0
  %3087 = vmatpush1.bf16.msra.mxu0 0
  %3088 = vmatprep.mubr.bf16.mxu0 0
  %3089 = vmatmul.mubr.bf16.gmra.mrb[0].mxu0 %v3054
  %v3090 = vpop.f32.mrb[0].mxu0
  %v3091 = vadd.f32 %v3042, %v3090
  %v3092 = vpop.f32.mrb[0].mxu0
  %v3093 = vpop.f32.mrb[0].mxu0
  %v3094 = vpop.f32.mrb[0].mxu0
  %3095 = vdwg.mxu0
  %v3096 = vadd.f32 %v3091, %v1127
  %v3097 = vxor.u32 %v3096, 2147483648
  %v3098 = vmul.f32 %v3097, 1.442695
  %v3099 = vpow.pop %v3098
  %v3100 = vadd.f32 %v3099, 1.0
  %v3101 = vrcp.pop %v3100
  %v3102 = vmul.f32 1.0, %v3101
  %v3103 = vtanh.pop %v3096
  %v3104 = vmul.f32 %v3102, %v2748
  %3106 = vrot.lane.b32.xlu0 %v3103, 64
  %v3107 = vpop.permute.xlu0 %3106
  %v3109 = vmul.f32 %v3102, %v3107
  %3111 = vrot.lane.b32.xlu0 %v3109, 32
  %v3112 = vpop.permute.xlu0 %3111
  %v3114 = vadd.f32 %v3104, %v3112
  %v3115 = vtanh.pop %v3114
  %3117 = vrot.lane.b32.xlu0 %v3115, 64
  %v3118 = vpop.permute.xlu0 %3117
  %v3120 = vmul.f32 %v3102, %v3118
  %v3123 = vunpack.c.l.s4 1966171168
  %v3124 = vunpack.c.0.s8 %v3123
  %v3125 = vlaneseq
  %v3126 = vshrl.u32 %v3125, 7
  %v3127 = vsub.s32 %v3124, %v3126
  %v3128 = vrot.slane %v3120, %v3127
  %v3129 = vcombine.high %v3128, %v3128
  %v3131 = vunpack.c.l.s4 1966171168
  %v3132 = vunpack.c.0.s8 %v3131
  %v3133 = vlaneseq
  %v3134 = vshrl.u32 %v3133, 7
  %v3135 = vsub.s32 %v3132, %v3134
  %v3136 = vrot.slane %v3128, %v3135
  %v3138 = vunpack.c.l.s4 1966171168
  %v3139 = vunpack.c.0.s8 %v3138
  %v3140 = vlaneseq
  %v3141 = vshrl.u32 %v3140, 7
  %v3142 = vsub.s32 %v3139, %v3141
  %v3143 = vrot.slane %v3129, %v3142
  %v3144 = vlaneseq
  %v3145 = vshrl.u32 %v3144, 7
  %v3146 = vsub.s32 0, %v3145
  %v3147 = vrot.slane %v3136, %v3146
  %v3148 = vlaneseq
  %v3149 = vshrl.u32 %v3148, 7
  %v3150 = vsub.s32 0, %v3149
  %v3151 = vrot.slane %v3143, %v3150
  %v3154 = vmul.f32 %v3147, %v1190
  %v3155 = vmul.f32 %v3151, %v1192
  %3158 = vrot.lane.b32.xlu0 %v3154, 32
  %v3159 = vpop.permute.xlu0 %3158
  %3160 = vrot.lane.b32.xlu0 %v3155, 32
  %v3161 = vpop.permute.xlu0 %3160
  %v3164 = vsel %vm216, %v3159, 0.0
  %3165 = vadd.xlane.f32.xlu0 %v3164
  %v3166 = vpop.xlane.xlu0 %3165
  %v3167 = vsel %vm216, %v3161, 0.0
  %3168 = vadd.xlane.f32.xlu0 %v3167
  %v3169 = vpop.xlane.xlu0 %3168
  %vm3170 = vcmp.gt.f32.partialorder %v2965, 0.0
  %v3173 = vlaneseq
  %v3174 = vshrl.u32 %v3173, 7
  %v3175 = vsub.s32 %v1013, %v3174
  %v3176 = vrot.slane %v3166, %v3175
  %v3177 = vlaneseq
  %v3178 = vshrl.u32 %v3177, 7
  %v3179 = vsub.s32 %v1013, %v3178
  %v3180 = vrot.slane %v3169, %v3179
  %v3181 = vsel %vm1224, %v3180, %v3176
  %v3183 = vsel %vm3170, -1e+09, %v3181
  %v3184 = vsel %vm1227, %v3183, -inf
  %3185 = vmax.xlane.f32.xlu0 %v3184
  %v3186 = vpop.xlane.xlu0 %3185
  %v3187 = vsub.f32 %v3183, %v3186
  %v3188 = vmul.f32 %v3187, 1.442695
  %v3189 = vpow.pop %v3188
  %v3190 = vsel %vm1227, %v3189, 0.0
  %3191 = vadd.xlane.f32.xlu0 %v3190
  %v3192 = vpop.xlane.xlu0 %3191
  %v3193 = vrcp.pop %v3192
  %v3194 = vmul.f32 %v3189, %v3193
  %v3195 = vlaneseq
  %v3196 = vshrl.u32 %v3195, 7
  %v3197 = vsub.s32 0, %v3196
  %v3198 = vrot.slane %v3194, %v3197
  %3200 = vbcast.lane.b32.xlu0 %v3198, 256
  %v3201 = vpop.permute.xlu0 %3200
  %v3202 = vlaneseq
  %v3203 = vshrl.u32 %v3202, 7
  %v3204 = vsub.s32 1, %v3203
  %v3205 = vrot.slane %v3194, %v3204
  %3207 = vbcast.lane.b32.xlu0 %v3205, 256
  %v3208 = vpop.permute.xlu0 %3207
  %v3209 = vmul.f32 %v3201, %v1004
  %v3210 = vmul.f32 %v3208, %v1005
  %v3211 = vsel %vm216, %v3209, 0.0
  %v3212 = vrot.slane %v3211, 4
  %v3213 = vadd.f32 %v3211, %v3212
  %v3214 = vrot.slane %v3213, 2
  %v3215 = vadd.f32 %v3213, %v3214
  %v3216 = vrot.slane %v3215, 1
  %v3217 = vadd.f32 %v3215, %v3216
  %v3218 = vsel %vm216, %v3210, 0.0
  %v3219 = vrot.slane %v3218, 4
  %v3220 = vadd.f32 %v3218, %v3219
  %v3221 = vrot.slane %v3220, 2
  %v3222 = vadd.f32 %v3220, %v3221
  %v3223 = vrot.slane %v3222, 1
  %v3224 = vadd.f32 %v3222, %v3223
  %v3225 = vmul.f32 %v3217, %v1004
  %v3226 = vmul.f32 %v3224, %v1005
  %v3227 = vsel %vm216, %v3225, 0.0
  %3228 = vadd.xlane.f32.xlu0 %v3227
  %v3229 = vpop.xlane.xlu0 %3228
  %v3230 = vsel %vm216, %v3226, 0.0
  %3231 = vadd.xlane.f32.xlu0 %v3230
  %v3232 = vpop.xlane.xlu0 %3231
  %v3233 = vtanh.pop %v3229
  %v3234 = vtanh.pop %v3232
  %v3235 = vmul.f32 %v3233, 10.0
  %v3236 = vmul.f32 %v3234, 10.0
  %v3239 = vlaneseq
  %v3240 = vshrl.u32 %v3239, 7
  %v3241 = vsub.s32 %v1013, %v3240
  %v3242 = vrot.slane %v3235, %v3241
  %v3243 = vlaneseq
  %v3244 = vshrl.u32 %v3243, 7
  %v3245 = vsub.s32 %v1013, %v3244
  %v3246 = vrot.slane %v3236, %v3245
  %v3247 = vsel %vm1224, %v3246, %v3242
  %v3249 = vsel %vm3170, -1e+09, %v3247
  %v3250 = vsel %vm1227, %v3249, -inf
  %3251 = vmax.xlane.f32.xlu0 %v3250
  %v3252 = vpop.xlane.xlu0 %3251
  %v3253 = vsub.f32 %v3249, %v3252
  %v3254 = vmul.f32 %v3253, 1.442695
  %v3255 = vpow.pop %v3254
  %v3256 = vsel %vm1227, %v3255, 0.0
  %3257 = vadd.xlane.f32.xlu0 %v3256
  %v3258 = vpop.xlane.xlu0 %3257
  %v3259 = vrcp.pop %v3258
  %v3260 = vmul.f32 %v3255, %v3259
  %vm3261 = vcmp.ge.f32.partialorder %v3249, %v3252
  %v3262 = vsel %vm3261, %v1013, 8
  %v3263 = vsel %vm1227, %v3262, 2147483647
  %v3264 = vand.u32 %v3263, 65535
  %v3265 = vshra.s32 %v3263, 16
  %v3266 = vcvt.s32.f32 %v3264
  %v3267 = vcvt.s32.f32 %v3265
  %3268 = vmin.xlane.f32.xlu0 %v3267
  %v3269 = vpop.xlane.xlu0 %3268
  %vm3270 = vcmp.eq.f32.partialorder %v3267, %v3269
  %v3271 = vsel %vm3270, %v3266, inf
  %3272 = vmin.xlane.f32.xlu0 %v3271
  %v3273 = vpop.xlane.xlu0 %3272
  %v3274 = vcvt.f32.s32 %v3273
  %v3275 = vcvt.f32.s32 %v3269
  %v3276 = vshll.u32 %v3275, 16
  %v3277 = vadd.s32 %v3276, %v3274
  %vm3278 = vcmp.eq.s32.totalorder %v1013, %v3277
  %v3279 = vsel %vm3278, 1, 0
  %v3280 = vcvt.s32.f32 %v3279
  %v3281 = vmul.f32 %v3260, %v3280
  %v3282 = vsel %vm1227, %v3281, 0.0
  %3283 = vadd.xlane.f32.xlu0 %v3282
  %v3284 = vpop.xlane.xlu0 %3283
  %v3285 = vlaneseq
  %v3286 = vshrl.u32 %v3285, 7
  %v3287 = vsub.s32 0, %v3286
  %v3288 = vrot.slane %v3280, %v3287
  %3290 = vbcast.lane.b32.xlu0 %v3288, 256
  %v3291 = vpop.permute.xlu0 %3290
  %v3292 = vlaneseq
  %v3293 = vshrl.u32 %v3292, 7
  %v3294 = vsub.s32 1, %v3293
  %v3295 = vrot.slane %v3280, %v3294
  %3297 = vbcast.lane.b32.xlu0 %v3295, 256
  %v3298 = vpop.permute.xlu0 %3297
  %v3299 = vmul.f32 %v3291, %v36
  %v3300 = vmul.f32 %v3298, %v37
  %v3301 = vsel %vm1488, %v3299, 0.0
  %v3302 = vrot.slane %v3301, 4
  %v3303 = vadd.f32 %v3301, %v3302
  %v3304 = vrot.slane %v3303, 2
  %v3305 = vadd.f32 %v3303, %v3304
  %v3306 = vrot.slane %v3305, 1
  %v3307 = vadd.f32 %v3305, %v3306
  %v3308 = vsel %vm1488, %v3300, 0.0
  %v3309 = vrot.slane %v3308, 4
  %v3310 = vadd.f32 %v3308, %v3309
  %v3311 = vrot.slane %v3310, 2
  %v3312 = vadd.f32 %v3310, %v3311
  %v3313 = vrot.slane %v3312, 1
  %v3314 = vadd.f32 %v3312, %v3313
  %v3315 = vmul.f32 %v3291, %v38
  %v3316 = vmul.f32 %v3298, %v39
  %v3317 = vsel %vm115, %v3315, 0.0
  %v3318 = vrot.slane %v3317, 4
  %v3319 = vadd.f32 %v3317, %v3318
  %v3320 = vrot.slane %v3319, 2
  %v3321 = vadd.f32 %v3319, %v3320
  %v3322 = vrot.slane %v3321, 1
  %v3323 = vadd.f32 %v3321, %v3322
  %v3324 = vsel %vm115, %v3316, 0.0
  %v3325 = vrot.slane %v3324, 4
  %v3326 = vadd.f32 %v3324, %v3325
  %v3327 = vrot.slane %v3326, 2
  %v3328 = vadd.f32 %v3326, %v3327
  %v3329 = vrot.slane %v3328, 1
  %v3330 = vadd.f32 %v3328, %v3329
  %v3331 = vadd.f32 %v2965, %v3280
  %v3332 = vsub.f32 %v3307, %v2941
  %v3333 = vsub.f32 %v3314, %v2948
  %v3334 = vmul.f32 %v3332, %v3332
  %v3335 = vmul.f32 %v3333, %v3333
  %v3338 = vsel %vm1224, %v3335, %v3334
  %v3340 = vsel %vm1875, %v3338, 0.0
  %3341 = vadd.xlane.f32.xlu0 %v3340
  %v3342 = vpop.xlane.xlu0 %3341
  %v3343 = vrsqrt.pop %v3342
  %v3344 = vmul.f32 %v3342, %v3343
  %vm3345 = vcmp.eq.f32.partialorder %v3342, inf
  %v3346 = vsel %vm3345, %v3342, %v3344
  %vm3347 = vcmp.eq.f32.partialorder %v3342, 0.0
  %v3348 = vand.u32 %v3342, 2147483648
  %v3349 = vsel %vm3347, %v3348, %v3346
  %v3350 = vadd.f32 %v2984, %v3349
  %vm3351 = vcmask 42024
  %3352 = vst.msk [vmem:[%s10] sm:$0x3] %vm3351, %v3284
  %v3353 = vcvt.s32.f32 %v3277
  %vm3354 = vcmask 107624
  %3355 = vst.msk [vmem:[%s10] sm:$0x3] %vm3354, %v3353
  %v3358 = vsel %vm1224, %v3314, %v3307
  %3359 = vrot.lane.b32.xlu0 %v3358, 26
  %v3360 = vpop.permute.xlu0 %3359
  %vm3362 = vcmask 222416
  %3363 = vst.msk [vmem:[%s10] sm:$0x3] %vm3362, %v3360
  %v3364 = vpack.c.bf16 %v3323, %v3323
  %v3365 = vpack.c.bf16 %v3330, %v3330
  %v3366 = vpack.c.bf16 %v3120, %v3120
  %3368 = vrot.lane.b32.xlu0 %v3366, 32
  %v3369 = vpop.permute.xlu0 %3368
  %v3371 = vsel %vm216, %v3369, 0
  %3373 = vmatprep.subr.bf16.mxu0 0
  %3374 = vmatpush1.bf16.msra.mxu0 %v1027
  %3375 = vmatprep.subr.bf16.mxu0 0
  %3376 = vmatpush1.bf16.msra.mxu0 %v1028
  %3377 = vmatprep.subr.bf16.mxu0 0
  %3378 = vmatpush1.bf16.msra.mxu0 0
  %3379 = vmatprep.subr.bf16.mxu0 0
  %3380 = vmatpush1.bf16.msra.mxu0 0
  %3381 = vmatprep.subr.bf16.mxu0 0
  %3382 = vmatpush1.bf16.msra.mxu0 0
  %3383 = vmatprep.subr.bf16.mxu0 0
  %3384 = vmatpush1.bf16.msra.mxu0 0
  %3385 = vmatprep.subr.bf16.mxu0 0
  %3386 = vmatpush1.bf16.msra.mxu0 0
  %3387 = vmatprep.subr.bf16.mxu0 0
  %3388 = vmatpush1.bf16.msra.mxu0 0
  %3389 = vmatprep.subr.bf16.mxu0 0
  %3390 = vmatpush1.bf16.msra.mxu0 0
  %3391 = vmatprep.subr.bf16.mxu0 0
  %3392 = vmatpush1.bf16.msra.mxu0 0
  %3393 = vmatprep.subr.bf16.mxu0 0
  %3394 = vmatpush1.bf16.msra.mxu0 0
  %3395 = vmatprep.subr.bf16.mxu0 0
  %3396 = vmatpush1.bf16.msra.mxu0 0
  %3397 = vmatprep.subr.bf16.mxu0 0
  %3398 = vmatpush1.bf16.msra.mxu0 0
  %3399 = vmatprep.subr.bf16.mxu0 0
  %3400 = vmatpush1.bf16.msra.mxu0 0
  %3401 = vmatprep.subr.bf16.mxu0 0
  %3402 = vmatpush1.bf16.msra.mxu0 0
  %3403 = vmatprep.subr.bf16.mxu0 0
  %3404 = vmatpush1.bf16.msra.mxu0 0
  %3405 = vmatprep.mubr.bf16.mxu0 0
  %3406 = vmatmul.mubr.bf16.gmra.mrb[0].mxu0 %v3371
  %v3407 = vpop.f32.mrb[0].mxu0
  %v3408 = vadd.f32 0.0, %v3407
  %v3409 = vpop.f32.mrb[0].mxu0
  %v3410 = vpop.f32.mrb[0].mxu0
  %v3411 = vpop.f32.mrb[0].mxu0
  %3412 = vdwg.mxu0
  %v3415 = vunpack.c.l.b16 %v3364
  %v3416 = vunpack.c.l.b16 %v3365
  %v3417 = vsel %vm1224, %v3416, %v3415
  %v3418 = vpack.c.b16 %v3417, %v3417
  %v3420 = vsel %vm115, %v3418, 0
  %3422 = vmatprep.subr.bf16.mxu0 0
  %3423 = vmatpush1.bf16.msra.mxu0 %v1078
  %3424 = vmatprep.subr.bf16.mxu0 0
  %3425 = vmatpush1.bf16.msra.mxu0 0
  %3426 = vmatprep.subr.bf16.mxu0 0
  %3427 = vmatpush1.bf16.msra.mxu0 0
  %3428 = vmatprep.subr.bf16.mxu0 0
  %3429 = vmatpush1.bf16.msra.mxu0 0
  %3430 = vmatprep.subr.bf16.mxu0 0
  %3431 = vmatpush1.bf16.msra.mxu0 0
  %3432 = vmatprep.subr.bf16.mxu0 0
  %3433 = vmatpush1.bf16.msra.mxu0 0
  %3434 = vmatprep.subr.bf16.mxu0 0
  %3435 = vmatpush1.bf16.msra.mxu0 0
  %3436 = vmatprep.subr.bf16.mxu0 0
  %3437 = vmatpush1.bf16.msra.mxu0 0
  %3438 = vmatprep.subr.bf16.mxu0 0
  %3439 = vmatpush1.bf16.msra.mxu0 0
  %3440 = vmatprep.subr.bf16.mxu0 0
  %3441 = vmatpush1.bf16.msra.mxu0 0
  %3442 = vmatprep.subr.bf16.mxu0 0
  %3443 = vmatpush1.bf16.msra.mxu0 0
  %3444 = vmatprep.subr.bf16.mxu0 0
  %3445 = vmatpush1.bf16.msra.mxu0 0
  %3446 = vmatprep.subr.bf16.mxu0 0
  %3447 = vmatpush1.bf16.msra.mxu0 0
  %3448 = vmatprep.subr.bf16.mxu0 0
  %3449 = vmatpush1.bf16.msra.mxu0 0
  %3450 = vmatprep.subr.bf16.mxu0 0
  %3451 = vmatpush1.bf16.msra.mxu0 0
  %3452 = vmatprep.subr.bf16.mxu0 0
  %3453 = vmatpush1.bf16.msra.mxu0 0
  %3454 = vmatprep.mubr.bf16.mxu0 0
  %3455 = vmatmul.mubr.bf16.gmra.mrb[0].mxu0 %v3420
  %v3456 = vpop.f32.mrb[0].mxu0
  %v3457 = vadd.f32 %v3408, %v3456
  %v3458 = vpop.f32.mrb[0].mxu0
  %v3459 = vpop.f32.mrb[0].mxu0
  %v3460 = vpop.f32.mrb[0].mxu0
  %3461 = vdwg.mxu0
  %v3462 = vadd.f32 %v3457, %v1127
  %v3463 = vxor.u32 %v3462, 2147483648
  %v3464 = vmul.f32 %v3463, 1.442695
  %v3465 = vpow.pop %v3464
  %v3466 = vadd.f32 %v3465, 1.0
  %v3467 = vrcp.pop %v3466
  %v3468 = vmul.f32 1.0, %v3467
  %v3469 = vtanh.pop %v3462
  %v3470 = vmul.f32 %v3468, %v3114
  %3472 = vrot.lane.b32.xlu0 %v3469, 64
  %v3473 = vpop.permute.xlu0 %3472
  %v3475 = vmul.f32 %v3468, %v3473
  %3477 = vrot.lane.b32.xlu0 %v3475, 32
  %v3478 = vpop.permute.xlu0 %3477
  %v3480 = vadd.f32 %v3470, %v3478
  %v3481 = vtanh.pop %v3480
  %3483 = vrot.lane.b32.xlu0 %v3481, 64
  %v3484 = vpop.permute.xlu0 %3483
  %v3486 = vmul.f32 %v3468, %v3484
  %v3489 = vunpack.c.l.s4 1966171168
  %v3490 = vunpack.c.0.s8 %v3489
  %v3491 = vlaneseq
  %v3492 = vshrl.u32 %v3491, 7
  %v3493 = vsub.s32 %v3490, %v3492
  %v3494 = vrot.slane %v3486, %v3493
  %v3495 = vcombine.high %v3494, %v3494
  %v3497 = vunpack.c.l.s4 1966171168
  %v3498 = vunpack.c.0.s8 %v3497
  %v3499 = vlaneseq
  %v3500 = vshrl.u32 %v3499, 7
  %v3501 = vsub.s32 %v3498, %v3500
  %v3502 = vrot.slane %v3494, %v3501
  %v3504 = vunpack.c.l.s4 1966171168
  %v3505 = vunpack.c.0.s8 %v3504
  %v3506 = vlaneseq
  %v3507 = vshrl.u32 %v3506, 7
  %v3508 = vsub.s32 %v3505, %v3507
  %v3509 = vrot.slane %v3495, %v3508
  %v3510 = vlaneseq
  %v3511 = vshrl.u32 %v3510, 7
  %v3512 = vsub.s32 0, %v3511
  %v3513 = vrot.slane %v3502, %v3512
  %v3514 = vlaneseq
  %v3515 = vshrl.u32 %v3514, 7
  %v3516 = vsub.s32 0, %v3515
  %v3517 = vrot.slane %v3509, %v3516
  %v3520 = vmul.f32 %v3513, %v1190
  %v3521 = vmul.f32 %v3517, %v1192
  %3524 = vrot.lane.b32.xlu0 %v3520, 32
  %v3525 = vpop.permute.xlu0 %3524
  %3526 = vrot.lane.b32.xlu0 %v3521, 32
  %v3527 = vpop.permute.xlu0 %3526
  %v3530 = vsel %vm216, %v3525, 0.0
  %3531 = vadd.xlane.f32.xlu0 %v3530
  %v3532 = vpop.xlane.xlu0 %3531
  %v3533 = vsel %vm216, %v3527, 0.0
  %3534 = vadd.xlane.f32.xlu0 %v3533
  %v3535 = vpop.xlane.xlu0 %3534
  %vm3536 = vcmp.gt.f32.partialorder %v3331, 0.0
  %v3539 = vlaneseq
  %v3540 = vshrl.u32 %v3539, 7
  %v3541 = vsub.s32 %v1013, %v3540
  %v3542 = vrot.slane %v3532, %v3541
  %v3543 = vlaneseq
  %v3544 = vshrl.u32 %v3543, 7
  %v3545 = vsub.s32 %v1013, %v3544
  %v3546 = vrot.slane %v3535, %v3545
  %v3547 = vsel %vm1224, %v3546, %v3542
  %v3549 = vsel %vm3536, -1e+09, %v3547
  %v3550 = vsel %vm1227, %v3549, -inf
  %3551 = vmax.xlane.f32.xlu0 %v3550
  %v3552 = vpop.xlane.xlu0 %3551
  %v3553 = vsub.f32 %v3549, %v3552
  %v3554 = vmul.f32 %v3553, 1.442695
  %v3555 = vpow.pop %v3554
  %v3556 = vsel %vm1227, %v3555, 0.0
  %3557 = vadd.xlane.f32.xlu0 %v3556
  %v3558 = vpop.xlane.xlu0 %3557
  %v3559 = vrcp.pop %v3558
  %v3560 = vmul.f32 %v3555, %v3559
  %v3561 = vlaneseq
  %v3562 = vshrl.u32 %v3561, 7
  %v3563 = vsub.s32 0, %v3562
  %v3564 = vrot.slane %v3560, %v3563
  %3566 = vbcast.lane.b32.xlu0 %v3564, 256
  %v3567 = vpop.permute.xlu0 %3566
  %v3568 = vlaneseq
  %v3569 = vshrl.u32 %v3568, 7
  %v3570 = vsub.s32 1, %v3569
  %v3571 = vrot.slane %v3560, %v3570
  %3573 = vbcast.lane.b32.xlu0 %v3571, 256
  %v3574 = vpop.permute.xlu0 %3573
  %v3575 = vmul.f32 %v3567, %v1004
  %v3576 = vmul.f32 %v3574, %v1005
  %v3577 = vsel %vm216, %v3575, 0.0
  %v3578 = vrot.slane %v3577, 4
  %v3579 = vadd.f32 %v3577, %v3578
  %v3580 = vrot.slane %v3579, 2
  %v3581 = vadd.f32 %v3579, %v3580
  %v3582 = vrot.slane %v3581, 1
  %v3583 = vadd.f32 %v3581, %v3582
  %v3584 = vsel %vm216, %v3576, 0.0
  %v3585 = vrot.slane %v3584, 4
  %v3586 = vadd.f32 %v3584, %v3585
  %v3587 = vrot.slane %v3586, 2
  %v3588 = vadd.f32 %v3586, %v3587
  %v3589 = vrot.slane %v3588, 1
  %v3590 = vadd.f32 %v3588, %v3589
  %v3591 = vmul.f32 %v3583, %v1004
  %v3592 = vmul.f32 %v3590, %v1005
  %v3593 = vsel %vm216, %v3591, 0.0
  %3594 = vadd.xlane.f32.xlu0 %v3593
  %v3595 = vpop.xlane.xlu0 %3594
  %v3596 = vsel %vm216, %v3592, 0.0
  %3597 = vadd.xlane.f32.xlu0 %v3596
  %v3598 = vpop.xlane.xlu0 %3597
  %v3599 = vtanh.pop %v3595
  %v3600 = vtanh.pop %v3598
  %v3601 = vmul.f32 %v3599, 10.0
  %v3602 = vmul.f32 %v3600, 10.0
  %v3605 = vlaneseq
  %v3606 = vshrl.u32 %v3605, 7
  %v3607 = vsub.s32 %v1013, %v3606
  %v3608 = vrot.slane %v3601, %v3607
  %v3609 = vlaneseq
  %v3610 = vshrl.u32 %v3609, 7
  %v3611 = vsub.s32 %v1013, %v3610
  %v3612 = vrot.slane %v3602, %v3611
  %v3613 = vsel %vm1224, %v3612, %v3608
  %v3615 = vsel %vm3536, -1e+09, %v3613
  %v3616 = vsel %vm1227, %v3615, -inf
  %3617 = vmax.xlane.f32.xlu0 %v3616
  %v3618 = vpop.xlane.xlu0 %3617
  %v3619 = vsub.f32 %v3615, %v3618
  %v3620 = vmul.f32 %v3619, 1.442695
  %v3621 = vpow.pop %v3620
  %v3622 = vsel %vm1227, %v3621, 0.0
  %3623 = vadd.xlane.f32.xlu0 %v3622
  %v3624 = vpop.xlane.xlu0 %3623
  %v3625 = vrcp.pop %v3624
  %v3626 = vmul.f32 %v3621, %v3625
  %vm3627 = vcmp.ge.f32.partialorder %v3615, %v3618
  %v3628 = vsel %vm3627, %v1013, 8
  %v3629 = vsel %vm1227, %v3628, 2147483647
  %v3630 = vand.u32 %v3629, 65535
  %v3631 = vshra.s32 %v3629, 16
  %v3632 = vcvt.s32.f32 %v3630
  %v3633 = vcvt.s32.f32 %v3631
  %3634 = vmin.xlane.f32.xlu0 %v3633
  %v3635 = vpop.xlane.xlu0 %3634
  %vm3636 = vcmp.eq.f32.partialorder %v3633, %v3635
  %v3637 = vsel %vm3636, %v3632, inf
  %3638 = vmin.xlane.f32.xlu0 %v3637
  %v3639 = vpop.xlane.xlu0 %3638
  %v3640 = vcvt.f32.s32 %v3639
  %v3641 = vcvt.f32.s32 %v3635
  %v3642 = vshll.u32 %v3641, 16
  %v3643 = vadd.s32 %v3642, %v3640
  %vm3644 = vcmp.eq.s32.totalorder %v1013, %v3643
  %v3645 = vsel %vm3644, 1, 0
  %v3646 = vcvt.s32.f32 %v3645
  %v3647 = vmul.f32 %v3626, %v3646
  %v3648 = vsel %vm1227, %v3647, 0.0
  %3649 = vadd.xlane.f32.xlu0 %v3648
  %v3650 = vpop.xlane.xlu0 %3649
  %v3651 = vlaneseq
  %v3652 = vshrl.u32 %v3651, 7
  %v3653 = vsub.s32 0, %v3652
  %v3654 = vrot.slane %v3646, %v3653
  %3656 = vbcast.lane.b32.xlu0 %v3654, 256
  %v3657 = vpop.permute.xlu0 %3656
  %v3658 = vlaneseq
  %v3659 = vshrl.u32 %v3658, 7
  %v3660 = vsub.s32 1, %v3659
  %v3661 = vrot.slane %v3646, %v3660
  %3663 = vbcast.lane.b32.xlu0 %v3661, 256
  %v3664 = vpop.permute.xlu0 %3663
  %v3665 = vmul.f32 %v3657, %v36
  %v3666 = vmul.f32 %v3664, %v37
  %v3667 = vsel %vm1488, %v3665, 0.0
  %v3668 = vrot.slane %v3667, 4
  %v3669 = vadd.f32 %v3667, %v3668
  %v3670 = vrot.slane %v3669, 2
  %v3671 = vadd.f32 %v3669, %v3670
  %v3672 = vrot.slane %v3671, 1
  %v3673 = vadd.f32 %v3671, %v3672
  %v3674 = vsel %vm1488, %v3666, 0.0
  %v3675 = vrot.slane %v3674, 4
  %v3676 = vadd.f32 %v3674, %v3675
  %v3677 = vrot.slane %v3676, 2
  %v3678 = vadd.f32 %v3676, %v3677
  %v3679 = vrot.slane %v3678, 1
  %v3680 = vadd.f32 %v3678, %v3679
  %v3681 = vmul.f32 %v3657, %v38
  %v3682 = vmul.f32 %v3664, %v39
  %v3683 = vsel %vm115, %v3681, 0.0
  %v3684 = vrot.slane %v3683, 4
  %v3685 = vadd.f32 %v3683, %v3684
  %v3686 = vrot.slane %v3685, 2
  %v3687 = vadd.f32 %v3685, %v3686
  %v3688 = vrot.slane %v3687, 1
  %v3689 = vadd.f32 %v3687, %v3688
  %v3690 = vsel %vm115, %v3682, 0.0
  %v3691 = vrot.slane %v3690, 4
  %v3692 = vadd.f32 %v3690, %v3691
  %v3693 = vrot.slane %v3692, 2
  %v3694 = vadd.f32 %v3692, %v3693
  %v3695 = vrot.slane %v3694, 1
  %v3696 = vadd.f32 %v3694, %v3695
  %v3697 = vadd.f32 %v3331, %v3646
  %v3698 = vsub.f32 %v3673, %v3307
  %v3699 = vsub.f32 %v3680, %v3314
  %v3700 = vmul.f32 %v3698, %v3698
  %v3701 = vmul.f32 %v3699, %v3699
  %v3704 = vsel %vm1224, %v3701, %v3700
  %v3706 = vsel %vm1875, %v3704, 0.0
  %3707 = vadd.xlane.f32.xlu0 %v3706
  %v3708 = vpop.xlane.xlu0 %3707
  %v3709 = vrsqrt.pop %v3708
  %v3710 = vmul.f32 %v3708, %v3709
  %vm3711 = vcmp.eq.f32.partialorder %v3708, inf
  %v3712 = vsel %vm3711, %v3708, %v3710
  %vm3713 = vcmp.eq.f32.partialorder %v3708, 0.0
  %v3714 = vand.u32 %v3708, 2147483648
  %v3715 = vsel %vm3713, %v3714, %v3712
  %v3716 = vadd.f32 %v3350, %v3715
  %vm3717 = vcmask 50224
  %3718 = vst.msk [vmem:[%s10] sm:$0x3] %vm3717, %v3650
  %v3719 = vcvt.s32.f32 %v3643
  %vm3720 = vcmask 115824
  %3721 = vst.msk [vmem:[%s10] sm:$0x3] %vm3720, %v3719
  %v3724 = vsel %vm1224, %v3680, %v3673
  %3725 = vrot.lane.b32.xlu0 %v3724, 28
  %v3726 = vpop.permute.xlu0 %3725
  %vm3728 = vcmask 238816
  %3729 = vst.msk [vmem:[%s10] sm:$0x3] %vm3728, %v3726
  %v3730 = vpack.c.bf16 %v3689, %v3689
  %v3731 = vpack.c.bf16 %v3696, %v3696
  %v3732 = vpack.c.bf16 %v3486, %v3486
  %3734 = vrot.lane.b32.xlu0 %v3732, 32
  %v3735 = vpop.permute.xlu0 %3734
  %v3737 = vsel %vm216, %v3735, 0
  %3739 = vmatprep.subr.bf16.mxu0 0
  %3740 = vmatpush1.bf16.msra.mxu0 %v1027
  %3741 = vmatprep.subr.bf16.mxu0 0
  %3742 = vmatpush1.bf16.msra.mxu0 %v1028
  %3743 = vmatprep.subr.bf16.mxu0 0
  %3744 = vmatpush1.bf16.msra.mxu0 0
  %3745 = vmatprep.subr.bf16.mxu0 0
  %3746 = vmatpush1.bf16.msra.mxu0 0
  %3747 = vmatprep.subr.bf16.mxu0 0
  %3748 = vmatpush1.bf16.msra.mxu0 0
  %3749 = vmatprep.subr.bf16.mxu0 0
  %3750 = vmatpush1.bf16.msra.mxu0 0
  %3751 = vmatprep.subr.bf16.mxu0 0
  %3752 = vmatpush1.bf16.msra.mxu0 0
  %3753 = vmatprep.subr.bf16.mxu0 0
  %3754 = vmatpush1.bf16.msra.mxu0 0
  %3755 = vmatprep.subr.bf16.mxu0 0
  %3756 = vmatpush1.bf16.msra.mxu0 0
  %3757 = vmatprep.subr.bf16.mxu0 0
  %3758 = vmatpush1.bf16.msra.mxu0 0
  %3759 = vmatprep.subr.bf16.mxu0 0
  %3760 = vmatpush1.bf16.msra.mxu0 0
  %3761 = vmatprep.subr.bf16.mxu0 0
  %3762 = vmatpush1.bf16.msra.mxu0 0
  %3763 = vmatprep.subr.bf16.mxu0 0
  %3764 = vmatpush1.bf16.msra.mxu0 0
  %3765 = vmatprep.subr.bf16.mxu0 0
  %3766 = vmatpush1.bf16.msra.mxu0 0
  %3767 = vmatprep.subr.bf16.mxu0 0
  %3768 = vmatpush1.bf16.msra.mxu0 0
  %3769 = vmatprep.subr.bf16.mxu0 0
  %3770 = vmatpush1.bf16.msra.mxu0 0
  %3771 = vmatprep.mubr.bf16.mxu0 0
  %3772 = vmatmul.mubr.bf16.gmra.mrb[0].mxu0 %v3737
  %v3773 = vpop.f32.mrb[0].mxu0
  %v3774 = vadd.f32 0.0, %v3773
  %v3775 = vpop.f32.mrb[0].mxu0
  %v3776 = vpop.f32.mrb[0].mxu0
  %v3777 = vpop.f32.mrb[0].mxu0
  %3778 = vdwg.mxu0
  %v3781 = vunpack.c.l.b16 %v3730
  %v3782 = vunpack.c.l.b16 %v3731
  %v3783 = vsel %vm1224, %v3782, %v3781
  %v3784 = vpack.c.b16 %v3783, %v3783
  %v3786 = vsel %vm115, %v3784, 0
  %3788 = vmatprep.subr.bf16.mxu0 0
  %3789 = vmatpush1.bf16.msra.mxu0 %v1078
  %3790 = vmatprep.subr.bf16.mxu0 0
  %3791 = vmatpush1.bf16.msra.mxu0 0
  %3792 = vmatprep.subr.bf16.mxu0 0
  %3793 = vmatpush1.bf16.msra.mxu0 0
  %3794 = vmatprep.subr.bf16.mxu0 0
  %3795 = vmatpush1.bf16.msra.mxu0 0
  %3796 = vmatprep.subr.bf16.mxu0 0
  %3797 = vmatpush1.bf16.msra.mxu0 0
  %3798 = vmatprep.subr.bf16.mxu0 0
  %3799 = vmatpush1.bf16.msra.mxu0 0
  %3800 = vmatprep.subr.bf16.mxu0 0
  %3801 = vmatpush1.bf16.msra.mxu0 0
  %3802 = vmatprep.subr.bf16.mxu0 0
  %3803 = vmatpush1.bf16.msra.mxu0 0
  %3804 = vmatprep.subr.bf16.mxu0 0
  %3805 = vmatpush1.bf16.msra.mxu0 0
  %3806 = vmatprep.subr.bf16.mxu0 0
  %3807 = vmatpush1.bf16.msra.mxu0 0
  %3808 = vmatprep.subr.bf16.mxu0 0
  %3809 = vmatpush1.bf16.msra.mxu0 0
  %3810 = vmatprep.subr.bf16.mxu0 0
  %3811 = vmatpush1.bf16.msra.mxu0 0
  %3812 = vmatprep.subr.bf16.mxu0 0
  %3813 = vmatpush1.bf16.msra.mxu0 0
  %3814 = vmatprep.subr.bf16.mxu0 0
  %3815 = vmatpush1.bf16.msra.mxu0 0
  %3816 = vmatprep.subr.bf16.mxu0 0
  %3817 = vmatpush1.bf16.msra.mxu0 0
  %3818 = vmatprep.subr.bf16.mxu0 0
  %3819 = vmatpush1.bf16.msra.mxu0 0
  %3820 = vmatprep.mubr.bf16.mxu0 0
  %3821 = vmatmul.mubr.bf16.gmra.mrb[0].mxu0 %v3786
  %v3822 = vpop.f32.mrb[0].mxu0
  %v3823 = vadd.f32 %v3774, %v3822
  %v3824 = vpop.f32.mrb[0].mxu0
  %v3825 = vpop.f32.mrb[0].mxu0
  %v3826 = vpop.f32.mrb[0].mxu0
  %3827 = vdwg.mxu0
  %v3828 = vadd.f32 %v3823, %v1127
  %v3829 = vxor.u32 %v3828, 2147483648
  %v3830 = vmul.f32 %v3829, 1.442695
  %v3831 = vpow.pop %v3830
  %v3832 = vadd.f32 %v3831, 1.0
  %v3833 = vrcp.pop %v3832
  %v3834 = vmul.f32 1.0, %v3833
  %v3835 = vtanh.pop %v3828
  %v3836 = vmul.f32 %v3834, %v3480
  %3838 = vrot.lane.b32.xlu0 %v3835, 64
  %v3839 = vpop.permute.xlu0 %3838
  %v3841 = vmul.f32 %v3834, %v3839
  %3843 = vrot.lane.b32.xlu0 %v3841, 32
  %v3844 = vpop.permute.xlu0 %3843
  %v3846 = vadd.f32 %v3836, %v3844
  %v3847 = vtanh.pop %v3846
  %3849 = vrot.lane.b32.xlu0 %v3847, 64
  %v3850 = vpop.permute.xlu0 %3849
  %v3852 = vmul.f32 %v3834, %v3850
  %v3855 = vunpack.c.l.s4 1966171168
  %v3856 = vunpack.c.0.s8 %v3855
  %v3857 = vlaneseq
  %v3858 = vshrl.u32 %v3857, 7
  %v3859 = vsub.s32 %v3856, %v3858
  %v3860 = vrot.slane %v3852, %v3859
  %v3861 = vcombine.high %v3860, %v3860
  %v3863 = vunpack.c.l.s4 1966171168
  %v3864 = vunpack.c.0.s8 %v3863
  %v3865 = vlaneseq
  %v3866 = vshrl.u32 %v3865, 7
  %v3867 = vsub.s32 %v3864, %v3866
  %v3868 = vrot.slane %v3860, %v3867
  %v3870 = vunpack.c.l.s4 1966171168
  %v3871 = vunpack.c.0.s8 %v3870
  %v3872 = vlaneseq
  %v3873 = vshrl.u32 %v3872, 7
  %v3874 = vsub.s32 %v3871, %v3873
  %v3875 = vrot.slane %v3861, %v3874
  %v3876 = vlaneseq
  %v3877 = vshrl.u32 %v3876, 7
  %v3878 = vsub.s32 0, %v3877
  %v3879 = vrot.slane %v3868, %v3878
  %v3880 = vlaneseq
  %v3881 = vshrl.u32 %v3880, 7
  %v3882 = vsub.s32 0, %v3881
  %v3883 = vrot.slane %v3875, %v3882
  %v3886 = vmul.f32 %v3879, %v1190
  %v3887 = vmul.f32 %v3883, %v1192
  %3890 = vrot.lane.b32.xlu0 %v3886, 32
  %v3891 = vpop.permute.xlu0 %3890
  %3892 = vrot.lane.b32.xlu0 %v3887, 32
  %v3893 = vpop.permute.xlu0 %3892
  %v3896 = vsel %vm216, %v3891, 0.0
  %3897 = vadd.xlane.f32.xlu0 %v3896
  %v3898 = vpop.xlane.xlu0 %3897
  %v3899 = vsel %vm216, %v3893, 0.0
  %3900 = vadd.xlane.f32.xlu0 %v3899
  %v3901 = vpop.xlane.xlu0 %3900
  %vm3902 = vcmp.gt.f32.partialorder %v3697, 0.0
  %v3905 = vlaneseq
  %v3906 = vshrl.u32 %v3905, 7
  %v3907 = vsub.s32 %v1013, %v3906
  %v3908 = vrot.slane %v3898, %v3907
  %v3909 = vlaneseq
  %v3910 = vshrl.u32 %v3909, 7
  %v3911 = vsub.s32 %v1013, %v3910
  %v3912 = vrot.slane %v3901, %v3911
  %v3913 = vsel %vm1224, %v3912, %v3908
  %v3915 = vsel %vm3902, -1e+09, %v3913
  %v3916 = vsel %vm1227, %v3915, -inf
  %3917 = vmax.xlane.f32.xlu0 %v3916
  %v3918 = vpop.xlane.xlu0 %3917
  %v3919 = vsub.f32 %v3915, %v3918
  %v3920 = vmul.f32 %v3919, 1.442695
  %v3921 = vpow.pop %v3920
  %v3922 = vsel %vm1227, %v3921, 0.0
  %3923 = vadd.xlane.f32.xlu0 %v3922
  %v3924 = vpop.xlane.xlu0 %3923
  %v3925 = vrcp.pop %v3924
  %v3926 = vmul.f32 %v3921, %v3925
  %v3927 = vlaneseq
  %v3928 = vshrl.u32 %v3927, 7
  %v3929 = vsub.s32 0, %v3928
  %v3930 = vrot.slane %v3926, %v3929
  %3932 = vbcast.lane.b32.xlu0 %v3930, 256
  %v3933 = vpop.permute.xlu0 %3932
  %v3934 = vlaneseq
  %v3935 = vshrl.u32 %v3934, 7
  %v3936 = vsub.s32 1, %v3935
  %v3937 = vrot.slane %v3926, %v3936
  %3939 = vbcast.lane.b32.xlu0 %v3937, 256
  %v3940 = vpop.permute.xlu0 %3939
  %v3941 = vmul.f32 %v3933, %v1004
  %v3942 = vmul.f32 %v3940, %v1005
  %v3943 = vsel %vm216, %v3941, 0.0
  %v3944 = vrot.slane %v3943, 4
  %v3945 = vadd.f32 %v3943, %v3944
  %v3946 = vrot.slane %v3945, 2
  %v3947 = vadd.f32 %v3945, %v3946
  %v3948 = vrot.slane %v3947, 1
  %v3949 = vadd.f32 %v3947, %v3948
  %v3950 = vsel %vm216, %v3942, 0.0
  %v3951 = vrot.slane %v3950, 4
  %v3952 = vadd.f32 %v3950, %v3951
  %v3953 = vrot.slane %v3952, 2
  %v3954 = vadd.f32 %v3952, %v3953
  %v3955 = vrot.slane %v3954, 1
  %v3956 = vadd.f32 %v3954, %v3955
  %v3957 = vmul.f32 %v3949, %v1004
  %v3958 = vmul.f32 %v3956, %v1005
  %v3959 = vsel %vm216, %v3957, 0.0
  %3960 = vadd.xlane.f32.xlu0 %v3959
  %v3961 = vpop.xlane.xlu0 %3960
  %v3962 = vsel %vm216, %v3958, 0.0
  %3963 = vadd.xlane.f32.xlu0 %v3962
  %v3964 = vpop.xlane.xlu0 %3963
  %v3965 = vtanh.pop %v3961
  %v3966 = vtanh.pop %v3964
  %v3967 = vmul.f32 %v3965, 10.0
  %v3968 = vmul.f32 %v3966, 10.0
  %v3971 = vlaneseq
  %v3972 = vshrl.u32 %v3971, 7
  %v3973 = vsub.s32 %v1013, %v3972
  %v3974 = vrot.slane %v3967, %v3973
  %v3975 = vlaneseq
  %v3976 = vshrl.u32 %v3975, 7
  %v3977 = vsub.s32 %v1013, %v3976
  %v3978 = vrot.slane %v3968, %v3977
  %v3979 = vsel %vm1224, %v3978, %v3974
  %v3981 = vsel %vm3902, -1e+09, %v3979
  %v3982 = vsel %vm1227, %v3981, -inf
  %3983 = vmax.xlane.f32.xlu0 %v3982
  %v3984 = vpop.xlane.xlu0 %3983
  %v3985 = vsub.f32 %v3981, %v3984
  %v3986 = vmul.f32 %v3985, 1.442695
  %v3987 = vpow.pop %v3986
  %v3988 = vsel %vm1227, %v3987, 0.0
  %3989 = vadd.xlane.f32.xlu0 %v3988
  %v3990 = vpop.xlane.xlu0 %3989
  %v3991 = vrcp.pop %v3990
  %v3992 = vmul.f32 %v3987, %v3991
  %vm3993 = vcmp.ge.f32.partialorder %v3981, %v3984
  %v3994 = vsel %vm3993, %v1013, 8
  %v3995 = vsel %vm1227, %v3994, 2147483647
  %v3996 = vand.u32 %v3995, 65535
  %v3997 = vshra.s32 %v3995, 16
  %v3998 = vcvt.s32.f32 %v3996
  %v3999 = vcvt.s32.f32 %v3997
  %4000 = vmin.xlane.f32.xlu0 %v3999
  %v4001 = vpop.xlane.xlu0 %4000
  %vm4002 = vcmp.eq.f32.partialorder %v3999, %v4001
  %v4003 = vsel %vm4002, %v3998, inf
  %4004 = vmin.xlane.f32.xlu0 %v4003
  %v4005 = vpop.xlane.xlu0 %4004
  %v4006 = vcvt.f32.s32 %v4005
  %v4007 = vcvt.f32.s32 %v4001
  %v4008 = vshll.u32 %v4007, 16
  %v4009 = vadd.s32 %v4008, %v4006
  %vm4010 = vcmp.eq.s32.totalorder %v1013, %v4009
  %v4011 = vsel %vm4010, 1, 0
  %v4012 = vcvt.s32.f32 %v4011
  %v4013 = vmul.f32 %v3992, %v4012
  %v4014 = vsel %vm1227, %v4013, 0.0
  %4015 = vadd.xlane.f32.xlu0 %v4014
  %v4016 = vpop.xlane.xlu0 %4015
  %v4017 = vlaneseq
  %v4018 = vshrl.u32 %v4017, 7
  %v4019 = vsub.s32 0, %v4018
  %v4020 = vrot.slane %v4012, %v4019
  %4022 = vbcast.lane.b32.xlu0 %v4020, 256
  %v4023 = vpop.permute.xlu0 %4022
  %v4024 = vlaneseq
  %v4025 = vshrl.u32 %v4024, 7
  %v4026 = vsub.s32 1, %v4025
  %v4027 = vrot.slane %v4012, %v4026
  %4029 = vbcast.lane.b32.xlu0 %v4027, 256
  %v4030 = vpop.permute.xlu0 %4029
  %v4031 = vmul.f32 %v4023, %v36
  %v4032 = vmul.f32 %v4030, %v37
  %v4033 = vsel %vm1488, %v4031, 0.0
  %v4034 = vrot.slane %v4033, 4
  %v4035 = vadd.f32 %v4033, %v4034
  %v4036 = vrot.slane %v4035, 2
  %v4037 = vadd.f32 %v4035, %v4036
  %v4038 = vrot.slane %v4037, 1
  %v4039 = vadd.f32 %v4037, %v4038
  %v4040 = vsel %vm1488, %v4032, 0.0
  %v4041 = vrot.slane %v4040, 4
  %v4042 = vadd.f32 %v4040, %v4041
  %v4043 = vrot.slane %v4042, 2
  %v4044 = vadd.f32 %v4042, %v4043
  %v4045 = vrot.slane %v4044, 1
  %v4046 = vadd.f32 %v4044, %v4045
  %v4047 = vsub.f32 %v4039, %v3673
  %v4048 = vsub.f32 %v4046, %v3680
  %v4049 = vmul.f32 %v4047, %v4047
  %v4050 = vmul.f32 %v4048, %v4048
  %v4053 = vsel %vm1224, %v4050, %v4049
  %v4055 = vsel %vm1875, %v4053, 0.0
  %4056 = vadd.xlane.f32.xlu0 %v4055
  %v4057 = vpop.xlane.xlu0 %4056
  %v4058 = vrsqrt.pop %v4057
  %v4059 = vmul.f32 %v4057, %v4058
  %vm4060 = vcmp.eq.f32.partialorder %v4057, inf
  %v4061 = vsel %vm4060, %v4057, %v4059
  %vm4062 = vcmp.eq.f32.partialorder %v4057, 0.0
  %v4063 = vand.u32 %v4057, 2147483648
  %v4064 = vsel %vm4062, %v4063, %v4061
  %v4065 = vadd.f32 %v3716, %v4064
  %vm4066 = vcmask 58424
  %4067 = vst.msk [vmem:[%s10] sm:$0x3] %vm4066, %v4016
  %v4068 = vcvt.s32.f32 %v4009
  %vm4069 = vcmask 124024
  %4070 = vst.msk [vmem:[%s10] sm:$0x3] %vm4069, %v4068
  %v4073 = vsel %vm1224, %v4046, %v4039
  %4074 = vrot.lane.b32.xlu0 %v4073, 30
  %v4075 = vpop.permute.xlu0 %4074
  %vm4077 = vcmask 255216
  %4078 = vst.msk [vmem:[%s10] sm:$0x3] %vm4077, %v4075
  %v4079 = vmul.f32 %v4039, %v4039
  %v4080 = vmul.f32 %v4046, %v4046
  %v4083 = vsel %vm1224, %v4080, %v4079
  %v4085 = vsel %vm1875, %v4083, 0.0
  %4086 = vadd.xlane.f32.xlu0 %v4085
  %v4087 = vpop.xlane.xlu0 %4086
  %v4088 = vrsqrt.pop %v4087
  %v4089 = vmul.f32 %v4087, %v4088
  %vm4090 = vcmp.eq.f32.partialorder %v4087, inf
  %v4091 = vsel %vm4090, %v4087, %v4089
  %vm4092 = vcmp.eq.f32.partialorder %v4087, 0.0
  %v4093 = vand.u32 %v4087, 2147483648
  %v4094 = vsel %vm4092, %v4093, %v4091
  %v4095 = vadd.f32 %v4065, %v4094
  %v4096 = vmul.f32 %v1495, %v1495
  %v4097 = vmul.f32 %v1502, %v1502
  %v4100 = vsel %vm1224, %v4097, %v4096
  %v4102 = vsel %vm1875, %v4100, 0.0
  %4103 = vadd.xlane.f32.xlu0 %v4102
  %v4104 = vpop.xlane.xlu0 %4103
  %v4105 = vrsqrt.pop %v4104
  %v4106 = vmul.f32 %v4104, %v4105
  %vm4107 = vcmp.eq.f32.partialorder %v4104, inf
  %v4108 = vsel %vm4107, %v4104, %v4106
  %vm4109 = vcmp.eq.f32.partialorder %v4104, 0.0
  %v4110 = vand.u32 %v4104, 2147483648
  %v4111 = vsel %vm4109, %v4110, %v4108
  %v4112 = vadd.f32 %v4095, %v4111
  %vm4113 = vcmask 263424
  %4114 = vst.msk [vmem:[%s10] sm:$0x3] %vm4113, %v4112
  // Predicated region
  $region42: #{combinatorial_rl_forward.1} parent=0 // pred_check
    _
  $region43: #{combinatorial_rl_forward.1} parent=0 // pred_check_branch
    %4116 = sbr.rel (0) target = $region45
  $region44: #{combinatorial_rl_forward.1} parent=0 // pred_region
    _
  $region45: #{combinatorial_rl_forward.1} parent=0 // pred_fallthru
    _
  // Predicated region
  $region46: #{combinatorial_rl_forward.1} parent=0 // pred_check
    _
  $region47: #{combinatorial_rl_forward.1} parent=0 // pred_check_branch
    %4118 = sbr.rel (0) target = $region49
  $region48: #{combinatorial_rl_forward.1} parent=0 // pred_region
    _
  $region49: #{combinatorial_rl_forward.1} parent=0 // pred_fallthru
    _

</llo_original>
